<compile_context>
chip_gen: v7x
topology: tpu7x:2x2x1
jax: 0.10.0
libtpu: 0.0.40
codegen_flags: <defaults>
</compile_context>

<pallas_src>
import functools

import jax
import jax.numpy as jnp
from jax import lax
from jax.experimental import pallas as pl
from jax.experimental.pallas import tpu as pltpu

SOS_TOKEN = 0
BEAM_WIDTH = 2          # the reference module uses beam_width = 2


def _gru(x_all, h, wh, b):
    """Fused-gate GRU cell, PyTorch convention.

    x_all : (M, 3H) = one_hot(x) @ [W_ir | W_iz | W_in]
    h     : (M, H)
    wh    : (H, 3H) = [W_hr | W_hz | W_hn]
    b     : (>=4, H) rows = [b_ir+b_hr, b_iz+b_hz, b_in, b_hn]
    """
    hidden = h.shape[1]
    hh = jnp.dot(h, wh, preferred_element_type=jnp.float32)          # (M, 3H)
    r = jax.nn.sigmoid(x_all[:, 0:hidden] + hh[:, 0:hidden] + b[0:1])
    z = jax.nn.sigmoid(x_all[:, hidden:2 * hidden]
                       + hh[:, hidden:2 * hidden] + b[1:2])
    n = jnp.tanh(x_all[:, 2 * hidden:3 * hidden] + b[2:3]
                 + r * (hh[:, 2 * hidden:3 * hidden] + b[3:4]))
    return (1.0 - z) * n + z * h


def _build_fused_kernel(fl, t_len, vocab, hidden, n_slots):
    """Kernel over grid=(fl,) beam-tree levels; all state in VMEM scratch."""

    def kernel(ids_ref,                                   # (T, 1) int32
               e_wx_ref, e_wh_ref, e_b_ref,               # (V,3H) (H,3H) (4,H)
               d_wx_ref, d_wh_ref, d_b_ref,               # (V,3H) (H,3H) (5,H)
               d_wc_ref, d_wo_ref, d_bo_ref,              # (2H,H) (H,V) (1,V)
               toks_ref, probs_ref,                       # per-level (S, 2)
               enc_sc, hid_sc, tok_sc, path_sc):          # VMEM scratch
        level = pl.program_id(0)

        # ------------- level 0: encoder recurrence + beam-slot seeding ------
        @pl.when(level == 0)
        def _():
            e_wx = e_wx_ref[...]                          # hoisted loads
            e_wh = e_wh_ref[...]
            e_b = e_b_ref[...]
            # All input-gate rows at once: one-hot(T,V) @ (V,3H) on the MXU.
            onehot_t = (ids_ref[...] ==
                        lax.broadcasted_iota(jnp.int32, (t_len, vocab), 1)
                        ).astype(jnp.float32)
            xs = jnp.dot(onehot_t, e_wx, preferred_element_type=jnp.float32)
            row_iota = lax.broadcasted_iota(jnp.int32, (t_len, hidden), 0)
            h = jnp.zeros((1, hidden), jnp.float32)
            enc = jnp.zeros((t_len, hidden), jnp.float32)
            for t in range(t_len):                        # T=8, unrolled
                h = _gru(xs[t:t + 1, :], h, e_wh, e_b)
                enc = jnp.where(row_iota == t, h, enc)    # accumulate as value
            enc_sc[...] = enc                             # single scratch write
            hid_sc[...] = jnp.broadcast_to(h, (n_slots, hidden))
            tok_sc[...] = jnp.full((n_slots, 1), SOS_TOKEN, jnp.int32)
            path_sc[...] = lax.broadcasted_iota(jnp.int32, (n_slots, 1), 0)

        # ------------- batched decoder step over all n_slots beam slots -----
        d_b = d_b_ref[...]                                # (5, H): gru biases + b_c
        tok = tok_sc[...]                                 # (S, 1) int32
        onehot = (tok ==
                  lax.broadcasted_iota(jnp.int32, (n_slots, vocab), 1)
                  ).astype(jnp.float32)                   # (S, V)
        x_all = jnp.dot(onehot, d_wx_ref[...],
                        preferred_element_type=jnp.float32)          # (S, 3H)
        h = hid_sc[...]                                   # (S, H)
        h_new = _gru(x_all, h, d_wh_ref[...], d_b)        # (S, H)

        enc = enc_sc[...]                                 # (T, H)
        # Luong "dot" attention: scores (S, T), softmax over time.
        att = lax.dot_general(h_new, enc, (((1,), (1,)), ((), ())),
                              preferred_element_type=jnp.float32)
        att = att - jnp.max(att, axis=-1, keepdims=True)
        ea = jnp.exp(att)
        attw = ea * pl.reciprocal(jnp.sum(ea, axis=-1, keepdims=True),
                                  approx=True)
        context = jnp.dot(attw, enc, preferred_element_type=jnp.float32)

        # Attentional hidden: tanh(Wc @ [h_new ; context] + b_c).
        wc = d_wc_ref[...]                                # (2H, H)
        attn_h = jnp.tanh(
            jnp.dot(h_new, wc[0:hidden, :], preferred_element_type=jnp.float32)
            + jnp.dot(context, wc[hidden:2 * hidden, :],
                      preferred_element_type=jnp.float32)
            + d_b[4:5])                                   # (S, H)

        logits = (jnp.dot(attn_h, d_wo_ref[...],
                          preferred_element_type=jnp.float32)
                  + d_bo_ref[...])                        # (S, V)
        logits = logits - jnp.max(logits, axis=-1, keepdims=True)
        el = jnp.exp(logits)
        # Exact division (not approx): these probabilities feed the ranking.
        probs = el / jnp.sum(el, axis=-1, keepdims=True)

        # In-kernel top-2 (beam_width == 2) with lane reductions only.
        lane = lax.broadcasted_iota(jnp.int32, probs.shape, 1).astype(jnp.float32)
        big = jnp.full_like(probs, float(vocab))
        m1 = jnp.max(probs, axis=-1, keepdims=True)
        i1 = jnp.min(jnp.where(probs == m1, lane, big), axis=-1, keepdims=True)
        pm = jnp.where(lane == i1, -1.0, probs)
        m2 = jnp.max(pm, axis=-1, keepdims=True)
        i2 = jnp.min(jnp.where(pm == m2, lane, big), axis=-1, keepdims=True)
        i1i = i1.astype(jnp.int32)
        i2i = i2.astype(jnp.int32)

        toks_ref[:, 0:1] = i1i
        toks_ref[:, 1:2] = i2i
        probs_ref[:, 0:1] = m1
        probs_ref[:, 1:2] = m2
        hid_sc[...] = h_new                               # slot-local carry

        # Pick next token per slot from its own top-2 using a static-shift
        # path register (bit (fl-2-level) of the slot index), no gathers.
        @pl.when(level < fl - 1)
        def _():
            cbit = (path_sc[...] >> (fl - 2)) & 1
            tok_sc[...] = jnp.where(cbit == 0, i1i, i2i)
            path_sc[...] = (path_sc[...] << 1) & (n_slots - 1)

    return kernel


def _fused_beam_decode(token_ids_col, params, fl):
    t_len = token_ids_col.shape[0]
    hidden, vocab = params["d_wo"].shape
    n_slots = 2 ** (fl - 1)

    def const_spec(shape):
        return pl.BlockSpec(shape, lambda l, _s=len(shape): (0,) * _s)

    out_spec = pl.BlockSpec((None, n_slots, 2), lambda l: (l, 0, 0))
    kernel = _build_fused_kernel(fl, t_len, vocab, hidden, n_slots)

    return pl.pallas_call(
        kernel,
        out_shape=(jax.ShapeDtypeStruct((fl, n_slots, 2), jnp.int32),
                   jax.ShapeDtypeStruct((fl, n_slots, 2), jnp.float32)),
        grid_spec=pltpu.PrefetchScalarGridSpec(
            num_scalar_prefetch=0,
            grid=(fl,),
            in_specs=[
                const_spec((t_len, 1)),                  # token ids
                const_spec((vocab, 3 * hidden)),         # e_wx
                const_spec((hidden, 3 * hidden)),        # e_wh
                const_spec((4, hidden)),                 # e_b
                const_spec((vocab, 3 * hidden)),         # d_wx
                const_spec((hidden, 3 * hidden)),        # d_wh
                const_spec((5, hidden)),                 # d_b (+ b_c)
                const_spec((2 * hidden, hidden)),        # d_wc = [Wc_h ; Wc_c]
                const_spec((hidden, vocab)),             # d_wo
                const_spec((1, vocab)),                  # d_bo
            ],
            out_specs=[out_spec, out_spec],
            scratch_shapes=[
                pltpu.VMEM((t_len, hidden), jnp.float32),    # encoder outputs
                pltpu.VMEM((n_slots, hidden), jnp.float32),  # beam hiddens
                pltpu.VMEM((n_slots, 1), jnp.int32),         # next tokens
                pltpu.VMEM((n_slots, 1), jnp.int32),         # path registers
            ],
        ),
        compiler_params=pltpu.CompilerParams(
            dimension_semantics=("arbitrary",)),
    )(token_ids_col,
      params["e_wx"], params["e_wh"], params["e_b"],
      params["d_wx"], params["d_wh"], params["d_b"],
      params["d_wc"], params["d_wo"], params["d_bo"])


# ---------------------------------------------------------------------------
# BeamSearchDecoder.forward: the kernel emits per-level top-2 (token, prob)
# per beam slot; host-side index math rebuilds the 2**final_len candidate
# sequences and their probability products, then sorts descending.
# ---------------------------------------------------------------------------
@functools.partial(jax.jit, static_argnames=("max_length",))
def beam_search_decode(params, token_ids, max_length):
    # The reference always expands the two length-1 seed beams at least once,
    # so candidates have length max(max_length, 2).
    fl = max(int(max_length), 2)
    n_slots = 2 ** (fl - 1)
    toks, probs = _fused_beam_decode(
        token_ids.reshape(-1, 1).astype(jnp.int32), params, fl)

    n_cand = 2 * n_slots
    cand = jnp.arange(n_cand)
    slot = cand >> 1
    lvl = jnp.arange(fl)
    child = (cand[:, None] >> (fl - 1 - lvl)[None, :]) & 1        # (N, FL)
    seqs = toks[lvl[None, :], slot[:, None], child]               # (N, FL)
    scores = jnp.prod(probs[lvl[None, :], slot[:, None], child], axis=1)

    # TODO(synk): the reference's periodic "keep top-50" prune only fires when
    # len(beams) % beam_width**8 == 0 (never for max_length <= 8); not replicated.
    order = jnp.argsort(-scores)
    return seqs[order], scores[order]


def init_params(key, vocab, hidden):
    s = 0.1
    keys = iter(jax.random.split(key, 16))

    def nrm(shape):
        return s * jax.random.normal(next(keys), shape, jnp.float32)

    p = {}
    for pre in ("e", "d"):
        p[f"{pre}_wx"] = nrm((vocab, 3 * hidden))   # [W_ir | W_iz | W_in]
        p[f"{pre}_wh"] = nrm((hidden, 3 * hidden))  # [W_hr | W_hz | W_hn]
    p["e_b"] = nrm((4, hidden))                     # [b_ir+b_hr, b_iz+b_hz, b_in, b_hn]
    p["d_b"] = jnp.concatenate(
        [nrm((4, hidden)), jnp.zeros((1, hidden), jnp.float32)], axis=0)  # + b_c
    p["d_wc"] = nrm((2 * hidden, hidden))           # [Wc_h ; Wc_c]
    p["d_wo"] = nrm((hidden, vocab))
    p["d_bo"] = jnp.zeros((1, vocab), jnp.float32)
    return p


if __name__ == "__main__":
    VOCAB = 16        # len(classes)
    HIDDEN = 32
    SEQ = 8
    MAX_LENGTH = 5    # => 2**5 = 32 candidates of length 5

    key = jax.random.PRNGKey(0)
    pkey, tkey = jax.random.split(key)
    params = init_params(pkey, VOCAB, HIDDEN)
    token_ids = jax.random.randint(tkey, (SEQ,), 0, VOCAB, dtype=jnp.int32)

    cand_seqs, cand_probs = beam_search_decode(
        params, token_ids, max_length=MAX_LENGTH)
    cand_seqs, cand_probs = jax.block_until_ready((cand_seqs, cand_probs))

    final_len = max(MAX_LENGTH, 2)
    n_cand = BEAM_WIDTH ** final_len
    assert cand_seqs.shape == (n_cand, final_len)
    assert cand_probs.shape == (n_cand,)
    assert bool(jnp.all(cand_probs[:-1] >= cand_probs[1:]))         # sorted desc
    assert bool(jnp.all((cand_seqs >= 0) & (cand_seqs < VOCAB)))    # valid ids
    assert bool(jnp.all((cand_probs > 0.0) & (cand_probs <= 1.0)))  # valid probs
    print("KERNEL_OK")
</pallas_src>

<mosaic_0001>
module attributes {stable_mosaic.version = 11 : i64} {
  func.func @kernel(%arg0: i32, %arg1: memref<8x1xi32, #tpu.memory_space<vmem>>, %arg2: memref<16x96xf32, #tpu.memory_space<vmem>>, %arg3: memref<32x96xf32, #tpu.memory_space<vmem>>, %arg4: memref<4x32xf32, #tpu.memory_space<vmem>>, %arg5: memref<16x96xf32, #tpu.memory_space<vmem>>, %arg6: memref<32x96xf32, #tpu.memory_space<vmem>>, %arg7: memref<5x32xf32, #tpu.memory_space<vmem>>, %arg8: memref<64x32xf32, #tpu.memory_space<vmem>>, %arg9: memref<32x16xf32, #tpu.memory_space<vmem>>, %arg10: memref<1x16xf32, #tpu.memory_space<vmem>>, %arg11: memref<1x16x2xi32, #tpu.memory_space<vmem>>, %arg12: memref<1x16x2xf32, #tpu.memory_space<vmem>>, %arg13: memref<8x32xf32, #tpu.memory_space<vmem>>, %arg14: memref<16x32xf32, #tpu.memory_space<vmem>>, %arg15: memref<16x1xi32, #tpu.memory_space<vmem>>, %arg16: memref<16x1xi32, #tpu.memory_space<vmem>>) attributes {dimension_semantics = [#tpu.dimension_semantics<arbitrary>], iteration_bounds = array<i64: 5>, scalar_prefetch = 0 : i64, scratch_operands = 4 : i64, tpu.core_type = #tpu.core_type<tc>, window_params = [{pipeline_mode = #tpu.pipeline_mode<synchronous>, transform_indices = @transform_0, window_bounds = array<i64: 8, 1>}, {pipeline_mode = #tpu.pipeline_mode<synchronous>, transform_indices = @transform_1, window_bounds = array<i64: 16, 96>}, {pipeline_mode = #tpu.pipeline_mode<synchronous>, transform_indices = @transform_2, window_bounds = array<i64: 32, 96>}, {pipeline_mode = #tpu.pipeline_mode<synchronous>, transform_indices = @transform_3, window_bounds = array<i64: 4, 32>}, {pipeline_mode = #tpu.pipeline_mode<synchronous>, transform_indices = @transform_4, window_bounds = array<i64: 16, 96>}, {pipeline_mode = #tpu.pipeline_mode<synchronous>, transform_indices = @transform_5, window_bounds = array<i64: 32, 96>}, {pipeline_mode = #tpu.pipeline_mode<synchronous>, transform_indices = @transform_6, window_bounds = array<i64: 5, 32>}, {pipeline_mode = #tpu.pipeline_mode<synchronous>, transform_indices = @transform_7, window_bounds = array<i64: 64, 32>}, {pipeline_mode = #tpu.pipeline_mode<synchronous>, transform_indices = @transform_8, window_bounds = array<i64: 32, 16>}, {pipeline_mode = #tpu.pipeline_mode<synchronous>, transform_indices = @transform_9, window_bounds = array<i64: 1, 16>}, {transform_indices = @transform_10, window_bounds = array<i64: 1, 16, 2>}, {transform_indices = @transform_11, window_bounds = array<i64: 1, 16, 2>}]} {
    %c0_i32 = arith.constant 0 : i32
    %0 = arith.cmpi eq, %arg0, %c0_i32 : i32
    %1 = arith.extui %0 : i1 to i32
    %c0_i32_0 = arith.constant 0 : i32
    %2 = arith.cmpi ne, %1, %c0_i32_0 : i32
    scf.if %2 {
      %c0_51 = arith.constant 0 : index
      %c0_52 = arith.constant 0 : index
      %129 = vector.load %arg2[%c0_51, %c0_52] : memref<16x96xf32, #tpu.memory_space<vmem>>, vector<16x96xf32>
      %c0_53 = arith.constant 0 : index
      %c0_54 = arith.constant 0 : index
      %130 = vector.load %arg3[%c0_53, %c0_54] : memref<32x96xf32, #tpu.memory_space<vmem>>, vector<32x96xf32>
      %c0_55 = arith.constant 0 : index
      %c0_56 = arith.constant 0 : index
      %131 = vector.load %arg4[%c0_55, %c0_56] : memref<4x32xf32, #tpu.memory_space<vmem>>, vector<4x32xf32>
      %c0_57 = arith.constant 0 : index
      %c0_58 = arith.constant 0 : index
      %132 = vector.load %arg1[%c0_57, %c0_58] : memref<8x1xi32, #tpu.memory_space<vmem>>, vector<8x1xi32>
      %133 = tpu.iota {dimensions = array<i32: 1>} : vector<8x16xi32>
      %134 = vector.broadcast %132 : vector<8x1xi32> to vector<8x16xi32>
      %135 = arith.cmpi eq, %134, %133 : vector<8x16xi32>
      %136 = arith.extui %135 : vector<8x16xi1> to vector<8x16xi32>
      %137 = arith.sitofp %136 : vector<8x16xi32> to vector<8x16xf32>
      %cst_59 = arith.constant dense<0.000000e+00> : vector<8x96xf32>
      %138 = tpu.matmul %137, %129, %cst_59 {dimension_numbers = #tpu.dot_dimension_numbers<[1], [0], [0], [1], [0, 0, 1, 1], [], []>} : vector<8x16xf32>, vector<16x96xf32>, vector<8x96xf32> -> vector<8x96xf32>
      %139 = tpu.iota {dimensions = array<i32: 0>} : vector<8x32xi32>
      %cst_60 = arith.constant 0.000000e+00 : f32
      %140 = vector.broadcast %cst_60 : f32 to vector<1x32xf32>
      %cst_61 = arith.constant 0.000000e+00 : f32
      %141 = vector.broadcast %cst_61 : f32 to vector<8x32xf32>
      %142 = vector.extract_strided_slice %138 {offsets = [0, 0], sizes = [1, 96], strides = [1, 1]} : vector<8x96xf32> to vector<1x96xf32>
      %cst_62 = arith.constant dense<0.000000e+00> : vector<1x96xf32>
      %143 = tpu.matmul %140, %130, %cst_62 {dimension_numbers = #tpu.dot_dimension_numbers<[1], [0], [0], [1], [0, 0, 1, 1], [], []>} : vector<1x32xf32>, vector<32x96xf32>, vector<1x96xf32> -> vector<1x96xf32>
      %144 = vector.extract_strided_slice %142 {offsets = [0, 0], sizes = [1, 32], strides = [1, 1]} : vector<1x96xf32> to vector<1x32xf32>
      %145 = vector.extract_strided_slice %143 {offsets = [0, 0], sizes = [1, 32], strides = [1, 1]} : vector<1x96xf32> to vector<1x32xf32>
      %146 = arith.addf %144, %145 : vector<1x32xf32>
      %147 = vector.extract_strided_slice %131 {offsets = [0, 0], sizes = [1, 32], strides = [1, 1]} : vector<4x32xf32> to vector<1x32xf32>
      %148 = arith.addf %146, %147 : vector<1x32xf32>
      %149 = arith.negf %148 : vector<1x32xf32>
      %150 = math.exp %149 : vector<1x32xf32>
      %cst_63 = arith.constant 1.000000e+00 : f32
      %151 = vector.broadcast %cst_63 : f32 to vector<1x32xf32>
      %152 = arith.addf %151, %150 : vector<1x32xf32>
      %153 = arith.divf %151, %152 : vector<1x32xf32>
      %154 = vector.extract_strided_slice %142 {offsets = [0, 32], sizes = [1, 32], strides = [1, 1]} : vector<1x96xf32> to vector<1x32xf32>
      %155 = vector.extract_strided_slice %143 {offsets = [0, 32], sizes = [1, 32], strides = [1, 1]} : vector<1x96xf32> to vector<1x32xf32>
      %156 = arith.addf %154, %155 : vector<1x32xf32>
      %157 = vector.extract_strided_slice %131 {offsets = [1, 0], sizes = [1, 32], strides = [1, 1]} : vector<4x32xf32> to vector<1x32xf32>
      %158 = arith.addf %156, %157 : vector<1x32xf32>
      %159 = arith.negf %158 : vector<1x32xf32>
      %160 = math.exp %159 : vector<1x32xf32>
      %cst_64 = arith.constant 1.000000e+00 : f32
      %161 = vector.broadcast %cst_64 : f32 to vector<1x32xf32>
      %162 = arith.addf %161, %160 : vector<1x32xf32>
      %163 = arith.divf %161, %162 : vector<1x32xf32>
      %164 = vector.extract_strided_slice %142 {offsets = [0, 64], sizes = [1, 32], strides = [1, 1]} : vector<1x96xf32> to vector<1x32xf32>
      %165 = vector.extract_strided_slice %131 {offsets = [2, 0], sizes = [1, 32], strides = [1, 1]} : vector<4x32xf32> to vector<1x32xf32>
      %166 = arith.addf %164, %165 : vector<1x32xf32>
      %167 = vector.extract_strided_slice %143 {offsets = [0, 64], sizes = [1, 32], strides = [1, 1]} : vector<1x96xf32> to vector<1x32xf32>
      %168 = vector.extract_strided_slice %131 {offsets = [3, 0], sizes = [1, 32], strides = [1, 1]} : vector<4x32xf32> to vector<1x32xf32>
      %169 = arith.addf %167, %168 : vector<1x32xf32>
      %170 = arith.mulf %153, %169 : vector<1x32xf32>
      %171 = arith.addf %166, %170 : vector<1x32xf32>
      %172 = math.tanh %171 : vector<1x32xf32>
      %cst_65 = arith.constant 1.000000e+00 : f32
      %173 = vector.broadcast %cst_65 : f32 to vector<1x32xf32>
      %174 = arith.subf %173, %163 : vector<1x32xf32>
      %175 = arith.mulf %174, %172 : vector<1x32xf32>
      %176 = arith.mulf %163, %140 : vector<1x32xf32>
      %177 = arith.addf %175, %176 : vector<1x32xf32>
      %c0_i32_66 = arith.constant 0 : i32
      %178 = vector.broadcast %c0_i32_66 : i32 to vector<8x32xi32>
      %179 = arith.cmpi eq, %139, %178 : vector<8x32xi32>
      %180 = vector.shape_cast %177 : vector<1x32xf32> to vector<1x32xf32>
      %181 = vector.broadcast %180 : vector<1x32xf32> to vector<8x32xf32>
      %182 = arith.select %179, %181, %141 : vector<8x32xi1>, vector<8x32xf32>
      %183 = vector.extract_strided_slice %138 {offsets = [1, 0], sizes = [1, 96], strides = [1, 1]} : vector<8x96xf32> to vector<1x96xf32>
      %cst_67 = arith.constant dense<0.000000e+00> : vector<1x96xf32>
      %184 = tpu.matmul %177, %130, %cst_67 {dimension_numbers = #tpu.dot_dimension_numbers<[1], [0], [0], [1], [0, 0, 1, 1], [], []>} : vector<1x32xf32>, vector<32x96xf32>, vector<1x96xf32> -> vector<1x96xf32>
      %185 = vector.extract_strided_slice %183 {offsets = [0, 0], sizes = [1, 32], strides = [1, 1]} : vector<1x96xf32> to vector<1x32xf32>
      %186 = vector.extract_strided_slice %184 {offsets = [0, 0], sizes = [1, 32], strides = [1, 1]} : vector<1x96xf32> to vector<1x32xf32>
      %187 = arith.addf %185, %186 : vector<1x32xf32>
      %188 = vector.extract_strided_slice %131 {offsets = [0, 0], sizes = [1, 32], strides = [1, 1]} : vector<4x32xf32> to vector<1x32xf32>
      %189 = arith.addf %187, %188 : vector<1x32xf32>
      %190 = arith.negf %189 : vector<1x32xf32>
      %191 = math.exp %190 : vector<1x32xf32>
      %cst_68 = arith.constant 1.000000e+00 : f32
      %192 = vector.broadcast %cst_68 : f32 to vector<1x32xf32>
      %193 = arith.addf %192, %191 : vector<1x32xf32>
      %194 = arith.divf %192, %193 : vector<1x32xf32>
      %195 = vector.extract_strided_slice %183 {offsets = [0, 32], sizes = [1, 32], strides = [1, 1]} : vector<1x96xf32> to vector<1x32xf32>
      %196 = vector.extract_strided_slice %184 {offsets = [0, 32], sizes = [1, 32], strides = [1, 1]} : vector<1x96xf32> to vector<1x32xf32>
      %197 = arith.addf %195, %196 : vector<1x32xf32>
      %198 = vector.extract_strided_slice %131 {offsets = [1, 0], sizes = [1, 32], strides = [1, 1]} : vector<4x32xf32> to vector<1x32xf32>
      %199 = arith.addf %197, %198 : vector<1x32xf32>
      %200 = arith.negf %199 : vector<1x32xf32>
      %201 = math.exp %200 : vector<1x32xf32>
      %cst_69 = arith.constant 1.000000e+00 : f32
      %202 = vector.broadcast %cst_69 : f32 to vector<1x32xf32>
      %203 = arith.addf %202, %201 : vector<1x32xf32>
      %204 = arith.divf %202, %203 : vector<1x32xf32>
      %205 = vector.extract_strided_slice %183 {offsets = [0, 64], sizes = [1, 32], strides = [1, 1]} : vector<1x96xf32> to vector<1x32xf32>
      %206 = vector.extract_strided_slice %131 {offsets = [2, 0], sizes = [1, 32], strides = [1, 1]} : vector<4x32xf32> to vector<1x32xf32>
      %207 = arith.addf %205, %206 : vector<1x32xf32>
      %208 = vector.extract_strided_slice %184 {offsets = [0, 64], sizes = [1, 32], strides = [1, 1]} : vector<1x96xf32> to vector<1x32xf32>
      %209 = vector.extract_strided_slice %131 {offsets = [3, 0], sizes = [1, 32], strides = [1, 1]} : vector<4x32xf32> to vector<1x32xf32>
      %210 = arith.addf %208, %209 : vector<1x32xf32>
      %211 = arith.mulf %194, %210 : vector<1x32xf32>
      %212 = arith.addf %207, %211 : vector<1x32xf32>
      %213 = math.tanh %212 : vector<1x32xf32>
      %cst_70 = arith.constant 1.000000e+00 : f32
      %214 = vector.broadcast %cst_70 : f32 to vector<1x32xf32>
      %215 = arith.subf %214, %204 : vector<1x32xf32>
      %216 = arith.mulf %215, %213 : vector<1x32xf32>
      %217 = arith.mulf %204, %177 : vector<1x32xf32>
      %218 = arith.addf %216, %217 : vector<1x32xf32>
      %c1_i32 = arith.constant 1 : i32
      %219 = vector.broadcast %c1_i32 : i32 to vector<8x32xi32>
      %220 = arith.cmpi eq, %139, %219 : vector<8x32xi32>
      %221 = vector.shape_cast %218 : vector<1x32xf32> to vector<1x32xf32>
      %222 = vector.broadcast %221 : vector<1x32xf32> to vector<8x32xf32>
      %223 = arith.select %220, %222, %182 : vector<8x32xi1>, vector<8x32xf32>
      %224 = vector.extract_strided_slice %138 {offsets = [2, 0], sizes = [1, 96], strides = [1, 1]} : vector<8x96xf32> to vector<1x96xf32>
      %cst_71 = arith.constant dense<0.000000e+00> : vector<1x96xf32>
      %225 = tpu.matmul %218, %130, %cst_71 {dimension_numbers = #tpu.dot_dimension_numbers<[1], [0], [0], [1], [0, 0, 1, 1], [], []>} : vector<1x32xf32>, vector<32x96xf32>, vector<1x96xf32> -> vector<1x96xf32>
      %226 = vector.extract_strided_slice %224 {offsets = [0, 0], sizes = [1, 32], strides = [1, 1]} : vector<1x96xf32> to vector<1x32xf32>
      %227 = vector.extract_strided_slice %225 {offsets = [0, 0], sizes = [1, 32], strides = [1, 1]} : vector<1x96xf32> to vector<1x32xf32>
      %228 = arith.addf %226, %227 : vector<1x32xf32>
      %229 = vector.extract_strided_slice %131 {offsets = [0, 0], sizes = [1, 32], strides = [1, 1]} : vector<4x32xf32> to vector<1x32xf32>
      %230 = arith.addf %228, %229 : vector<1x32xf32>
      %231 = arith.negf %230 : vector<1x32xf32>
      %232 = math.exp %231 : vector<1x32xf32>
      %cst_72 = arith.constant 1.000000e+00 : f32
      %233 = vector.broadcast %cst_72 : f32 to vector<1x32xf32>
      %234 = arith.addf %233, %232 : vector<1x32xf32>
      %235 = arith.divf %233, %234 : vector<1x32xf32>
      %236 = vector.extract_strided_slice %224 {offsets = [0, 32], sizes = [1, 32], strides = [1, 1]} : vector<1x96xf32> to vector<1x32xf32>
      %237 = vector.extract_strided_slice %225 {offsets = [0, 32], sizes = [1, 32], strides = [1, 1]} : vector<1x96xf32> to vector<1x32xf32>
      %238 = arith.addf %236, %237 : vector<1x32xf32>
      %239 = vector.extract_strided_slice %131 {offsets = [1, 0], sizes = [1, 32], strides = [1, 1]} : vector<4x32xf32> to vector<1x32xf32>
      %240 = arith.addf %238, %239 : vector<1x32xf32>
      %241 = arith.negf %240 : vector<1x32xf32>
      %242 = math.exp %241 : vector<1x32xf32>
      %cst_73 = arith.constant 1.000000e+00 : f32
      %243 = vector.broadcast %cst_73 : f32 to vector<1x32xf32>
      %244 = arith.addf %243, %242 : vector<1x32xf32>
      %245 = arith.divf %243, %244 : vector<1x32xf32>
      %246 = vector.extract_strided_slice %224 {offsets = [0, 64], sizes = [1, 32], strides = [1, 1]} : vector<1x96xf32> to vector<1x32xf32>
      %247 = vector.extract_strided_slice %131 {offsets = [2, 0], sizes = [1, 32], strides = [1, 1]} : vector<4x32xf32> to vector<1x32xf32>
      %248 = arith.addf %246, %247 : vector<1x32xf32>
      %249 = vector.extract_strided_slice %225 {offsets = [0, 64], sizes = [1, 32], strides = [1, 1]} : vector<1x96xf32> to vector<1x32xf32>
      %250 = vector.extract_strided_slice %131 {offsets = [3, 0], sizes = [1, 32], strides = [1, 1]} : vector<4x32xf32> to vector<1x32xf32>
      %251 = arith.addf %249, %250 : vector<1x32xf32>
      %252 = arith.mulf %235, %251 : vector<1x32xf32>
      %253 = arith.addf %248, %252 : vector<1x32xf32>
      %254 = math.tanh %253 : vector<1x32xf32>
      %cst_74 = arith.constant 1.000000e+00 : f32
      %255 = vector.broadcast %cst_74 : f32 to vector<1x32xf32>
      %256 = arith.subf %255, %245 : vector<1x32xf32>
      %257 = arith.mulf %256, %254 : vector<1x32xf32>
      %258 = arith.mulf %245, %218 : vector<1x32xf32>
      %259 = arith.addf %257, %258 : vector<1x32xf32>
      %c2_i32 = arith.constant 2 : i32
      %260 = vector.broadcast %c2_i32 : i32 to vector<8x32xi32>
      %261 = arith.cmpi eq, %139, %260 : vector<8x32xi32>
      %262 = vector.shape_cast %259 : vector<1x32xf32> to vector<1x32xf32>
      %263 = vector.broadcast %262 : vector<1x32xf32> to vector<8x32xf32>
      %264 = arith.select %261, %263, %223 : vector<8x32xi1>, vector<8x32xf32>
      %265 = vector.extract_strided_slice %138 {offsets = [3, 0], sizes = [1, 96], strides = [1, 1]} : vector<8x96xf32> to vector<1x96xf32>
      %cst_75 = arith.constant dense<0.000000e+00> : vector<1x96xf32>
      %266 = tpu.matmul %259, %130, %cst_75 {dimension_numbers = #tpu.dot_dimension_numbers<[1], [0], [0], [1], [0, 0, 1, 1], [], []>} : vector<1x32xf32>, vector<32x96xf32>, vector<1x96xf32> -> vector<1x96xf32>
      %267 = vector.extract_strided_slice %265 {offsets = [0, 0], sizes = [1, 32], strides = [1, 1]} : vector<1x96xf32> to vector<1x32xf32>
      %268 = vector.extract_strided_slice %266 {offsets = [0, 0], sizes = [1, 32], strides = [1, 1]} : vector<1x96xf32> to vector<1x32xf32>
      %269 = arith.addf %267, %268 : vector<1x32xf32>
      %270 = vector.extract_strided_slice %131 {offsets = [0, 0], sizes = [1, 32], strides = [1, 1]} : vector<4x32xf32> to vector<1x32xf32>
      %271 = arith.addf %269, %270 : vector<1x32xf32>
      %272 = arith.negf %271 : vector<1x32xf32>
      %273 = math.exp %272 : vector<1x32xf32>
      %cst_76 = arith.constant 1.000000e+00 : f32
      %274 = vector.broadcast %cst_76 : f32 to vector<1x32xf32>
      %275 = arith.addf %274, %273 : vector<1x32xf32>
      %276 = arith.divf %274, %275 : vector<1x32xf32>
      %277 = vector.extract_strided_slice %265 {offsets = [0, 32], sizes = [1, 32], strides = [1, 1]} : vector<1x96xf32> to vector<1x32xf32>
      %278 = vector.extract_strided_slice %266 {offsets = [0, 32], sizes = [1, 32], strides = [1, 1]} : vector<1x96xf32> to vector<1x32xf32>
      %279 = arith.addf %277, %278 : vector<1x32xf32>
      %280 = vector.extract_strided_slice %131 {offsets = [1, 0], sizes = [1, 32], strides = [1, 1]} : vector<4x32xf32> to vector<1x32xf32>
      %281 = arith.addf %279, %280 : vector<1x32xf32>
      %282 = arith.negf %281 : vector<1x32xf32>
      %283 = math.exp %282 : vector<1x32xf32>
      %cst_77 = arith.constant 1.000000e+00 : f32
      %284 = vector.broadcast %cst_77 : f32 to vector<1x32xf32>
      %285 = arith.addf %284, %283 : vector<1x32xf32>
      %286 = arith.divf %284, %285 : vector<1x32xf32>
      %287 = vector.extract_strided_slice %265 {offsets = [0, 64], sizes = [1, 32], strides = [1, 1]} : vector<1x96xf32> to vector<1x32xf32>
      %288 = vector.extract_strided_slice %131 {offsets = [2, 0], sizes = [1, 32], strides = [1, 1]} : vector<4x32xf32> to vector<1x32xf32>
      %289 = arith.addf %287, %288 : vector<1x32xf32>
      %290 = vector.extract_strided_slice %266 {offsets = [0, 64], sizes = [1, 32], strides = [1, 1]} : vector<1x96xf32> to vector<1x32xf32>
      %291 = vector.extract_strided_slice %131 {offsets = [3, 0], sizes = [1, 32], strides = [1, 1]} : vector<4x32xf32> to vector<1x32xf32>
      %292 = arith.addf %290, %291 : vector<1x32xf32>
      %293 = arith.mulf %276, %292 : vector<1x32xf32>
      %294 = arith.addf %289, %293 : vector<1x32xf32>
      %295 = math.tanh %294 : vector<1x32xf32>
      %cst_78 = arith.constant 1.000000e+00 : f32
      %296 = vector.broadcast %cst_78 : f32 to vector<1x32xf32>
      %297 = arith.subf %296, %286 : vector<1x32xf32>
      %298 = arith.mulf %297, %295 : vector<1x32xf32>
      %299 = arith.mulf %286, %259 : vector<1x32xf32>
      %300 = arith.addf %298, %299 : vector<1x32xf32>
      %c3_i32 = arith.constant 3 : i32
      %301 = vector.broadcast %c3_i32 : i32 to vector<8x32xi32>
      %302 = arith.cmpi eq, %139, %301 : vector<8x32xi32>
      %303 = vector.shape_cast %300 : vector<1x32xf32> to vector<1x32xf32>
      %304 = vector.broadcast %303 : vector<1x32xf32> to vector<8x32xf32>
      %305 = arith.select %302, %304, %264 : vector<8x32xi1>, vector<8x32xf32>
      %306 = vector.extract_strided_slice %138 {offsets = [4, 0], sizes = [1, 96], strides = [1, 1]} : vector<8x96xf32> to vector<1x96xf32>
      %cst_79 = arith.constant dense<0.000000e+00> : vector<1x96xf32>
      %307 = tpu.matmul %300, %130, %cst_79 {dimension_numbers = #tpu.dot_dimension_numbers<[1], [0], [0], [1], [0, 0, 1, 1], [], []>} : vector<1x32xf32>, vector<32x96xf32>, vector<1x96xf32> -> vector<1x96xf32>
      %308 = vector.extract_strided_slice %306 {offsets = [0, 0], sizes = [1, 32], strides = [1, 1]} : vector<1x96xf32> to vector<1x32xf32>
      %309 = vector.extract_strided_slice %307 {offsets = [0, 0], sizes = [1, 32], strides = [1, 1]} : vector<1x96xf32> to vector<1x32xf32>
      %310 = arith.addf %308, %309 : vector<1x32xf32>
      %311 = vector.extract_strided_slice %131 {offsets = [0, 0], sizes = [1, 32], strides = [1, 1]} : vector<4x32xf32> to vector<1x32xf32>
      %312 = arith.addf %310, %311 : vector<1x32xf32>
      %313 = arith.negf %312 : vector<1x32xf32>
      %314 = math.exp %313 : vector<1x32xf32>
      %cst_80 = arith.constant 1.000000e+00 : f32
      %315 = vector.broadcast %cst_80 : f32 to vector<1x32xf32>
      %316 = arith.addf %315, %314 : vector<1x32xf32>
      %317 = arith.divf %315, %316 : vector<1x32xf32>
      %318 = vector.extract_strided_slice %306 {offsets = [0, 32], sizes = [1, 32], strides = [1, 1]} : vector<1x96xf32> to vector<1x32xf32>
      %319 = vector.extract_strided_slice %307 {offsets = [0, 32], sizes = [1, 32], strides = [1, 1]} : vector<1x96xf32> to vector<1x32xf32>
      %320 = arith.addf %318, %319 : vector<1x32xf32>
      %321 = vector.extract_strided_slice %131 {offsets = [1, 0], sizes = [1, 32], strides = [1, 1]} : vector<4x32xf32> to vector<1x32xf32>
      %322 = arith.addf %320, %321 : vector<1x32xf32>
      %323 = arith.negf %322 : vector<1x32xf32>
      %324 = math.exp %323 : vector<1x32xf32>
      %cst_81 = arith.constant 1.000000e+00 : f32
      %325 = vector.broadcast %cst_81 : f32 to vector<1x32xf32>
      %326 = arith.addf %325, %324 : vector<1x32xf32>
      %327 = arith.divf %325, %326 : vector<1x32xf32>
      %328 = vector.extract_strided_slice %306 {offsets = [0, 64], sizes = [1, 32], strides = [1, 1]} : vector<1x96xf32> to vector<1x32xf32>
      %329 = vector.extract_strided_slice %131 {offsets = [2, 0], sizes = [1, 32], strides = [1, 1]} : vector<4x32xf32> to vector<1x32xf32>
      %330 = arith.addf %328, %329 : vector<1x32xf32>
      %331 = vector.extract_strided_slice %307 {offsets = [0, 64], sizes = [1, 32], strides = [1, 1]} : vector<1x96xf32> to vector<1x32xf32>
      %332 = vector.extract_strided_slice %131 {offsets = [3, 0], sizes = [1, 32], strides = [1, 1]} : vector<4x32xf32> to vector<1x32xf32>
      %333 = arith.addf %331, %332 : vector<1x32xf32>
      %334 = arith.mulf %317, %333 : vector<1x32xf32>
      %335 = arith.addf %330, %334 : vector<1x32xf32>
      %336 = math.tanh %335 : vector<1x32xf32>
      %cst_82 = arith.constant 1.000000e+00 : f32
      %337 = vector.broadcast %cst_82 : f32 to vector<1x32xf32>
      %338 = arith.subf %337, %327 : vector<1x32xf32>
      %339 = arith.mulf %338, %336 : vector<1x32xf32>
      %340 = arith.mulf %327, %300 : vector<1x32xf32>
      %341 = arith.addf %339, %340 : vector<1x32xf32>
      %c4_i32_83 = arith.constant 4 : i32
      %342 = vector.broadcast %c4_i32_83 : i32 to vector<8x32xi32>
      %343 = arith.cmpi eq, %139, %342 : vector<8x32xi32>
      %344 = vector.shape_cast %341 : vector<1x32xf32> to vector<1x32xf32>
      %345 = vector.broadcast %344 : vector<1x32xf32> to vector<8x32xf32>
      %346 = arith.select %343, %345, %305 : vector<8x32xi1>, vector<8x32xf32>
      %347 = vector.extract_strided_slice %138 {offsets = [5, 0], sizes = [1, 96], strides = [1, 1]} : vector<8x96xf32> to vector<1x96xf32>
      %cst_84 = arith.constant dense<0.000000e+00> : vector<1x96xf32>
      %348 = tpu.matmul %341, %130, %cst_84 {dimension_numbers = #tpu.dot_dimension_numbers<[1], [0], [0], [1], [0, 0, 1, 1], [], []>} : vector<1x32xf32>, vector<32x96xf32>, vector<1x96xf32> -> vector<1x96xf32>
      %349 = vector.extract_strided_slice %347 {offsets = [0, 0], sizes = [1, 32], strides = [1, 1]} : vector<1x96xf32> to vector<1x32xf32>
      %350 = vector.extract_strided_slice %348 {offsets = [0, 0], sizes = [1, 32], strides = [1, 1]} : vector<1x96xf32> to vector<1x32xf32>
      %351 = arith.addf %349, %350 : vector<1x32xf32>
      %352 = vector.extract_strided_slice %131 {offsets = [0, 0], sizes = [1, 32], strides = [1, 1]} : vector<4x32xf32> to vector<1x32xf32>
      %353 = arith.addf %351, %352 : vector<1x32xf32>
      %354 = arith.negf %353 : vector<1x32xf32>
      %355 = math.exp %354 : vector<1x32xf32>
      %cst_85 = arith.constant 1.000000e+00 : f32
      %356 = vector.broadcast %cst_85 : f32 to vector<1x32xf32>
      %357 = arith.addf %356, %355 : vector<1x32xf32>
      %358 = arith.divf %356, %357 : vector<1x32xf32>
      %359 = vector.extract_strided_slice %347 {offsets = [0, 32], sizes = [1, 32], strides = [1, 1]} : vector<1x96xf32> to vector<1x32xf32>
      %360 = vector.extract_strided_slice %348 {offsets = [0, 32], sizes = [1, 32], strides = [1, 1]} : vector<1x96xf32> to vector<1x32xf32>
      %361 = arith.addf %359, %360 : vector<1x32xf32>
      %362 = vector.extract_strided_slice %131 {offsets = [1, 0], sizes = [1, 32], strides = [1, 1]} : vector<4x32xf32> to vector<1x32xf32>
      %363 = arith.addf %361, %362 : vector<1x32xf32>
      %364 = arith.negf %363 : vector<1x32xf32>
      %365 = math.exp %364 : vector<1x32xf32>
      %cst_86 = arith.constant 1.000000e+00 : f32
      %366 = vector.broadcast %cst_86 : f32 to vector<1x32xf32>
      %367 = arith.addf %366, %365 : vector<1x32xf32>
      %368 = arith.divf %366, %367 : vector<1x32xf32>
      %369 = vector.extract_strided_slice %347 {offsets = [0, 64], sizes = [1, 32], strides = [1, 1]} : vector<1x96xf32> to vector<1x32xf32>
      %370 = vector.extract_strided_slice %131 {offsets = [2, 0], sizes = [1, 32], strides = [1, 1]} : vector<4x32xf32> to vector<1x32xf32>
      %371 = arith.addf %369, %370 : vector<1x32xf32>
      %372 = vector.extract_strided_slice %348 {offsets = [0, 64], sizes = [1, 32], strides = [1, 1]} : vector<1x96xf32> to vector<1x32xf32>
      %373 = vector.extract_strided_slice %131 {offsets = [3, 0], sizes = [1, 32], strides = [1, 1]} : vector<4x32xf32> to vector<1x32xf32>
      %374 = arith.addf %372, %373 : vector<1x32xf32>
      %375 = arith.mulf %358, %374 : vector<1x32xf32>
      %376 = arith.addf %371, %375 : vector<1x32xf32>
      %377 = math.tanh %376 : vector<1x32xf32>
      %cst_87 = arith.constant 1.000000e+00 : f32
      %378 = vector.broadcast %cst_87 : f32 to vector<1x32xf32>
      %379 = arith.subf %378, %368 : vector<1x32xf32>
      %380 = arith.mulf %379, %377 : vector<1x32xf32>
      %381 = arith.mulf %368, %341 : vector<1x32xf32>
      %382 = arith.addf %380, %381 : vector<1x32xf32>
      %c5_i32 = arith.constant 5 : i32
      %383 = vector.broadcast %c5_i32 : i32 to vector<8x32xi32>
      %384 = arith.cmpi eq, %139, %383 : vector<8x32xi32>
      %385 = vector.shape_cast %382 : vector<1x32xf32> to vector<1x32xf32>
      %386 = vector.broadcast %385 : vector<1x32xf32> to vector<8x32xf32>
      %387 = arith.select %384, %386, %346 : vector<8x32xi1>, vector<8x32xf32>
      %388 = vector.extract_strided_slice %138 {offsets = [6, 0], sizes = [1, 96], strides = [1, 1]} : vector<8x96xf32> to vector<1x96xf32>
      %cst_88 = arith.constant dense<0.000000e+00> : vector<1x96xf32>
      %389 = tpu.matmul %382, %130, %cst_88 {dimension_numbers = #tpu.dot_dimension_numbers<[1], [0], [0], [1], [0, 0, 1, 1], [], []>} : vector<1x32xf32>, vector<32x96xf32>, vector<1x96xf32> -> vector<1x96xf32>
      %390 = vector.extract_strided_slice %388 {offsets = [0, 0], sizes = [1, 32], strides = [1, 1]} : vector<1x96xf32> to vector<1x32xf32>
      %391 = vector.extract_strided_slice %389 {offsets = [0, 0], sizes = [1, 32], strides = [1, 1]} : vector<1x96xf32> to vector<1x32xf32>
      %392 = arith.addf %390, %391 : vector<1x32xf32>
      %393 = vector.extract_strided_slice %131 {offsets = [0, 0], sizes = [1, 32], strides = [1, 1]} : vector<4x32xf32> to vector<1x32xf32>
      %394 = arith.addf %392, %393 : vector<1x32xf32>
      %395 = arith.negf %394 : vector<1x32xf32>
      %396 = math.exp %395 : vector<1x32xf32>
      %cst_89 = arith.constant 1.000000e+00 : f32
      %397 = vector.broadcast %cst_89 : f32 to vector<1x32xf32>
      %398 = arith.addf %397, %396 : vector<1x32xf32>
      %399 = arith.divf %397, %398 : vector<1x32xf32>
      %400 = vector.extract_strided_slice %388 {offsets = [0, 32], sizes = [1, 32], strides = [1, 1]} : vector<1x96xf32> to vector<1x32xf32>
      %401 = vector.extract_strided_slice %389 {offsets = [0, 32], sizes = [1, 32], strides = [1, 1]} : vector<1x96xf32> to vector<1x32xf32>
      %402 = arith.addf %400, %401 : vector<1x32xf32>
      %403 = vector.extract_strided_slice %131 {offsets = [1, 0], sizes = [1, 32], strides = [1, 1]} : vector<4x32xf32> to vector<1x32xf32>
      %404 = arith.addf %402, %403 : vector<1x32xf32>
      %405 = arith.negf %404 : vector<1x32xf32>
      %406 = math.exp %405 : vector<1x32xf32>
      %cst_90 = arith.constant 1.000000e+00 : f32
      %407 = vector.broadcast %cst_90 : f32 to vector<1x32xf32>
      %408 = arith.addf %407, %406 : vector<1x32xf32>
      %409 = arith.divf %407, %408 : vector<1x32xf32>
      %410 = vector.extract_strided_slice %388 {offsets = [0, 64], sizes = [1, 32], strides = [1, 1]} : vector<1x96xf32> to vector<1x32xf32>
      %411 = vector.extract_strided_slice %131 {offsets = [2, 0], sizes = [1, 32], strides = [1, 1]} : vector<4x32xf32> to vector<1x32xf32>
      %412 = arith.addf %410, %411 : vector<1x32xf32>
      %413 = vector.extract_strided_slice %389 {offsets = [0, 64], sizes = [1, 32], strides = [1, 1]} : vector<1x96xf32> to vector<1x32xf32>
      %414 = vector.extract_strided_slice %131 {offsets = [3, 0], sizes = [1, 32], strides = [1, 1]} : vector<4x32xf32> to vector<1x32xf32>
      %415 = arith.addf %413, %414 : vector<1x32xf32>
      %416 = arith.mulf %399, %415 : vector<1x32xf32>
      %417 = arith.addf %412, %416 : vector<1x32xf32>
      %418 = math.tanh %417 : vector<1x32xf32>
      %cst_91 = arith.constant 1.000000e+00 : f32
      %419 = vector.broadcast %cst_91 : f32 to vector<1x32xf32>
      %420 = arith.subf %419, %409 : vector<1x32xf32>
      %421 = arith.mulf %420, %418 : vector<1x32xf32>
      %422 = arith.mulf %409, %382 : vector<1x32xf32>
      %423 = arith.addf %421, %422 : vector<1x32xf32>
      %c6_i32 = arith.constant 6 : i32
      %424 = vector.broadcast %c6_i32 : i32 to vector<8x32xi32>
      %425 = arith.cmpi eq, %139, %424 : vector<8x32xi32>
      %426 = vector.shape_cast %423 : vector<1x32xf32> to vector<1x32xf32>
      %427 = vector.broadcast %426 : vector<1x32xf32> to vector<8x32xf32>
      %428 = arith.select %425, %427, %387 : vector<8x32xi1>, vector<8x32xf32>
      %429 = vector.extract_strided_slice %138 {offsets = [7, 0], sizes = [1, 96], strides = [1, 1]} : vector<8x96xf32> to vector<1x96xf32>
      %cst_92 = arith.constant dense<0.000000e+00> : vector<1x96xf32>
      %430 = tpu.matmul %423, %130, %cst_92 {dimension_numbers = #tpu.dot_dimension_numbers<[1], [0], [0], [1], [0, 0, 1, 1], [], []>} : vector<1x32xf32>, vector<32x96xf32>, vector<1x96xf32> -> vector<1x96xf32>
      %431 = vector.extract_strided_slice %429 {offsets = [0, 0], sizes = [1, 32], strides = [1, 1]} : vector<1x96xf32> to vector<1x32xf32>
      %432 = vector.extract_strided_slice %430 {offsets = [0, 0], sizes = [1, 32], strides = [1, 1]} : vector<1x96xf32> to vector<1x32xf32>
      %433 = arith.addf %431, %432 : vector<1x32xf32>
      %434 = vector.extract_strided_slice %131 {offsets = [0, 0], sizes = [1, 32], strides = [1, 1]} : vector<4x32xf32> to vector<1x32xf32>
      %435 = arith.addf %433, %434 : vector<1x32xf32>
      %436 = arith.negf %435 : vector<1x32xf32>
      %437 = math.exp %436 : vector<1x32xf32>
      %cst_93 = arith.constant 1.000000e+00 : f32
      %438 = vector.broadcast %cst_93 : f32 to vector<1x32xf32>
      %439 = arith.addf %438, %437 : vector<1x32xf32>
      %440 = arith.divf %438, %439 : vector<1x32xf32>
      %441 = vector.extract_strided_slice %429 {offsets = [0, 32], sizes = [1, 32], strides = [1, 1]} : vector<1x96xf32> to vector<1x32xf32>
      %442 = vector.extract_strided_slice %430 {offsets = [0, 32], sizes = [1, 32], strides = [1, 1]} : vector<1x96xf32> to vector<1x32xf32>
      %443 = arith.addf %441, %442 : vector<1x32xf32>
      %444 = vector.extract_strided_slice %131 {offsets = [1, 0], sizes = [1, 32], strides = [1, 1]} : vector<4x32xf32> to vector<1x32xf32>
      %445 = arith.addf %443, %444 : vector<1x32xf32>
      %446 = arith.negf %445 : vector<1x32xf32>
      %447 = math.exp %446 : vector<1x32xf32>
      %cst_94 = arith.constant 1.000000e+00 : f32
      %448 = vector.broadcast %cst_94 : f32 to vector<1x32xf32>
      %449 = arith.addf %448, %447 : vector<1x32xf32>
      %450 = arith.divf %448, %449 : vector<1x32xf32>
      %451 = vector.extract_strided_slice %429 {offsets = [0, 64], sizes = [1, 32], strides = [1, 1]} : vector<1x96xf32> to vector<1x32xf32>
      %452 = vector.extract_strided_slice %131 {offsets = [2, 0], sizes = [1, 32], strides = [1, 1]} : vector<4x32xf32> to vector<1x32xf32>
      %453 = arith.addf %451, %452 : vector<1x32xf32>
      %454 = vector.extract_strided_slice %430 {offsets = [0, 64], sizes = [1, 32], strides = [1, 1]} : vector<1x96xf32> to vector<1x32xf32>
      %455 = vector.extract_strided_slice %131 {offsets = [3, 0], sizes = [1, 32], strides = [1, 1]} : vector<4x32xf32> to vector<1x32xf32>
      %456 = arith.addf %454, %455 : vector<1x32xf32>
      %457 = arith.mulf %440, %456 : vector<1x32xf32>
      %458 = arith.addf %453, %457 : vector<1x32xf32>
      %459 = math.tanh %458 : vector<1x32xf32>
      %cst_95 = arith.constant 1.000000e+00 : f32
      %460 = vector.broadcast %cst_95 : f32 to vector<1x32xf32>
      %461 = arith.subf %460, %450 : vector<1x32xf32>
      %462 = arith.mulf %461, %459 : vector<1x32xf32>
      %463 = arith.mulf %450, %423 : vector<1x32xf32>
      %464 = arith.addf %462, %463 : vector<1x32xf32>
      %c7_i32 = arith.constant 7 : i32
      %465 = vector.broadcast %c7_i32 : i32 to vector<8x32xi32>
      %466 = arith.cmpi eq, %139, %465 : vector<8x32xi32>
      %467 = vector.shape_cast %464 : vector<1x32xf32> to vector<1x32xf32>
      %468 = vector.broadcast %467 : vector<1x32xf32> to vector<8x32xf32>
      %469 = arith.select %466, %468, %428 : vector<8x32xi1>, vector<8x32xf32>
      %c0_96 = arith.constant 0 : index
      %c0_97 = arith.constant 0 : index
      %470 = vector.load %arg13[%c0_96, %c0_97] : memref<8x32xf32, #tpu.memory_space<vmem>>, vector<8x32xf32>
      tpu.vector_store %arg13[%c0_96, %c0_97], %469 {strides = array<i32>} : memref<8x32xf32, #tpu.memory_space<vmem>>, vector<8x32xf32>,
      %471 = vector.shape_cast %464 : vector<1x32xf32> to vector<1x32xf32>
      %472 = vector.broadcast %471 : vector<1x32xf32> to vector<16x32xf32>
      %c0_98 = arith.constant 0 : index
      %c0_99 = arith.constant 0 : index
      %473 = vector.load %arg14[%c0_98, %c0_99] : memref<16x32xf32, #tpu.memory_space<vmem>>, vector<16x32xf32>
      tpu.vector_store %arg14[%c0_98, %c0_99], %472 {strides = array<i32>} : memref<16x32xf32, #tpu.memory_space<vmem>>, vector<16x32xf32>,
      %c0_i32_100 = arith.constant 0 : i32
      %474 = vector.broadcast %c0_i32_100 : i32 to vector<16x1xi32>
      %c0_101 = arith.constant 0 : index
      %c0_102 = arith.constant 0 : index
      %475 = vector.load %arg15[%c0_101, %c0_102] : memref<16x1xi32, #tpu.memory_space<vmem>>, vector<16x1xi32>
      tpu.vector_store %arg15[%c0_101, %c0_102], %474 {strides = array<i32>} : memref<16x1xi32, #tpu.memory_space<vmem>>, vector<16x1xi32>,
      %476 = tpu.iota {dimensions = array<i32: 0>} : vector<16x1xi32>
      %c0_103 = arith.constant 0 : index
      %c0_104 = arith.constant 0 : index
      %477 = vector.load %arg16[%c0_103, %c0_104] : memref<16x1xi32, #tpu.memory_space<vmem>>, vector<16x1xi32>
      tpu.vector_store %arg16[%c0_103, %c0_104], %476 {strides = array<i32>} : memref<16x1xi32, #tpu.memory_space<vmem>>, vector<16x1xi32>,
    } else {
    }
    %c0 = arith.constant 0 : index
    %c0_1 = arith.constant 0 : index
    %3 = vector.load %arg7[%c0, %c0_1] : memref<5x32xf32, #tpu.memory_space<vmem>>, vector<5x32xf32>
    %c0_2 = arith.constant 0 : index
    %c0_3 = arith.constant 0 : index
    %4 = vector.load %arg15[%c0_2, %c0_3] : memref<16x1xi32, #tpu.memory_space<vmem>>, vector<16x1xi32>
    %5 = tpu.iota {dimensions = array<i32: 1>} : vector<16x16xi32>
    %6 = vector.broadcast %4 : vector<16x1xi32> to vector<16x16xi32>
    %7 = arith.cmpi eq, %6, %5 : vector<16x16xi32>
    %8 = arith.extui %7 : vector<16x16xi1> to vector<16x16xi32>
    %9 = arith.sitofp %8 : vector<16x16xi32> to vector<16x16xf32>
    %c0_4 = arith.constant 0 : index
    %c0_5 = arith.constant 0 : index
    %10 = vector.load %arg5[%c0_4, %c0_5] : memref<16x96xf32, #tpu.memory_space<vmem>>, vector<16x96xf32>
    %cst = arith.constant dense<0.000000e+00> : vector<16x96xf32>
    %11 = tpu.matmul %9, %10, %cst {dimension_numbers = #tpu.dot_dimension_numbers<[1], [0], [0], [1], [0, 0, 1, 1], [], []>} : vector<16x16xf32>, vector<16x96xf32>, vector<16x96xf32> -> vector<16x96xf32>
    %c0_6 = arith.constant 0 : index
    %c0_7 = arith.constant 0 : index
    %12 = vector.load %arg14[%c0_6, %c0_7] : memref<16x32xf32, #tpu.memory_space<vmem>>, vector<16x32xf32>
    %c0_8 = arith.constant 0 : index
    %c0_9 = arith.constant 0 : index
    %13 = vector.load %arg6[%c0_8, %c0_9] : memref<32x96xf32, #tpu.memory_space<vmem>>, vector<32x96xf32>
    %cst_10 = arith.constant dense<0.000000e+00> : vector<16x96xf32>
    %14 = tpu.matmul %12, %13, %cst_10 {dimension_numbers = #tpu.dot_dimension_numbers<[1], [0], [0], [1], [0, 0, 1, 1], [], []>} : vector<16x32xf32>, vector<32x96xf32>, vector<16x96xf32> -> vector<16x96xf32>
    %15 = vector.extract_strided_slice %11 {offsets = [0, 0], sizes = [16, 32], strides = [1, 1]} : vector<16x96xf32> to vector<16x32xf32>
    %16 = vector.extract_strided_slice %14 {offsets = [0, 0], sizes = [16, 32], strides = [1, 1]} : vector<16x96xf32> to vector<16x32xf32>
    %17 = arith.addf %15, %16 : vector<16x32xf32>
    %18 = vector.extract_strided_slice %3 {offsets = [0, 0], sizes = [1, 32], strides = [1, 1]} : vector<5x32xf32> to vector<1x32xf32>
    %19 = vector.broadcast %18 : vector<1x32xf32> to vector<16x32xf32>
    %20 = arith.addf %17, %19 : vector<16x32xf32>
    %21 = arith.negf %20 : vector<16x32xf32>
    %22 = math.exp %21 : vector<16x32xf32>
    %cst_11 = arith.constant 1.000000e+00 : f32
    %23 = vector.broadcast %cst_11 : f32 to vector<16x32xf32>
    %24 = arith.addf %23, %22 : vector<16x32xf32>
    %25 = arith.divf %23, %24 : vector<16x32xf32>
    %26 = vector.extract_strided_slice %11 {offsets = [0, 32], sizes = [16, 32], strides = [1, 1]} : vector<16x96xf32> to vector<16x32xf32>
    %27 = vector.extract_strided_slice %14 {offsets = [0, 32], sizes = [16, 32], strides = [1, 1]} : vector<16x96xf32> to vector<16x32xf32>
    %28 = arith.addf %26, %27 : vector<16x32xf32>
    %29 = vector.extract_strided_slice %3 {offsets = [1, 0], sizes = [1, 32], strides = [1, 1]} : vector<5x32xf32> to vector<1x32xf32>
    %30 = vector.broadcast %29 : vector<1x32xf32> to vector<16x32xf32>
    %31 = arith.addf %28, %30 : vector<16x32xf32>
    %32 = arith.negf %31 : vector<16x32xf32>
    %33 = math.exp %32 : vector<16x32xf32>
    %cst_12 = arith.constant 1.000000e+00 : f32
    %34 = vector.broadcast %cst_12 : f32 to vector<16x32xf32>
    %35 = arith.addf %34, %33 : vector<16x32xf32>
    %36 = arith.divf %34, %35 : vector<16x32xf32>
    %37 = vector.extract_strided_slice %11 {offsets = [0, 64], sizes = [16, 32], strides = [1, 1]} : vector<16x96xf32> to vector<16x32xf32>
    %38 = vector.extract_strided_slice %3 {offsets = [2, 0], sizes = [1, 32], strides = [1, 1]} : vector<5x32xf32> to vector<1x32xf32>
    %39 = vector.broadcast %38 : vector<1x32xf32> to vector<16x32xf32>
    %40 = arith.addf %37, %39 : vector<16x32xf32>
    %41 = vector.extract_strided_slice %14 {offsets = [0, 64], sizes = [16, 32], strides = [1, 1]} : vector<16x96xf32> to vector<16x32xf32>
    %42 = vector.extract_strided_slice %3 {offsets = [3, 0], sizes = [1, 32], strides = [1, 1]} : vector<5x32xf32> to vector<1x32xf32>
    %43 = vector.broadcast %42 : vector<1x32xf32> to vector<16x32xf32>
    %44 = arith.addf %41, %43 : vector<16x32xf32>
    %45 = arith.mulf %25, %44 : vector<16x32xf32>
    %46 = arith.addf %40, %45 : vector<16x32xf32>
    %47 = math.tanh %46 : vector<16x32xf32>
    %cst_13 = arith.constant 1.000000e+00 : f32
    %48 = vector.broadcast %cst_13 : f32 to vector<16x32xf32>
    %49 = arith.subf %48, %36 : vector<16x32xf32>
    %50 = arith.mulf %49, %47 : vector<16x32xf32>
    %51 = arith.mulf %36, %12 : vector<16x32xf32>
    %52 = arith.addf %50, %51 : vector<16x32xf32>
    %c0_14 = arith.constant 0 : index
    %c0_15 = arith.constant 0 : index
    %53 = vector.load %arg13[%c0_14, %c0_15] : memref<8x32xf32, #tpu.memory_space<vmem>>, vector<8x32xf32>
    %cst_16 = arith.constant dense<0.000000e+00> : vector<16x8xf32>
    %54 = tpu.matmul %52, %53, %cst_16 {dimension_numbers = #tpu.dot_dimension_numbers<[1], [1], [0], [0], [0, 0, 1, 0], [], []>} : vector<16x32xf32>, vector<8x32xf32>, vector<16x8xf32> -> vector<16x8xf32>
    %cst_17 = arith.constant dense<0xFF800000> : vector<16xf32>
    %55 = vector.multi_reduction <maximumf>, %54, %cst_17 [1] : vector<16x8xf32> to vector<16xf32>
    %56 = vector.shape_cast %55 : vector<16xf32> to vector<16x1xf32>
    %57 = vector.broadcast %56 : vector<16x1xf32> to vector<16x8xf32>
    %58 = arith.subf %54, %57 : vector<16x8xf32>
    %59 = math.exp %58 : vector<16x8xf32>
    %cst_18 = arith.constant dense<0.000000e+00> : vector<16xf32>
    %60 = vector.multi_reduction <add>, %59, %cst_18 [1] : vector<16x8xf32> to vector<16xf32>
    %61 = vector.shape_cast %60 : vector<16xf32> to vector<16x1xf32>
    %62 = tpu.reciprocal %61 {approx = true} : vector<16x1xf32> -> vector<16x1xf32>
    %63 = vector.broadcast %62 : vector<16x1xf32> to vector<16x8xf32>
    %64 = arith.mulf %59, %63 : vector<16x8xf32>
    %cst_19 = arith.constant dense<0.000000e+00> : vector<16x32xf32>
    %65 = tpu.matmul %64, %53, %cst_19 {dimension_numbers = #tpu.dot_dimension_numbers<[1], [0], [0], [1], [0, 0, 1, 1], [], []>} : vector<16x8xf32>, vector<8x32xf32>, vector<16x32xf32> -> vector<16x32xf32>
    %c0_20 = arith.constant 0 : index
    %c0_21 = arith.constant 0 : index
    %66 = vector.load %arg8[%c0_20, %c0_21] : memref<64x32xf32, #tpu.memory_space<vmem>>, vector<64x32xf32>
    %67 = vector.extract_strided_slice %66 {offsets = [0, 0], sizes = [32, 32], strides = [1, 1]} : vector<64x32xf32> to vector<32x32xf32>
    %cst_22 = arith.constant dense<0.000000e+00> : vector<16x32xf32>
    %68 = tpu.matmul %52, %67, %cst_22 {dimension_numbers = #tpu.dot_dimension_numbers<[1], [0], [0], [1], [0, 0, 1, 1], [], []>} : vector<16x32xf32>, vector<32x32xf32>, vector<16x32xf32> -> vector<16x32xf32>
    %69 = vector.extract_strided_slice %66 {offsets = [32, 0], sizes = [32, 32], strides = [1, 1]} : vector<64x32xf32> to vector<32x32xf32>
    %cst_23 = arith.constant dense<0.000000e+00> : vector<16x32xf32>
    %70 = tpu.matmul %65, %69, %cst_23 {dimension_numbers = #tpu.dot_dimension_numbers<[1], [0], [0], [1], [0, 0, 1, 1], [], []>} : vector<16x32xf32>, vector<32x32xf32>, vector<16x32xf32> -> vector<16x32xf32>
    %71 = arith.addf %68, %70 : vector<16x32xf32>
    %72 = vector.extract_strided_slice %3 {offsets = [4, 0], sizes = [1, 32], strides = [1, 1]} : vector<5x32xf32> to vector<1x32xf32>
    %73 = vector.broadcast %72 : vector<1x32xf32> to vector<16x32xf32>
    %74 = arith.addf %71, %73 : vector<16x32xf32>
    %75 = math.tanh %74 : vector<16x32xf32>
    %c0_24 = arith.constant 0 : index
    %c0_25 = arith.constant 0 : index
    %76 = vector.load %arg9[%c0_24, %c0_25] : memref<32x16xf32, #tpu.memory_space<vmem>>, vector<32x16xf32>
    %cst_26 = arith.constant dense<0.000000e+00> : vector<16x16xf32>
    %77 = tpu.matmul %75, %76, %cst_26 {dimension_numbers = #tpu.dot_dimension_numbers<[1], [0], [0], [1], [0, 0, 1, 1], [], []>} : vector<16x32xf32>, vector<32x16xf32>, vector<16x16xf32> -> vector<16x16xf32>
    %c0_27 = arith.constant 0 : index
    %c0_28 = arith.constant 0 : index
    %78 = vector.load %arg10[%c0_27, %c0_28] : memref<1x16xf32, #tpu.memory_space<vmem>>, vector<1x16xf32>
    %79 = vector.broadcast %78 : vector<1x16xf32> to vector<16x16xf32>
    %80 = arith.addf %77, %79 : vector<16x16xf32>
    %cst_29 = arith.constant dense<0xFF800000> : vector<16xf32>
    %81 = vector.multi_reduction <maximumf>, %80, %cst_29 [1] : vector<16x16xf32> to vector<16xf32>
    %82 = vector.shape_cast %81 : vector<16xf32> to vector<16x1xf32>
    %83 = vector.broadcast %82 : vector<16x1xf32> to vector<16x16xf32>
    %84 = arith.subf %80, %83 : vector<16x16xf32>
    %85 = math.exp %84 : vector<16x16xf32>
    %cst_30 = arith.constant dense<0.000000e+00> : vector<16xf32>
    %86 = vector.multi_reduction <add>, %85, %cst_30 [1] : vector<16x16xf32> to vector<16xf32>
    %87 = vector.shape_cast %86 : vector<16xf32> to vector<16x1xf32>
    %88 = vector.broadcast %87 : vector<16x1xf32> to vector<16x16xf32>
    %89 = arith.divf %85, %88 : vector<16x16xf32>
    %90 = tpu.iota {dimensions = array<i32: 1>} : vector<16x16xi32>
    %91 = arith.sitofp %90 : vector<16x16xi32> to vector<16x16xf32>
    %cst_31 = arith.constant 1.600000e+01 : f32
    %92 = vector.broadcast %cst_31 : f32 to vector<16x16xf32>
    %cst_32 = arith.constant dense<0xFF800000> : vector<16xf32>
    %93 = vector.multi_reduction <maximumf>, %89, %cst_32 [1] : vector<16x16xf32> to vector<16xf32>
    %94 = vector.shape_cast %93 : vector<16xf32> to vector<16x1xf32>
    %95 = vector.broadcast %94 : vector<16x1xf32> to vector<16x16xf32>
    %96 = arith.cmpf oeq, %89, %95 : vector<16x16xf32>
    %97 = arith.select %96, %91, %92 : vector<16x16xi1>, vector<16x16xf32>
    %cst_33 = arith.constant dense<0x7F800000> : vector<16xf32>
    %98 = vector.multi_reduction <minimumf>, %97, %cst_33 [1] : vector<16x16xf32> to vector<16xf32>
    %99 = vector.shape_cast %98 : vector<16xf32> to vector<16x1xf32>
    %100 = vector.broadcast %99 : vector<16x1xf32> to vector<16x16xf32>
    %101 = arith.cmpf oeq, %91, %100 : vector<16x16xf32>
    %cst_34 = arith.constant -1.000000e+00 : f32
    %102 = vector.broadcast %cst_34 : f32 to vector<16x16xf32>
    %103 = arith.select %101, %102, %89 : vector<16x16xi1>, vector<16x16xf32>
    %cst_35 = arith.constant dense<0xFF800000> : vector<16xf32>
    %104 = vector.multi_reduction <maximumf>, %103, %cst_35 [1] : vector<16x16xf32> to vector<16xf32>
    %105 = vector.shape_cast %104 : vector<16xf32> to vector<16x1xf32>
    %106 = vector.broadcast %105 : vector<16x1xf32> to vector<16x16xf32>
    %107 = arith.cmpf oeq, %103, %106 : vector<16x16xf32>
    %108 = arith.select %107, %91, %92 : vector<16x16xi1>, vector<16x16xf32>
    %cst_36 = arith.constant dense<0x7F800000> : vector<16xf32>
    %109 = vector.multi_reduction <minimumf>, %108, %cst_36 [1] : vector<16x16xf32> to vector<16xf32>
    %110 = vector.shape_cast %109 : vector<16xf32> to vector<16x1xf32>
    %111 = arith.fptosi %99 : vector<16x1xf32> to vector<16x1xi32>
    %112 = arith.fptosi %110 : vector<16x1xf32> to vector<16x1xi32>
    %c0_37 = arith.constant 0 : index
    %c0_38 = arith.constant 0 : index
    %c0_39 = arith.constant 0 : index
    %113 = vector.load %arg11[%c0_37, %c0_38, %c0_39] : memref<1x16x2xi32, #tpu.memory_space<vmem>>, vector<1x16x1xi32>
    %114 = vector.shape_cast %113 : vector<1x16x1xi32> to vector<16x1xi32>
    %115 = vector.shape_cast %111 : vector<16x1xi32> to vector<1x16x1xi32>
    tpu.vector_store %arg11[%c0_37, %c0_38, %c0_39], %115 {strides = array<i32>} : memref<1x16x2xi32, #tpu.memory_space<vmem>>, vector<1x16x1xi32>,
    %c0_40 = arith.constant 0 : index
    %c0_41 = arith.constant 0 : index
    %c1 = arith.constant 1 : index
    %116 = vector.load %arg11[%c0_40, %c0_41, %c1] : memref<1x16x2xi32, #tpu.memory_space<vmem>>, vector<1x16x1xi32>
    %117 = vector.shape_cast %116 : vector<1x16x1xi32> to vector<16x1xi32>
    %118 = vector.shape_cast %112 : vector<16x1xi32> to vector<1x16x1xi32>
    tpu.vector_store %arg11[%c0_40, %c0_41, %c1], %118 {strides = array<i32>} : memref<1x16x2xi32, #tpu.memory_space<vmem>>, vector<1x16x1xi32>,
    %c0_42 = arith.constant 0 : index
    %c0_43 = arith.constant 0 : index
    %c0_44 = arith.constant 0 : index
    %119 = vector.load %arg12[%c0_42, %c0_43, %c0_44] : memref<1x16x2xf32, #tpu.memory_space<vmem>>, vector<1x16x1xf32>
    %120 = vector.shape_cast %119 : vector<1x16x1xf32> to vector<16x1xf32>
    %121 = vector.shape_cast %94 : vector<16x1xf32> to vector<1x16x1xf32>
    tpu.vector_store %arg12[%c0_42, %c0_43, %c0_44], %121 {strides = array<i32>} : memref<1x16x2xf32, #tpu.memory_space<vmem>>, vector<1x16x1xf32>,
    %c0_45 = arith.constant 0 : index
    %c0_46 = arith.constant 0 : index
    %c1_47 = arith.constant 1 : index
    %122 = vector.load %arg12[%c0_45, %c0_46, %c1_47] : memref<1x16x2xf32, #tpu.memory_space<vmem>>, vector<1x16x1xf32>
    %123 = vector.shape_cast %122 : vector<1x16x1xf32> to vector<16x1xf32>
    %124 = vector.shape_cast %105 : vector<16x1xf32> to vector<1x16x1xf32>
    tpu.vector_store %arg12[%c0_45, %c0_46, %c1_47], %124 {strides = array<i32>} : memref<1x16x2xf32, #tpu.memory_space<vmem>>, vector<1x16x1xf32>,
    %c0_48 = arith.constant 0 : index
    %c0_49 = arith.constant 0 : index
    %125 = vector.load %arg14[%c0_48, %c0_49] : memref<16x32xf32, #tpu.memory_space<vmem>>, vector<16x32xf32>
    tpu.vector_store %arg14[%c0_48, %c0_49], %52 {strides = array<i32>} : memref<16x32xf32, #tpu.memory_space<vmem>>, vector<16x32xf32>,
    %c4_i32 = arith.constant 4 : i32
    %126 = arith.cmpi slt, %arg0, %c4_i32 : i32
    %127 = arith.extui %126 : i1 to i32
    %c0_i32_50 = arith.constant 0 : i32
    %128 = arith.cmpi ne, %127, %c0_i32_50 : i32
    scf.if %128 {
      %c0_51 = arith.constant 0 : index
      %c0_52 = arith.constant 0 : index
      %129 = vector.load %arg16[%c0_51, %c0_52] : memref<16x1xi32, #tpu.memory_space<vmem>>, vector<16x1xi32>
      %c3_i32 = arith.constant 3 : i32
      %130 = vector.broadcast %c3_i32 : i32 to vector<16x1xi32>
      %131 = arith.shrsi %129, %130 : vector<16x1xi32>
      %c1_i32 = arith.constant 1 : i32
      %132 = vector.broadcast %c1_i32 : i32 to vector<16x1xi32>
      %133 = arith.andi %131, %132 : vector<16x1xi32>
      %c0_i32_53 = arith.constant 0 : i32
      %134 = vector.broadcast %c0_i32_53 : i32 to vector<16x1xi32>
      %135 = arith.cmpi eq, %133, %134 : vector<16x1xi32>
      %136 = arith.select %135, %111, %112 : vector<16x1xi1>, vector<16x1xi32>
      %c0_54 = arith.constant 0 : index
      %c0_55 = arith.constant 0 : index
      %137 = vector.load %arg15[%c0_54, %c0_55] : memref<16x1xi32, #tpu.memory_space<vmem>>, vector<16x1xi32>
      tpu.vector_store %arg15[%c0_54, %c0_55], %136 {strides = array<i32>} : memref<16x1xi32, #tpu.memory_space<vmem>>, vector<16x1xi32>,
      %c0_56 = arith.constant 0 : index
      %c0_57 = arith.constant 0 : index
      %138 = vector.load %arg16[%c0_56, %c0_57] : memref<16x1xi32, #tpu.memory_space<vmem>>, vector<16x1xi32>
      %c1_i32_58 = arith.constant 1 : i32
      %139 = vector.broadcast %c1_i32_58 : i32 to vector<16x1xi32>
      %140 = arith.shli %138, %139 : vector<16x1xi32>
      %c15_i32 = arith.constant 15 : i32
      %141 = vector.broadcast %c15_i32 : i32 to vector<16x1xi32>
      %142 = arith.andi %140, %141 : vector<16x1xi32>
      %c0_59 = arith.constant 0 : index
      %c0_60 = arith.constant 0 : index
      %143 = vector.load %arg16[%c0_59, %c0_60] : memref<16x1xi32, #tpu.memory_space<vmem>>, vector<16x1xi32>
      tpu.vector_store %arg16[%c0_59, %c0_60], %142 {strides = array<i32>} : memref<16x1xi32, #tpu.memory_space<vmem>>, vector<16x1xi32>,
    } else {
    }
    return
  }
  func.func @transform_0(%arg0: i32) -> (i32, i32) {
    %c0_i32 = arith.constant 0 : i32
    %c0_i32_0 = arith.constant 0 : i32
    %c0_i32_1 = arith.constant 0 : i32
    return %c0_i32, %c0_i32_0 : i32, i32
  }
  func.func @transform_1(%arg0: i32) -> (i32, i32) {
    %c0_i32 = arith.constant 0 : i32
    %c0_i32_0 = arith.constant 0 : i32
    %c0_i32_1 = arith.constant 0 : i32
    return %c0_i32, %c0_i32_0 : i32, i32
  }
  func.func @transform_2(%arg0: i32) -> (i32, i32) {
    %c0_i32 = arith.constant 0 : i32
    %c0_i32_0 = arith.constant 0 : i32
    %c0_i32_1 = arith.constant 0 : i32
    return %c0_i32, %c0_i32_0 : i32, i32
  }
  func.func @transform_3(%arg0: i32) -> (i32, i32) {
    %c0_i32 = arith.constant 0 : i32
    %c0_i32_0 = arith.constant 0 : i32
    %c0_i32_1 = arith.constant 0 : i32
    return %c0_i32, %c0_i32_0 : i32, i32
  }
  func.func @transform_4(%arg0: i32) -> (i32, i32) {
    %c0_i32 = arith.constant 0 : i32
    %c0_i32_0 = arith.constant 0 : i32
    %c0_i32_1 = arith.constant 0 : i32
    return %c0_i32, %c0_i32_0 : i32, i32
  }
  func.func @transform_5(%arg0: i32) -> (i32, i32) {
    %c0_i32 = arith.constant 0 : i32
    %c0_i32_0 = arith.constant 0 : i32
    %c0_i32_1 = arith.constant 0 : i32
    return %c0_i32, %c0_i32_0 : i32, i32
  }
  func.func @transform_6(%arg0: i32) -> (i32, i32) {
    %c0_i32 = arith.constant 0 : i32
    %c0_i32_0 = arith.constant 0 : i32
    %c0_i32_1 = arith.constant 0 : i32
    return %c0_i32, %c0_i32_0 : i32, i32
  }
  func.func @transform_7(%arg0: i32) -> (i32, i32) {
    %c0_i32 = arith.constant 0 : i32
    %c0_i32_0 = arith.constant 0 : i32
    %c0_i32_1 = arith.constant 0 : i32
    return %c0_i32, %c0_i32_0 : i32, i32
  }
  func.func @transform_8(%arg0: i32) -> (i32, i32) {
    %c0_i32 = arith.constant 0 : i32
    %c0_i32_0 = arith.constant 0 : i32
    %c0_i32_1 = arith.constant 0 : i32
    return %c0_i32, %c0_i32_0 : i32, i32
  }
  func.func @transform_9(%arg0: i32) -> (i32, i32) {
    %c0_i32 = arith.constant 0 : i32
    %c0_i32_0 = arith.constant 0 : i32
    %c0_i32_1 = arith.constant 0 : i32
    return %c0_i32, %c0_i32_0 : i32, i32
  }
  func.func @transform_10(%arg0: i32) -> (i32, i32, i32) {
    %c0_i32 = arith.constant 0 : i32
    %c0_i32_0 = arith.constant 0 : i32
    %c0_i32_1 = arith.constant 0 : i32
    return %arg0, %c0_i32, %c0_i32_0 : i32, i32, i32
  }
  func.func @transform_11(%arg0: i32) -> (i32, i32, i32) {
    %c0_i32 = arith.constant 0 : i32
    %c0_i32_0 = arith.constant 0 : i32
    %c0_i32_1 = arith.constant 0 : i32
    return %arg0, %c0_i32, %c0_i32_0 : i32, i32, i32
  }
}

</mosaic_0001>

<llo_original>
// kernel: neg.1
$region0: #{neg.1}
  #allocation0 [shape = 's32[1]{0}', space=sflag, size = 0x4, scoped, tag = 'scoped memory for neg.1']
  %s0 = inlined_call_operand.vmem [shape: f32[32], index: 0, kind: input, shape index: {}]
  %s1 = inlined_call_operand.vmem [shape: f32[32], index: 1, kind: output, shape index: {}]
  %v2 = vld [vmem:[%s0] sm:$0x1]
  %3 = xla_tuple %v2
  %4 = xla_tuple %3
  %v5 = vxor.u32 %v2, 2147483648
  %6 = xla_tuple %v5
  %7 = vst [vmem:[%s1] sm:$0x1] %v5

// kernel: beam_search_decode.1
$region0: #{beam_search_decode.1}
  #allocation0 [shape = 'u32[]', space=smem, size = 0x4, offset = 0x4, fixed_abs, tag = 'smem constant byte address 0x4 - core index']
  #allocation1 [shape = 'u32[144,128]{1,0:T(1,128)}', space=vmem, size = 0x12000, scoped, tag = 'internal scratch']
  #allocation2 [shape = 'f32[8,32]{1,0:T(8,128)}', space=vmem, size = 0x1000, scoped, tag = 'scratch operand']
  #allocation3 [shape = 'f32[16,32]{1,0:T(8,128)}', space=vmem, size = 0x2000, scoped, tag = 'scratch operand']
  #allocation4 [shape = 's32[16,1]{1,0:T(8,128)}', space=vmem, size = 0x2000, scoped, tag = 'scratch operand']
  #allocation5 [shape = 's32[16,1]{1,0:T(8,128)}', space=vmem, size = 0x2000, scoped, tag = 'scratch operand']
  %s0 = inlined_call_operand.vmem [shape: s32[8,1], index: 0, kind: input, shape index: {}]
  %s1 = inlined_call_operand.vmem [shape: f32[16,96], index: 1, kind: input, shape index: {}]
  %s2 = inlined_call_operand.vmem [shape: f32[32,96], index: 2, kind: input, shape index: {}]
  %s3 = inlined_call_operand.vmem [shape: f32[4,32], index: 3, kind: input, shape index: {}]
  %s4 = inlined_call_operand.vmem [shape: f32[16,96], index: 4, kind: input, shape index: {}]
  %s5 = inlined_call_operand.vmem [shape: f32[32,96], index: 5, kind: input, shape index: {}]
  %s6 = inlined_call_operand.vmem [shape: f32[5,32], index: 6, kind: input, shape index: {}]
  %s7 = inlined_call_operand.vmem [shape: f32[64,32], index: 7, kind: input, shape index: {}]
  %s8 = inlined_call_operand.vmem [shape: f32[32,16], index: 8, kind: input, shape index: {}]
  %s9 = inlined_call_operand.vmem [shape: f32[1,16], index: 9, kind: input, shape index: {}]
  %s10 = inlined_call_operand.vmem [shape: s32[5,16,2], index: 10, kind: output, shape index: {0}]
  %s11 = inlined_call_operand.vmem [shape: f32[5,16,2], index: 11, kind: output, shape index: {1}]
  %12 = xla_tuple %s10, %s11
  %s13 = sld [smem:[#allocation0]]
  $region89: #{beam_search_decode.1} parent=0
    _
  %s15 = ssub.s32 1, %s13
  %s16 = scalar_select 0, %s15, %s13
  loop: start=0, step=1, limit=7
  $region2: #{beam_search_decode.1} parent=0 // loop_pre_header
    _
  $region3: #{beam_search_decode.1} parent=0 // loop_header
    %s18 = sphi 0, %s22
    %p19 = scmp.ge.s32.totalorder %s18, 7
    %s26 = sphi 0, %s26
    %s28 = sphi 0, %s26
    %s29 = sphi 0, %s28
    %s43 = sphi 0, %s29
    %s47 = sphi 0, %s47
    %s49 = sphi 0, %s47
    %s50 = sphi 0, %s49
    %s64 = sphi 0, %s50
    %s68 = sphi 0, %s68
    %s70 = sphi 0, %s68
    %s71 = sphi 0, %s70
    %s85 = sphi 0, %s71
    %s89 = sphi 0, %s89
    %s91 = sphi 0, %s89
    %s92 = sphi 0, %s91
    %s106 = sphi 0, %s92
    %s110 = sphi 0, %s110
    %s112 = sphi 0, %s110
    %s113 = sphi 0, %s112
    %s127 = sphi 0, %s113
    %s131 = sphi 0, %s131
    %s133 = sphi 0, %s131
    %s134 = sphi 0, %s133
    %s148 = sphi 0, %s134
    %s152 = sphi 0, %s152
    %s154 = sphi 0, %s152
    %s155 = sphi 0, %s154
    %s169 = sphi 0, %s155
    %s173 = sphi 0, %s173
    %s175 = sphi 0, %s173
    %s176 = sphi 0, %s175
    %s190 = sphi 0, %s176
    %s194 = sphi 0, %s194
    %s196 = sphi 0, %s194
    %s197 = sphi 0, %s196
    %s211 = sphi 0, %s197
    %s215 = sphi 0, %s215
    %s217 = sphi 0, %s215
    %s218 = sphi 0, %s217
    %s232 = sphi 0, %s218
    %s238 = sphi 0, %s240
    %s241 = sphi 0, %s238
    %s242 = sphi 0, %s241
    %s258 = sphi 0, %s242
    %s264 = sphi 0, %s266
    %s267 = sphi 0, %s264
    %s268 = sphi 0, %s267
    %s284 = sphi 0, %s268
  $region4: #{beam_search_decode.1} parent=0 // loop_header_branch
    %21 = sbr.rel (%p19) target = $region8
  $region5: #{beam_search_decode.1} parent=0 // loop_body
    %s23 = ssub.s32 %s18, 1
    %s24 = ssub.s32 %s18, 2
    %s25 = sadd.s32 %s18, 1
    %s27 = sadd.s32 %s26, 1
    %p30 = scmp.eq.s32.totalorder %s18, 4
    %p31 = scmp.ne.s32.totalorder %s26, %s28
    %p32 = scmp.eq.s32.totalorder %s18, 0
    %p33 = por %p31, %p32
    %p34 = scmp.ne.s32.totalorder %s26, %s28
    %p35 = scmp.eq.s32.totalorder %s23, 4
    %p36 = por %p34, %p35
    %p37 = scmp.ne.s32.totalorder %s28, %s29
    %p38 = scmp.eq.s32.totalorder %s23, 0
    %p39 = por %p37, %p38
    %p40 = scmp.ne.s32.totalorder %s28, %s29
    %p41 = scmp.eq.s32.totalorder %s24, 4
    %p42 = por %p40, %p41
    %p44 = scmp.ne.s32.totalorder %s29, %s43
    %p45 = scmp.eq.s32.totalorder %s24, 0
    %p46 = por %p44, %p45
    %s48 = sadd.s32 %s47, 1
    %p51 = scmp.eq.s32.totalorder %s18, 4
    %p52 = scmp.ne.s32.totalorder %s47, %s49
    %p53 = scmp.eq.s32.totalorder %s18, 0
    %p54 = por %p52, %p53
    %p55 = scmp.ne.s32.totalorder %s47, %s49
    %p56 = scmp.eq.s32.totalorder %s23, 4
    %p57 = por %p55, %p56
    %p58 = scmp.ne.s32.totalorder %s49, %s50
    %p59 = scmp.eq.s32.totalorder %s23, 0
    %p60 = por %p58, %p59
    %p61 = scmp.ne.s32.totalorder %s49, %s50
    %p62 = scmp.eq.s32.totalorder %s24, 4
    %p63 = por %p61, %p62
    %p65 = scmp.ne.s32.totalorder %s50, %s64
    %p66 = scmp.eq.s32.totalorder %s24, 0
    %p67 = por %p65, %p66
    %s69 = sadd.s32 %s68, 1
    %p72 = scmp.eq.s32.totalorder %s18, 4
    %p73 = scmp.ne.s32.totalorder %s68, %s70
    %p74 = scmp.eq.s32.totalorder %s18, 0
    %p75 = por %p73, %p74
    %p76 = scmp.ne.s32.totalorder %s68, %s70
    %p77 = scmp.eq.s32.totalorder %s23, 4
    %p78 = por %p76, %p77
    %p79 = scmp.ne.s32.totalorder %s70, %s71
    %p80 = scmp.eq.s32.totalorder %s23, 0
    %p81 = por %p79, %p80
    %p82 = scmp.ne.s32.totalorder %s70, %s71
    %p83 = scmp.eq.s32.totalorder %s24, 4
    %p84 = por %p82, %p83
    %p86 = scmp.ne.s32.totalorder %s71, %s85
    %p87 = scmp.eq.s32.totalorder %s24, 0
    %p88 = por %p86, %p87
    %s90 = sadd.s32 %s89, 1
    %p93 = scmp.eq.s32.totalorder %s18, 4
    %p94 = scmp.ne.s32.totalorder %s89, %s91
    %p95 = scmp.eq.s32.totalorder %s18, 0
    %p96 = por %p94, %p95
    %p97 = scmp.ne.s32.totalorder %s89, %s91
    %p98 = scmp.eq.s32.totalorder %s23, 4
    %p99 = por %p97, %p98
    %p100 = scmp.ne.s32.totalorder %s91, %s92
    %p101 = scmp.eq.s32.totalorder %s23, 0
    %p102 = por %p100, %p101
    %p103 = scmp.ne.s32.totalorder %s91, %s92
    %p104 = scmp.eq.s32.totalorder %s24, 4
    %p105 = por %p103, %p104
    %p107 = scmp.ne.s32.totalorder %s92, %s106
    %p108 = scmp.eq.s32.totalorder %s24, 0
    %p109 = por %p107, %p108
    %s111 = sadd.s32 %s110, 1
    %p114 = scmp.eq.s32.totalorder %s18, 4
    %p115 = scmp.ne.s32.totalorder %s110, %s112
    %p116 = scmp.eq.s32.totalorder %s18, 0
    %p117 = por %p115, %p116
    %p118 = scmp.ne.s32.totalorder %s110, %s112
    %p119 = scmp.eq.s32.totalorder %s23, 4
    %p120 = por %p118, %p119
    %p121 = scmp.ne.s32.totalorder %s112, %s113
    %p122 = scmp.eq.s32.totalorder %s23, 0
    %p123 = por %p121, %p122
    %p124 = scmp.ne.s32.totalorder %s112, %s113
    %p125 = scmp.eq.s32.totalorder %s24, 4
    %p126 = por %p124, %p125
    %p128 = scmp.ne.s32.totalorder %s113, %s127
    %p129 = scmp.eq.s32.totalorder %s24, 0
    %p130 = por %p128, %p129
    %s132 = sadd.s32 %s131, 1
    %p135 = scmp.eq.s32.totalorder %s18, 4
    %p136 = scmp.ne.s32.totalorder %s131, %s133
    %p137 = scmp.eq.s32.totalorder %s18, 0
    %p138 = por %p136, %p137
    %p139 = scmp.ne.s32.totalorder %s131, %s133
    %p140 = scmp.eq.s32.totalorder %s23, 4
    %p141 = por %p139, %p140
    %p142 = scmp.ne.s32.totalorder %s133, %s134
    %p143 = scmp.eq.s32.totalorder %s23, 0
    %p144 = por %p142, %p143
    %p145 = scmp.ne.s32.totalorder %s133, %s134
    %p146 = scmp.eq.s32.totalorder %s24, 4
    %p147 = por %p145, %p146
    %p149 = scmp.ne.s32.totalorder %s134, %s148
    %p150 = scmp.eq.s32.totalorder %s24, 0
    %p151 = por %p149, %p150
    %s153 = sadd.s32 %s152, 1
    %p156 = scmp.eq.s32.totalorder %s18, 4
    %p157 = scmp.ne.s32.totalorder %s152, %s154
    %p158 = scmp.eq.s32.totalorder %s18, 0
    %p159 = por %p157, %p158
    %p160 = scmp.ne.s32.totalorder %s152, %s154
    %p161 = scmp.eq.s32.totalorder %s23, 4
    %p162 = por %p160, %p161
    %p163 = scmp.ne.s32.totalorder %s154, %s155
    %p164 = scmp.eq.s32.totalorder %s23, 0
    %p165 = por %p163, %p164
    %p166 = scmp.ne.s32.totalorder %s154, %s155
    %p167 = scmp.eq.s32.totalorder %s24, 4
    %p168 = por %p166, %p167
    %p170 = scmp.ne.s32.totalorder %s155, %s169
    %p171 = scmp.eq.s32.totalorder %s24, 0
    %p172 = por %p170, %p171
    %s174 = sadd.s32 %s173, 1
    %p177 = scmp.eq.s32.totalorder %s18, 4
    %p178 = scmp.ne.s32.totalorder %s173, %s175
    %p179 = scmp.eq.s32.totalorder %s18, 0
    %p180 = por %p178, %p179
    %p181 = scmp.ne.s32.totalorder %s173, %s175
    %p182 = scmp.eq.s32.totalorder %s23, 4
    %p183 = por %p181, %p182
    %p184 = scmp.ne.s32.totalorder %s175, %s176
    %p185 = scmp.eq.s32.totalorder %s23, 0
    %p186 = por %p184, %p185
    %p187 = scmp.ne.s32.totalorder %s175, %s176
    %p188 = scmp.eq.s32.totalorder %s24, 4
    %p189 = por %p187, %p188
    %p191 = scmp.ne.s32.totalorder %s176, %s190
    %p192 = scmp.eq.s32.totalorder %s24, 0
    %p193 = por %p191, %p192
    %s195 = sadd.s32 %s194, 1
    %p198 = scmp.eq.s32.totalorder %s18, 4
    %p199 = scmp.ne.s32.totalorder %s194, %s196
    %p200 = scmp.eq.s32.totalorder %s18, 0
    %p201 = por %p199, %p200
    %p202 = scmp.ne.s32.totalorder %s194, %s196
    %p203 = scmp.eq.s32.totalorder %s23, 4
    %p204 = por %p202, %p203
    %p205 = scmp.ne.s32.totalorder %s196, %s197
    %p206 = scmp.eq.s32.totalorder %s23, 0
    %p207 = por %p205, %p206
    %p208 = scmp.ne.s32.totalorder %s196, %s197
    %p209 = scmp.eq.s32.totalorder %s24, 4
    %p210 = por %p208, %p209
    %p212 = scmp.ne.s32.totalorder %s197, %s211
    %p213 = scmp.eq.s32.totalorder %s24, 0
    %p214 = por %p212, %p213
    %s216 = sadd.s32 %s215, 1
    %p219 = scmp.eq.s32.totalorder %s18, 4
    %p220 = scmp.ne.s32.totalorder %s215, %s217
    %p221 = scmp.eq.s32.totalorder %s18, 0
    %p222 = por %p220, %p221
    %p223 = scmp.ne.s32.totalorder %s215, %s217
    %p224 = scmp.eq.s32.totalorder %s23, 4
    %p225 = por %p223, %p224
    %p226 = scmp.ne.s32.totalorder %s217, %s218
    %p227 = scmp.eq.s32.totalorder %s23, 0
    %p228 = por %p226, %p227
    %p229 = scmp.ne.s32.totalorder %s217, %s218
    %p230 = scmp.eq.s32.totalorder %s24, 4
    %p231 = por %p229, %p230
    %p233 = scmp.ne.s32.totalorder %s218, %s232
    %p234 = scmp.eq.s32.totalorder %s24, 0
    %p235 = por %p233, %p234
    %s236 = ssub.s32 %s18, %s25
    %p237 = scmp.eq.s32.totalorder %s236, 0
    %s239 = sadd.s32 %s238, 1
    %s240 = scalar_select %p237, %s238, %s239
    %p243 = pneg %p237
    %p244 = scmp.eq.s32.totalorder %s18, 4
    %p245 = por %p243, %p244
    %p246 = scmp.ne.s32.totalorder %s238, %s241
    %p247 = scmp.eq.s32.totalorder %s18, 0
    %p248 = por %p246, %p247
    %p249 = scmp.ne.s32.totalorder %s238, %s241
    %p250 = scmp.eq.s32.totalorder %s23, 4
    %p251 = por %p249, %p250
    %p252 = scmp.ne.s32.totalorder %s241, %s242
    %p253 = scmp.eq.s32.totalorder %s23, 0
    %p254 = por %p252, %p253
    %p255 = scmp.ne.s32.totalorder %s241, %s242
    %p256 = scmp.eq.s32.totalorder %s24, 4
    %p257 = por %p255, %p256
    %p259 = scmp.ne.s32.totalorder %s242, %s258
    %p260 = scmp.eq.s32.totalorder %s24, 0
    %p261 = por %p259, %p260
    %s262 = ssub.s32 %s18, %s25
    %p263 = scmp.eq.s32.totalorder %s262, 0
    %s265 = sadd.s32 %s264, 1
    %s266 = scalar_select %p263, %s264, %s265
    %p269 = pneg %p263
    %p270 = scmp.eq.s32.totalorder %s18, 4
    %p271 = por %p269, %p270
    %p272 = scmp.ne.s32.totalorder %s264, %s267
    %p273 = scmp.eq.s32.totalorder %s18, 0
    %p274 = por %p272, %p273
    %p275 = scmp.ne.s32.totalorder %s264, %s267
    %p276 = scmp.eq.s32.totalorder %s23, 4
    %p277 = por %p275, %p276
    %p278 = scmp.ne.s32.totalorder %s267, %s268
    %p279 = scmp.eq.s32.totalorder %s23, 0
    %p280 = por %p278, %p279
    %p281 = scmp.ne.s32.totalorder %s267, %s268
    %p282 = scmp.eq.s32.totalorder %s24, 4
    %p283 = por %p281, %p282
    %p285 = scmp.ne.s32.totalorder %s268, %s284
    %p286 = scmp.eq.s32.totalorder %s24, 0
    %p287 = por %p285, %p286
    %p288 = scmp.le.s32.totalorder 1, %s18
    %p289 = scmp.lt.s32.totalorder %s18, 6
    %p290 = pnand %p288, %p289
    %p291 = pneg %p290
    // Predicated region
    $region9: #{beam_search_decode.1} parent=5 // pred_check
      _
    $region10: #{beam_search_decode.1} parent=5 // pred_check_branch
      %293 = sbr.rel (%p290) target = $region12
    $region11: #{beam_search_decode.1} parent=5 // pred_region
      %s294 = ssub.s32 %s18, 1
      // Predicated region
      $region13: #{beam_search_decode.1} parent=11 // pred_check
        %p295 = pneg %p39
      $region14: #{beam_search_decode.1} parent=11 // pred_check_branch
        %297 = sbr.rel (%p295) target = $region16
      $region15: #{beam_search_decode.1} parent=11 // pred_region
        _
      $region16: #{beam_search_decode.1} parent=11 // pred_fallthru
        _
      // Predicated region
      $region17: #{beam_search_decode.1} parent=11 // pred_check
        %p298 = pneg %p60
      $region18: #{beam_search_decode.1} parent=11 // pred_check_branch
        %300 = sbr.rel (%p298) target = $region20
      $region19: #{beam_search_decode.1} parent=11 // pred_region
        _
      $region20: #{beam_search_decode.1} parent=11 // pred_fallthru
        _
      // Predicated region
      $region21: #{beam_search_decode.1} parent=11 // pred_check
        %p301 = pneg %p81
      $region22: #{beam_search_decode.1} parent=11 // pred_check_branch
        %303 = sbr.rel (%p301) target = $region24
      $region23: #{beam_search_decode.1} parent=11 // pred_region
        _
      $region24: #{beam_search_decode.1} parent=11 // pred_fallthru
        _
      // Predicated region
      $region25: #{beam_search_decode.1} parent=11 // pred_check
        %p304 = pneg %p102
      $region26: #{beam_search_decode.1} parent=11 // pred_check_branch
        %306 = sbr.rel (%p304) target = $region28
      $region27: #{beam_search_decode.1} parent=11 // pred_region
        _
      $region28: #{beam_search_decode.1} parent=11 // pred_fallthru
        _
      // Predicated region
      $region29: #{beam_search_decode.1} parent=11 // pred_check
        %p307 = pneg %p123
      $region30: #{beam_search_decode.1} parent=11 // pred_check_branch
        %309 = sbr.rel (%p307) target = $region32
      $region31: #{beam_search_decode.1} parent=11 // pred_region
        _
      $region32: #{beam_search_decode.1} parent=11 // pred_fallthru
        _
      // Predicated region
      $region33: #{beam_search_decode.1} parent=11 // pred_check
        %p310 = pneg %p144
      $region34: #{beam_search_decode.1} parent=11 // pred_check_branch
        %312 = sbr.rel (%p310) target = $region36
      $region35: #{beam_search_decode.1} parent=11 // pred_region
        _
      $region36: #{beam_search_decode.1} parent=11 // pred_fallthru
        _
      // Predicated region
      $region37: #{beam_search_decode.1} parent=11 // pred_check
        %p313 = pneg %p165
      $region38: #{beam_search_decode.1} parent=11 // pred_check_branch
        %315 = sbr.rel (%p313) target = $region40
      $region39: #{beam_search_decode.1} parent=11 // pred_region
        _
      $region40: #{beam_search_decode.1} parent=11 // pred_fallthru
        _
      // Predicated region
      $region41: #{beam_search_decode.1} parent=11 // pred_check
        %p316 = pneg %p186
      $region42: #{beam_search_decode.1} parent=11 // pred_check_branch
        %318 = sbr.rel (%p316) target = $region44
      $region43: #{beam_search_decode.1} parent=11 // pred_region
        _
      $region44: #{beam_search_decode.1} parent=11 // pred_fallthru
        _
      // Predicated region
      $region45: #{beam_search_decode.1} parent=11 // pred_check
        %p319 = pneg %p207
      $region46: #{beam_search_decode.1} parent=11 // pred_check_branch
        %321 = sbr.rel (%p319) target = $region48
      $region47: #{beam_search_decode.1} parent=11 // pred_region
        _
      $region48: #{beam_search_decode.1} parent=11 // pred_fallthru
        _
      // Predicated region
      $region49: #{beam_search_decode.1} parent=11 // pred_check
        %p322 = pneg %p228
      $region50: #{beam_search_decode.1} parent=11 // pred_check_branch
        %324 = sbr.rel (%p322) target = $region52
      $region51: #{beam_search_decode.1} parent=11 // pred_region
        _
      $region52: #{beam_search_decode.1} parent=11 // pred_fallthru
        _
    $region12: #{beam_search_decode.1} parent=5 // pred_fallthru
      _
    %p325 = scmp.lt.s32.totalorder %s18, 5
    // Predicated region
    $region53: #{beam_search_decode.1} parent=5 // pred_check
      %p326 = pneg %p325
    $region54: #{beam_search_decode.1} parent=5 // pred_check_branch
      %328 = sbr.rel (%p326) target = $region56
    $region55: #{beam_search_decode.1} parent=5 // pred_region
      _
    $region56: #{beam_search_decode.1} parent=5 // pred_fallthru
      _
    %p329 = scmp.le.s32.totalorder 1, %s18
    %p330 = scmp.lt.s32.totalorder %s18, 6
    %p331 = pnand %p329, %p330
    %p332 = pneg %p331
    // Predicated region
    $region57: #{beam_search_decode.1} parent=5 // pred_check
      _
    $region58: #{beam_search_decode.1} parent=5 // pred_check_branch
      %334 = sbr.rel (%p331) target = $region60
    $region59: #{beam_search_decode.1} parent=5 // pred_region
      %s335 = ssub.s32 %s18, 1
      %p336 = pneg %p39
      %p337 = pneg %p36
      %p338 = pneg %p60
      %p339 = pneg %p57
      %p340 = pneg %p81
      %p341 = pneg %p78
      %p342 = pneg %p102
      %p343 = pneg %p99
      %p344 = pneg %p123
      %p345 = pneg %p120
      %p346 = pneg %p144
      %p347 = pneg %p141
      %p348 = pneg %p165
      %p349 = pneg %p162
      %p350 = pneg %p186
      %p351 = pneg %p183
      %p352 = pneg %p207
      %p353 = pneg %p204
      %p354 = pneg %p228
      %p355 = pneg %p225
      %p356 = pneg %p254
      %p357 = pneg %p251
      %p358 = scmp.lt.s32.totalorder %s23, 4
      %s359 = scalar_select %p358, %s23, 4
      %s360 = smul.addr %s359, 2
      %s361 = smul.addr %s360, 8
      %s362 = scalar_lea.vmem %s10, %s361
      %p363 = pneg %p280
      %p364 = pneg %p277
      %p365 = scmp.lt.s32.totalorder %s23, 4
      %s366 = scalar_select %p365, %s23, 4
      %s367 = smul.addr %s366, 2
      %s368 = smul.addr %s367, 8
      %s369 = scalar_lea.vmem %s11, %s368
      %p370 = scmp.lt.s32.totalorder %s23, 4
      %s371 = scalar_select %p370, %s23, 4
      %s372 = smul.addr %s371, 2
      %s373 = smul.addr %s372, 8
      %s374 = scalar_lea.vmem %s10, %s373
      %p375 = scmp.lt.s32.totalorder %s23, 4
      %s376 = scalar_select %p375, %s23, 4
      %s377 = smul.addr %s376, 2
      %s378 = smul.addr %s377, 8
      %s379 = scalar_lea.vmem %s11, %s378
      %p380 = scmp.eq.s32.totalorder %s23, 0
      // Predicated region
      $region61: #{beam_search_decode.1} parent=59 // pred_check
        %p381 = pneg %p380
      $region62: #{beam_search_decode.1} parent=59 // pred_check_branch
        %383 = sbr.rel (%p381) target = $region64
      $region63: #{beam_search_decode.1} parent=59 // pred_region
        %v384 = vld [vmem:[%s1] sm:$0xff]
        %v385 = vld [vmem:[%s1 + $0x8] sm:$0xff]
        %v386 = vld [vmem:[%s2] sm:$0xff]
        %v387 = vld [vmem:[%s2 + $0x8] sm:$0xff]
        %v388 = vld [vmem:[%s2 + $0x10] sm:$0xff]
        %v389 = vld [vmem:[%s2 + $0x18] sm:$0xff]
        %v390 = vld [vmem:[%s3] sm:$0xf]
        %v391 = vld [vmem:[%s0] sm:$0xff]
        %v392 = vlaneseq
        %v393 = vand.u32 %v392, 127
        %394 = vset.pattern.permute.xlu0 0
        %395 = vperm.xlu0 %394, %v391
        %v396 = vpop.permute.xlu0 %395
        %vm397 = vcmp.eq.s32.totalorder %v396, %v393
        %v398 = vsel %vm397, 1, 0
        %v399 = vcvt.s32.f32 %v398
        %vm400 = vcmask 130048
        %v402 = vsel %vm400, %v399, 0
        %404 = vmatprep.subr.mxu0 0.0
        %405 = vmatpush1.msra.mxu0 %v384
        %406 = vmatprep.subr.mxu0 0.0
        %407 = vmatpush1.msra.mxu0 %v385
        %408 = vmatprep.subr.mxu0 0.0
        %409 = vmatpush1.msra.mxu0 0.0
        %410 = vmatprep.subr.mxu0 0.0
        %411 = vmatpush1.msra.mxu0 0.0
        %412 = vmatprep.subr.mxu0 0.0
        %413 = vmatpush1.msra.mxu0 0.0
        %414 = vmatprep.subr.mxu0 0.0
        %415 = vmatpush1.msra.mxu0 0.0
        %416 = vmatprep.subr.mxu0 0.0
        %417 = vmatpush1.msra.mxu0 0.0
        %418 = vmatprep.subr.mxu0 0.0
        %419 = vmatpush1.msra.mxu0 0.0
        %420 = vmatprep.subr.mxu0 0.0
        %421 = vmatpush1.msra.mxu0 0.0
        %422 = vmatprep.subr.mxu0 0.0
        %423 = vmatpush1.msra.mxu0 0.0
        %424 = vmatprep.subr.mxu0 0.0
        %425 = vmatpush1.msra.mxu0 0.0
        %426 = vmatprep.subr.mxu0 0.0
        %427 = vmatpush1.msra.mxu0 0.0
        %428 = vmatprep.subr.mxu0 0.0
        %429 = vmatpush1.msra.mxu0 0.0
        %430 = vmatprep.subr.mxu0 0.0
        %431 = vmatpush1.msra.mxu0 0.0
        %432 = vmatprep.subr.mxu0 0.0
        %433 = vmatpush1.msra.mxu0 0.0
        %434 = vmatprep.subr.mxu0 0.0
        %435 = vmatpush1.msra.mxu0 0.0
        %436 = vmatprep.subr.mxu0 0.0
        %437 = vmatpush1.msra.mxu0 0.0
        %438 = vmatprep.subr.mxu0 0.0
        %439 = vmatpush1.msra.mxu0 0.0
        %440 = vmatprep.subr.mxu0 0.0
        %441 = vmatpush1.msra.mxu0 0.0
        %442 = vmatprep.subr.mxu0 0.0
        %443 = vmatpush1.msra.mxu0 0.0
        %444 = vmatprep.subr.mxu0 0.0
        %445 = vmatpush1.msra.mxu0 0.0
        %446 = vmatprep.subr.mxu0 0.0
        %447 = vmatpush1.msra.mxu0 0.0
        %448 = vmatprep.subr.mxu0 0.0
        %449 = vmatpush1.msra.mxu0 0.0
        %450 = vmatprep.subr.mxu0 0.0
        %451 = vmatpush1.msra.mxu0 0.0
        %452 = vmatprep.subr.mxu0 0.0
        %453 = vmatpush1.msra.mxu0 0.0
        %454 = vmatprep.subr.mxu0 0.0
        %455 = vmatpush1.msra.mxu0 0.0
        %456 = vmatprep.subr.mxu0 0.0
        %457 = vmatpush1.msra.mxu0 0.0
        %458 = vmatprep.subr.mxu0 0.0
        %459 = vmatpush1.msra.mxu0 0.0
        %460 = vmatprep.subr.mxu0 0.0
        %461 = vmatpush1.msra.mxu0 0.0
        %462 = vmatprep.subr.mxu0 0.0
        %463 = vmatpush1.msra.mxu0 0.0
        %464 = vmatprep.subr.mxu0 0.0
        %465 = vmatpush1.msra.mxu0 0.0
        %466 = vmatprep.subr.mxu0 0.0
        %467 = vmatpush1.msra.mxu0 0.0
        %468 = vmatprep.mubr.f32.mxu0 0.0
        %469 = vmatmul.mubr.f32.gmra.mrb[0].mxu0 %v402
        %v470 = vpop.f32.mrb[0].mxu0
        %v471 = vadd.f32 0.0, %v470
        %v472 = vpop.f32.mrb[0].mxu0
        %473 = vdwg.mxu0
        %v474 = vlaneseq
        %v475 = vshrl.u32 %v474, 7
        %vm476 = vcmask 261120
        %v478 = vsel %vm476, 0.0, 0
        %480 = vmatprep.subr.mxu0 0.0
        %481 = vmatpush1.msra.mxu0 %v386
        %482 = vmatprep.subr.mxu0 0.0
        %483 = vmatpush1.msra.mxu0 %v387
        %484 = vmatprep.subr.mxu0 0.0
        %485 = vmatpush1.msra.mxu0 %v388
        %486 = vmatprep.subr.mxu0 0.0
        %487 = vmatpush1.msra.mxu0 %v389
        %488 = vmatprep.subr.mxu0 0.0
        %489 = vmatpush1.msra.mxu0 0.0
        %490 = vmatprep.subr.mxu0 0.0
        %491 = vmatpush1.msra.mxu0 0.0
        %492 = vmatprep.subr.mxu0 0.0
        %493 = vmatpush1.msra.mxu0 0.0
        %494 = vmatprep.subr.mxu0 0.0
        %495 = vmatpush1.msra.mxu0 0.0
        %496 = vmatprep.subr.mxu0 0.0
        %497 = vmatpush1.msra.mxu0 0.0
        %498 = vmatprep.subr.mxu0 0.0
        %499 = vmatpush1.msra.mxu0 0.0
        %500 = vmatprep.subr.mxu0 0.0
        %501 = vmatpush1.msra.mxu0 0.0
        %502 = vmatprep.subr.mxu0 0.0
        %503 = vmatpush1.msra.mxu0 0.0
        %504 = vmatprep.subr.mxu0 0.0
        %505 = vmatpush1.msra.mxu0 0.0
        %506 = vmatprep.subr.mxu0 0.0
        %507 = vmatpush1.msra.mxu0 0.0
        %508 = vmatprep.subr.mxu0 0.0
        %509 = vmatpush1.msra.mxu0 0.0
        %510 = vmatprep.subr.mxu0 0.0
        %511 = vmatpush1.msra.mxu0 0.0
        %512 = vmatprep.subr.mxu0 0.0
        %513 = vmatpush1.msra.mxu0 0.0
        %514 = vmatprep.subr.mxu0 0.0
        %515 = vmatpush1.msra.mxu0 0.0
        %516 = vmatprep.subr.mxu0 0.0
        %517 = vmatpush1.msra.mxu0 0.0
        %518 = vmatprep.subr.mxu0 0.0
        %519 = vmatpush1.msra.mxu0 0.0
        %520 = vmatprep.subr.mxu0 0.0
        %521 = vmatpush1.msra.mxu0 0.0
        %522 = vmatprep.subr.mxu0 0.0
        %523 = vmatpush1.msra.mxu0 0.0
        %524 = vmatprep.subr.mxu0 0.0
        %525 = vmatpush1.msra.mxu0 0.0
        %526 = vmatprep.subr.mxu0 0.0
        %527 = vmatpush1.msra.mxu0 0.0
        %528 = vmatprep.subr.mxu0 0.0
        %529 = vmatpush1.msra.mxu0 0.0
        %530 = vmatprep.subr.mxu0 0.0
        %531 = vmatpush1.msra.mxu0 0.0
        %532 = vmatprep.subr.mxu0 0.0
        %533 = vmatpush1.msra.mxu0 0.0
        %534 = vmatprep.subr.mxu0 0.0
        %535 = vmatpush1.msra.mxu0 0.0
        %536 = vmatprep.subr.mxu0 0.0
        %537 = vmatpush1.msra.mxu0 0.0
        %538 = vmatprep.subr.mxu0 0.0
        %539 = vmatpush1.msra.mxu0 0.0
        %540 = vmatprep.subr.mxu0 0.0
        %541 = vmatpush1.msra.mxu0 0.0
        %542 = vmatprep.subr.mxu0 0.0
        %543 = vmatpush1.msra.mxu0 0.0
        %544 = vmatprep.mubr.f32.mxu0 0.0
        %545 = vmatmul.mubr.f32.gmra.mrb[0].mxu0 %v478
        %v546 = vpop.f32.mrb[0].mxu0
        %v547 = vadd.f32 0.0, %v546
        %v548 = vpop.f32.mrb[0].mxu0
        %549 = vdwg.mxu0
        %v550 = vadd.f32 %v471, %v547
        %v551 = vadd.f32 %v550, %v390
        %v552 = vxor.u32 %v551, 2147483648
        %v553 = vmul.f32 %v552, 1.442695
        %v554 = vpow.pop %v553
        %v555 = vadd.f32 %v554, 1.0
        %v556 = vrcp.pop %v555
        %v557 = vmul.f32 1.0, %v556
        %v559 = vrot.slane %v390, 1
        %560 = vrot.lane.b32.xlu0 %v559, 32
        %v561 = vpop.permute.xlu0 %560
        %v563 = vadd.f32 %v550, %v561
        %v564 = vxor.u32 %v563, 2147483648
        %v565 = vmul.f32 %v564, 1.442695
        %v566 = vpow.pop %v565
        %v567 = vadd.f32 %v566, 1.0
        %v568 = vrcp.pop %v567
        %v569 = vmul.f32 1.0, %v568
        %v570 = vrot.slane %v390, 2
        %571 = vrot.lane.b32.xlu0 %v570, 64
        %v572 = vpop.permute.xlu0 %571
        %v574 = vadd.f32 %v471, %v572
        %v575 = vrot.slane %v390, 3
        %576 = vrot.lane.b32.xlu0 %v575, 64
        %v577 = vpop.permute.xlu0 %576
        %v579 = vadd.f32 %v547, %v577
        %581 = vrot.lane.b32.xlu0 %v579, 64
        %v582 = vpop.permute.xlu0 %581
        %v584 = vmul.f32 %v557, %v582
        %586 = vrot.lane.b32.xlu0 %v584, 64
        %v587 = vpop.permute.xlu0 %586
        %v589 = vadd.f32 %v574, %v587
        %v590 = vtanh.pop %v589
        %v591 = vsub.f32 1.0, %v569
        %593 = vrot.lane.b32.xlu0 %v590, 96
        %v594 = vpop.permute.xlu0 %593
        %v596 = vmul.f32 %v591, %v594
        %v597 = vmul.f32 %v569, 0.0
        %v598 = vadd.f32 %v596, %v597
        %vm599 = vcmp.eq.s32.totalorder %v475, 0
        %v600 = vlaneseq
        %v601 = vshrl.u32 %v600, 7
        %v602 = vsub.s32 0, %v601
        %v603 = vrot.slane %v598, %v602
        %v604 = vsel %vm599, %v603, 0.0
        %606 = vrot.lane.b32.xlu0 %v598, 96
        %v607 = vpop.permute.xlu0 %606
        %v608 = vsel %vm476, %v607, 0
        %610 = vmatprep.subr.mxu0 0.0
        %611 = vmatpush1.msra.mxu0 %v386
        %612 = vmatprep.subr.mxu0 0.0
        %613 = vmatpush1.msra.mxu0 %v387
        %614 = vmatprep.subr.mxu0 0.0
        %615 = vmatpush1.msra.mxu0 %v388
        %616 = vmatprep.subr.mxu0 0.0
        %617 = vmatpush1.msra.mxu0 %v389
        %618 = vmatprep.subr.mxu0 0.0
        %619 = vmatpush1.msra.mxu0 0.0
        %620 = vmatprep.subr.mxu0 0.0
        %621 = vmatpush1.msra.mxu0 0.0
        %622 = vmatprep.subr.mxu0 0.0
        %623 = vmatpush1.msra.mxu0 0.0
        %624 = vmatprep.subr.mxu0 0.0
        %625 = vmatpush1.msra.mxu0 0.0
        %626 = vmatprep.subr.mxu0 0.0
        %627 = vmatpush1.msra.mxu0 0.0
        %628 = vmatprep.subr.mxu0 0.0
        %629 = vmatpush1.msra.mxu0 0.0
        %630 = vmatprep.subr.mxu0 0.0
        %631 = vmatpush1.msra.mxu0 0.0
        %632 = vmatprep.subr.mxu0 0.0
        %633 = vmatpush1.msra.mxu0 0.0
        %634 = vmatprep.subr.mxu0 0.0
        %635 = vmatpush1.msra.mxu0 0.0
        %636 = vmatprep.subr.mxu0 0.0
        %637 = vmatpush1.msra.mxu0 0.0
        %638 = vmatprep.subr.mxu0 0.0
        %639 = vmatpush1.msra.mxu0 0.0
        %640 = vmatprep.subr.mxu0 0.0
        %641 = vmatpush1.msra.mxu0 0.0
        %642 = vmatprep.subr.mxu0 0.0
        %643 = vmatpush1.msra.mxu0 0.0
        %644 = vmatprep.subr.mxu0 0.0
        %645 = vmatpush1.msra.mxu0 0.0
        %646 = vmatprep.subr.mxu0 0.0
        %647 = vmatpush1.msra.mxu0 0.0
        %648 = vmatprep.subr.mxu0 0.0
        %649 = vmatpush1.msra.mxu0 0.0
        %650 = vmatprep.subr.mxu0 0.0
        %651 = vmatpush1.msra.mxu0 0.0
        %652 = vmatprep.subr.mxu0 0.0
        %653 = vmatpush1.msra.mxu0 0.0
        %654 = vmatprep.subr.mxu0 0.0
        %655 = vmatpush1.msra.mxu0 0.0
        %656 = vmatprep.subr.mxu0 0.0
        %657 = vmatpush1.msra.mxu0 0.0
        %658 = vmatprep.subr.mxu0 0.0
        %659 = vmatpush1.msra.mxu0 0.0
        %660 = vmatprep.subr.mxu0 0.0
        %661 = vmatpush1.msra.mxu0 0.0
        %662 = vmatprep.subr.mxu0 0.0
        %663 = vmatpush1.msra.mxu0 0.0
        %664 = vmatprep.subr.mxu0 0.0
        %665 = vmatpush1.msra.mxu0 0.0
        %666 = vmatprep.subr.mxu0 0.0
        %667 = vmatpush1.msra.mxu0 0.0
        %668 = vmatprep.subr.mxu0 0.0
        %669 = vmatpush1.msra.mxu0 0.0
        %670 = vmatprep.subr.mxu0 0.0
        %671 = vmatpush1.msra.mxu0 0.0
        %672 = vmatprep.subr.mxu0 0.0
        %673 = vmatpush1.msra.mxu0 0.0
        %674 = vmatprep.mubr.f32.mxu0 0.0
        %675 = vmatmul.mubr.f32.gmra.mrb[0].mxu0 %v608
        %v676 = vpop.f32.mrb[0].mxu0
        %v677 = vadd.f32 0.0, %v676
        %v678 = vpop.f32.mrb[0].mxu0
        %679 = vdwg.mxu0
        %v681 = vrot.slane %v677, 7
        %v683 = vadd.f32 %v471, %v681
        %v684 = vrot.slane %v390, 7
        %v686 = vadd.f32 %v683, %v684
        %v687 = vxor.u32 %v686, 2147483648
        %v688 = vmul.f32 %v687, 1.442695
        %v689 = vpow.pop %v688
        %v690 = vadd.f32 %v689, 1.0
        %v691 = vrcp.pop %v690
        %v692 = vmul.f32 1.0, %v691
        %693 = vrot.lane.b32.xlu0 %v390, 32
        %v694 = vpop.permute.xlu0 %693
        %v696 = vadd.f32 %v683, %v694
        %v697 = vxor.u32 %v696, 2147483648
        %v698 = vmul.f32 %v697, 1.442695
        %v699 = vpow.pop %v698
        %v700 = vadd.f32 %v699, 1.0
        %v701 = vrcp.pop %v700
        %v702 = vmul.f32 1.0, %v701
        %703 = vrot.lane.b32.xlu0 %v559, 64
        %v704 = vpop.permute.xlu0 %703
        %v706 = vadd.f32 %v471, %v704
        %v707 = vadd.f32 %v677, %v577
        %v709 = vrot.slane %v707, 7
        %710 = vrot.lane.b32.xlu0 %v709, 64
        %v711 = vpop.permute.xlu0 %710
        %v713 = vmul.f32 %v692, %v711
        %715 = vrot.lane.b32.xlu0 %v713, 64
        %v716 = vpop.permute.xlu0 %715
        %v718 = vadd.f32 %v706, %v716
        %v719 = vtanh.pop %v718
        %v720 = vsub.f32 1.0, %v702
        %722 = vrot.lane.b32.xlu0 %v719, 96
        %v723 = vpop.permute.xlu0 %722
        %v725 = vmul.f32 %v720, %v723
        %v726 = vrot.slane %v598, 7
        %v728 = vmul.f32 %v702, %v726
        %v729 = vadd.f32 %v725, %v728
        %vm730 = vcmp.eq.s32.totalorder %v475, 1
        %v731 = vlaneseq
        %v732 = vshrl.u32 %v731, 7
        %v733 = vsub.s32 1, %v732
        %v734 = vrot.slane %v729, %v733
        %v735 = vsel %vm730, %v734, %v604
        %v737 = vrot.slane %v729, 1
        %738 = vrot.lane.b32.xlu0 %v737, 96
        %v739 = vpop.permute.xlu0 %738
        %v740 = vsel %vm476, %v739, 0
        %742 = vmatprep.subr.mxu0 0.0
        %743 = vmatpush1.msra.mxu0 %v386
        %744 = vmatprep.subr.mxu0 0.0
        %745 = vmatpush1.msra.mxu0 %v387
        %746 = vmatprep.subr.mxu0 0.0
        %747 = vmatpush1.msra.mxu0 %v388
        %748 = vmatprep.subr.mxu0 0.0
        %749 = vmatpush1.msra.mxu0 %v389
        %750 = vmatprep.subr.mxu0 0.0
        %751 = vmatpush1.msra.mxu0 0.0
        %752 = vmatprep.subr.mxu0 0.0
        %753 = vmatpush1.msra.mxu0 0.0
        %754 = vmatprep.subr.mxu0 0.0
        %755 = vmatpush1.msra.mxu0 0.0
        %756 = vmatprep.subr.mxu0 0.0
        %757 = vmatpush1.msra.mxu0 0.0
        %758 = vmatprep.subr.mxu0 0.0
        %759 = vmatpush1.msra.mxu0 0.0
        %760 = vmatprep.subr.mxu0 0.0
        %761 = vmatpush1.msra.mxu0 0.0
        %762 = vmatprep.subr.mxu0 0.0
        %763 = vmatpush1.msra.mxu0 0.0
        %764 = vmatprep.subr.mxu0 0.0
        %765 = vmatpush1.msra.mxu0 0.0
        %766 = vmatprep.subr.mxu0 0.0
        %767 = vmatpush1.msra.mxu0 0.0
        %768 = vmatprep.subr.mxu0 0.0
        %769 = vmatpush1.msra.mxu0 0.0
        %770 = vmatprep.subr.mxu0 0.0
        %771 = vmatpush1.msra.mxu0 0.0
        %772 = vmatprep.subr.mxu0 0.0
        %773 = vmatpush1.msra.mxu0 0.0
        %774 = vmatprep.subr.mxu0 0.0
        %775 = vmatpush1.msra.mxu0 0.0
        %776 = vmatprep.subr.mxu0 0.0
        %777 = vmatpush1.msra.mxu0 0.0
        %778 = vmatprep.subr.mxu0 0.0
        %779 = vmatpush1.msra.mxu0 0.0
        %780 = vmatprep.subr.mxu0 0.0
        %781 = vmatpush1.msra.mxu0 0.0
        %782 = vmatprep.subr.mxu0 0.0
        %783 = vmatpush1.msra.mxu0 0.0
        %784 = vmatprep.subr.mxu0 0.0
        %785 = vmatpush1.msra.mxu0 0.0
        %786 = vmatprep.subr.mxu0 0.0
        %787 = vmatpush1.msra.mxu0 0.0
        %788 = vmatprep.subr.mxu0 0.0
        %789 = vmatpush1.msra.mxu0 0.0
        %790 = vmatprep.subr.mxu0 0.0
        %791 = vmatpush1.msra.mxu0 0.0
        %792 = vmatprep.subr.mxu0 0.0
        %793 = vmatpush1.msra.mxu0 0.0
        %794 = vmatprep.subr.mxu0 0.0
        %795 = vmatpush1.msra.mxu0 0.0
        %796 = vmatprep.subr.mxu0 0.0
        %797 = vmatpush1.msra.mxu0 0.0
        %798 = vmatprep.subr.mxu0 0.0
        %799 = vmatpush1.msra.mxu0 0.0
        %800 = vmatprep.subr.mxu0 0.0
        %801 = vmatpush1.msra.mxu0 0.0
        %802 = vmatprep.subr.mxu0 0.0
        %803 = vmatpush1.msra.mxu0 0.0
        %804 = vmatprep.subr.mxu0 0.0
        %805 = vmatpush1.msra.mxu0 0.0
        %806 = vmatprep.mubr.f32.mxu0 0.0
        %807 = vmatmul.mubr.f32.gmra.mrb[0].mxu0 %v740
        %v808 = vpop.f32.mrb[0].mxu0
        %v809 = vadd.f32 0.0, %v808
        %v810 = vpop.f32.mrb[0].mxu0
        %811 = vdwg.mxu0
        %v813 = vrot.slane %v809, 6
        %v815 = vadd.f32 %v471, %v813
        %v816 = vrot.slane %v390, 6
        %v818 = vadd.f32 %v815, %v816
        %v819 = vxor.u32 %v818, 2147483648
        %v820 = vmul.f32 %v819, 1.442695
        %v821 = vpow.pop %v820
        %v822 = vadd.f32 %v821, 1.0
        %v823 = vrcp.pop %v822
        %v824 = vmul.f32 1.0, %v823
        %825 = vrot.lane.b32.xlu0 %v684, 32
        %v826 = vpop.permute.xlu0 %825
        %v828 = vadd.f32 %v815, %v826
        %v829 = vxor.u32 %v828, 2147483648
        %v830 = vmul.f32 %v829, 1.442695
        %v831 = vpow.pop %v830
        %v832 = vadd.f32 %v831, 1.0
        %v833 = vrcp.pop %v832
        %v834 = vmul.f32 1.0, %v833
        %835 = vrot.lane.b32.xlu0 %v390, 64
        %v836 = vpop.permute.xlu0 %835
        %v838 = vadd.f32 %v471, %v836
        %v839 = vadd.f32 %v809, %v577
        %v841 = vrot.slane %v839, 6
        %842 = vrot.lane.b32.xlu0 %v841, 64
        %v843 = vpop.permute.xlu0 %842
        %v845 = vmul.f32 %v824, %v843
        %847 = vrot.lane.b32.xlu0 %v845, 64
        %v848 = vpop.permute.xlu0 %847
        %v850 = vadd.f32 %v838, %v848
        %v851 = vtanh.pop %v850
        %v852 = vsub.f32 1.0, %v834
        %854 = vrot.lane.b32.xlu0 %v851, 96
        %v855 = vpop.permute.xlu0 %854
        %v857 = vmul.f32 %v852, %v855
        %v858 = vrot.slane %v729, 7
        %v860 = vmul.f32 %v834, %v858
        %v861 = vadd.f32 %v857, %v860
        %vm862 = vcmp.eq.s32.totalorder %v475, 2
        %v863 = vlaneseq
        %v864 = vshrl.u32 %v863, 7
        %v865 = vsub.s32 2, %v864
        %v866 = vrot.slane %v861, %v865
        %v867 = vsel %vm862, %v866, %v735
        %v869 = vrot.slane %v861, 2
        %870 = vrot.lane.b32.xlu0 %v869, 96
        %v871 = vpop.permute.xlu0 %870
        %v872 = vsel %vm476, %v871, 0
        %874 = vmatprep.subr.mxu0 0.0
        %875 = vmatpush1.msra.mxu0 %v386
        %876 = vmatprep.subr.mxu0 0.0
        %877 = vmatpush1.msra.mxu0 %v387
        %878 = vmatprep.subr.mxu0 0.0
        %879 = vmatpush1.msra.mxu0 %v388
        %880 = vmatprep.subr.mxu0 0.0
        %881 = vmatpush1.msra.mxu0 %v389
        %882 = vmatprep.subr.mxu0 0.0
        %883 = vmatpush1.msra.mxu0 0.0
        %884 = vmatprep.subr.mxu0 0.0
        %885 = vmatpush1.msra.mxu0 0.0
        %886 = vmatprep.subr.mxu0 0.0
        %887 = vmatpush1.msra.mxu0 0.0
        %888 = vmatprep.subr.mxu0 0.0
        %889 = vmatpush1.msra.mxu0 0.0
        %890 = vmatprep.subr.mxu0 0.0
        %891 = vmatpush1.msra.mxu0 0.0
        %892 = vmatprep.subr.mxu0 0.0
        %893 = vmatpush1.msra.mxu0 0.0
        %894 = vmatprep.subr.mxu0 0.0
        %895 = vmatpush1.msra.mxu0 0.0
        %896 = vmatprep.subr.mxu0 0.0
        %897 = vmatpush1.msra.mxu0 0.0
        %898 = vmatprep.subr.mxu0 0.0
        %899 = vmatpush1.msra.mxu0 0.0
        %900 = vmatprep.subr.mxu0 0.0
        %901 = vmatpush1.msra.mxu0 0.0
        %902 = vmatprep.subr.mxu0 0.0
        %903 = vmatpush1.msra.mxu0 0.0
        %904 = vmatprep.subr.mxu0 0.0
        %905 = vmatpush1.msra.mxu0 0.0
        %906 = vmatprep.subr.mxu0 0.0
        %907 = vmatpush1.msra.mxu0 0.0
        %908 = vmatprep.subr.mxu0 0.0
        %909 = vmatpush1.msra.mxu0 0.0
        %910 = vmatprep.subr.mxu0 0.0
        %911 = vmatpush1.msra.mxu0 0.0
        %912 = vmatprep.subr.mxu0 0.0
        %913 = vmatpush1.msra.mxu0 0.0
        %914 = vmatprep.subr.mxu0 0.0
        %915 = vmatpush1.msra.mxu0 0.0
        %916 = vmatprep.subr.mxu0 0.0
        %917 = vmatpush1.msra.mxu0 0.0
        %918 = vmatprep.subr.mxu0 0.0
        %919 = vmatpush1.msra.mxu0 0.0
        %920 = vmatprep.subr.mxu0 0.0
        %921 = vmatpush1.msra.mxu0 0.0
        %922 = vmatprep.subr.mxu0 0.0
        %923 = vmatpush1.msra.mxu0 0.0
        %924 = vmatprep.subr.mxu0 0.0
        %925 = vmatpush1.msra.mxu0 0.0
        %926 = vmatprep.subr.mxu0 0.0
        %927 = vmatpush1.msra.mxu0 0.0
        %928 = vmatprep.subr.mxu0 0.0
        %929 = vmatpush1.msra.mxu0 0.0
        %930 = vmatprep.subr.mxu0 0.0
        %931 = vmatpush1.msra.mxu0 0.0
        %932 = vmatprep.subr.mxu0 0.0
        %933 = vmatpush1.msra.mxu0 0.0
        %934 = vmatprep.subr.mxu0 0.0
        %935 = vmatpush1.msra.mxu0 0.0
        %936 = vmatprep.subr.mxu0 0.0
        %937 = vmatpush1.msra.mxu0 0.0
        %938 = vmatprep.mubr.f32.mxu0 0.0
        %939 = vmatmul.mubr.f32.gmra.mrb[0].mxu0 %v872
        %v940 = vpop.f32.mrb[0].mxu0
        %v941 = vadd.f32 0.0, %v940
        %v942 = vpop.f32.mrb[0].mxu0
        %943 = vdwg.mxu0
        %v945 = vrot.slane %v941, 5
        %v947 = vadd.f32 %v471, %v945
        %v948 = vrot.slane %v390, 5
        %v950 = vadd.f32 %v947, %v948
        %v951 = vxor.u32 %v950, 2147483648
        %v952 = vmul.f32 %v951, 1.442695
        %v953 = vpow.pop %v952
        %v954 = vadd.f32 %v953, 1.0
        %v955 = vrcp.pop %v954
        %v956 = vmul.f32 1.0, %v955
        %957 = vrot.lane.b32.xlu0 %v816, 32
        %v958 = vpop.permute.xlu0 %957
        %v960 = vadd.f32 %v947, %v958
        %v961 = vxor.u32 %v960, 2147483648
        %v962 = vmul.f32 %v961, 1.442695
        %v963 = vpow.pop %v962
        %v964 = vadd.f32 %v963, 1.0
        %v965 = vrcp.pop %v964
        %v966 = vmul.f32 1.0, %v965
        %967 = vrot.lane.b32.xlu0 %v684, 64
        %v968 = vpop.permute.xlu0 %967
        %v970 = vadd.f32 %v471, %v968
        %v971 = vadd.f32 %v941, %v577
        %v973 = vrot.slane %v971, 5
        %974 = vrot.lane.b32.xlu0 %v973, 64
        %v975 = vpop.permute.xlu0 %974
        %v977 = vmul.f32 %v956, %v975
        %979 = vrot.lane.b32.xlu0 %v977, 64
        %v980 = vpop.permute.xlu0 %979
        %v982 = vadd.f32 %v970, %v980
        %v983 = vtanh.pop %v982
        %v984 = vsub.f32 1.0, %v966
        %986 = vrot.lane.b32.xlu0 %v983, 96
        %v987 = vpop.permute.xlu0 %986
        %v989 = vmul.f32 %v984, %v987
        %v990 = vrot.slane %v861, 7
        %v992 = vmul.f32 %v966, %v990
        %v993 = vadd.f32 %v989, %v992
        %vm994 = vcmp.eq.s32.totalorder %v475, 3
        %v995 = vlaneseq
        %v996 = vshrl.u32 %v995, 7
        %v997 = vsub.s32 3, %v996
        %v998 = vrot.slane %v993, %v997
        %v999 = vsel %vm994, %v998, %v867
        %v1001 = vrot.slane %v993, 3
        %1002 = vrot.lane.b32.xlu0 %v1001, 96
        %v1003 = vpop.permute.xlu0 %1002
        %v1004 = vsel %vm476, %v1003, 0
        %1006 = vmatprep.subr.mxu0 0.0
        %1007 = vmatpush1.msra.mxu0 %v386
        %1008 = vmatprep.subr.mxu0 0.0
        %1009 = vmatpush1.msra.mxu0 %v387
        %1010 = vmatprep.subr.mxu0 0.0
        %1011 = vmatpush1.msra.mxu0 %v388
        %1012 = vmatprep.subr.mxu0 0.0
        %1013 = vmatpush1.msra.mxu0 %v389
        %1014 = vmatprep.subr.mxu0 0.0
        %1015 = vmatpush1.msra.mxu0 0.0
        %1016 = vmatprep.subr.mxu0 0.0
        %1017 = vmatpush1.msra.mxu0 0.0
        %1018 = vmatprep.subr.mxu0 0.0
        %1019 = vmatpush1.msra.mxu0 0.0
        %1020 = vmatprep.subr.mxu0 0.0
        %1021 = vmatpush1.msra.mxu0 0.0
        %1022 = vmatprep.subr.mxu0 0.0
        %1023 = vmatpush1.msra.mxu0 0.0
        %1024 = vmatprep.subr.mxu0 0.0
        %1025 = vmatpush1.msra.mxu0 0.0
        %1026 = vmatprep.subr.mxu0 0.0
        %1027 = vmatpush1.msra.mxu0 0.0
        %1028 = vmatprep.subr.mxu0 0.0
        %1029 = vmatpush1.msra.mxu0 0.0
        %1030 = vmatprep.subr.mxu0 0.0
        %1031 = vmatpush1.msra.mxu0 0.0
        %1032 = vmatprep.subr.mxu0 0.0
        %1033 = vmatpush1.msra.mxu0 0.0
        %1034 = vmatprep.subr.mxu0 0.0
        %1035 = vmatpush1.msra.mxu0 0.0
        %1036 = vmatprep.subr.mxu0 0.0
        %1037 = vmatpush1.msra.mxu0 0.0
        %1038 = vmatprep.subr.mxu0 0.0
        %1039 = vmatpush1.msra.mxu0 0.0
        %1040 = vmatprep.subr.mxu0 0.0
        %1041 = vmatpush1.msra.mxu0 0.0
        %1042 = vmatprep.subr.mxu0 0.0
        %1043 = vmatpush1.msra.mxu0 0.0
        %1044 = vmatprep.subr.mxu0 0.0
        %1045 = vmatpush1.msra.mxu0 0.0
        %1046 = vmatprep.subr.mxu0 0.0
        %1047 = vmatpush1.msra.mxu0 0.0
        %1048 = vmatprep.subr.mxu0 0.0
        %1049 = vmatpush1.msra.mxu0 0.0
        %1050 = vmatprep.subr.mxu0 0.0
        %1051 = vmatpush1.msra.mxu0 0.0
        %1052 = vmatprep.subr.mxu0 0.0
        %1053 = vmatpush1.msra.mxu0 0.0
        %1054 = vmatprep.subr.mxu0 0.0
        %1055 = vmatpush1.msra.mxu0 0.0
        %1056 = vmatprep.subr.mxu0 0.0
        %1057 = vmatpush1.msra.mxu0 0.0
        %1058 = vmatprep.subr.mxu0 0.0
        %1059 = vmatpush1.msra.mxu0 0.0
        %1060 = vmatprep.subr.mxu0 0.0
        %1061 = vmatpush1.msra.mxu0 0.0
        %1062 = vmatprep.subr.mxu0 0.0
        %1063 = vmatpush1.msra.mxu0 0.0
        %1064 = vmatprep.subr.mxu0 0.0
        %1065 = vmatpush1.msra.mxu0 0.0
        %1066 = vmatprep.subr.mxu0 0.0
        %1067 = vmatpush1.msra.mxu0 0.0
        %1068 = vmatprep.subr.mxu0 0.0
        %1069 = vmatpush1.msra.mxu0 0.0
        %1070 = vmatprep.mubr.f32.mxu0 0.0
        %1071 = vmatmul.mubr.f32.gmra.mrb[0].mxu0 %v1004
        %v1072 = vpop.f32.mrb[0].mxu0
        %v1073 = vadd.f32 0.0, %v1072
        %v1074 = vpop.f32.mrb[0].mxu0
        %1075 = vdwg.mxu0
        %v1077 = vrot.slane %v1073, 4
        %v1079 = vadd.f32 %v471, %v1077
        %v1080 = vrot.slane %v390, 4
        %v1082 = vadd.f32 %v1079, %v1080
        %v1083 = vxor.u32 %v1082, 2147483648
        %v1084 = vmul.f32 %v1083, 1.442695
        %v1085 = vpow.pop %v1084
        %v1086 = vadd.f32 %v1085, 1.0
        %v1087 = vrcp.pop %v1086
        %v1088 = vmul.f32 1.0, %v1087
        %1089 = vrot.lane.b32.xlu0 %v948, 32
        %v1090 = vpop.permute.xlu0 %1089
        %v1092 = vadd.f32 %v1079, %v1090
        %v1093 = vxor.u32 %v1092, 2147483648
        %v1094 = vmul.f32 %v1093, 1.442695
        %v1095 = vpow.pop %v1094
        %v1096 = vadd.f32 %v1095, 1.0
        %v1097 = vrcp.pop %v1096
        %v1098 = vmul.f32 1.0, %v1097
        %1099 = vrot.lane.b32.xlu0 %v816, 64
        %v1100 = vpop.permute.xlu0 %1099
        %v1102 = vadd.f32 %v471, %v1100
        %v1103 = vadd.f32 %v1073, %v577
        %v1105 = vrot.slane %v1103, 4
        %1106 = vrot.lane.b32.xlu0 %v1105, 64
        %v1107 = vpop.permute.xlu0 %1106
        %v1109 = vmul.f32 %v1088, %v1107
        %1111 = vrot.lane.b32.xlu0 %v1109, 64
        %v1112 = vpop.permute.xlu0 %1111
        %v1114 = vadd.f32 %v1102, %v1112
        %v1115 = vtanh.pop %v1114
        %v1116 = vsub.f32 1.0, %v1098
        %1118 = vrot.lane.b32.xlu0 %v1115, 96
        %v1119 = vpop.permute.xlu0 %1118
        %v1121 = vmul.f32 %v1116, %v1119
        %v1122 = vrot.slane %v993, 7
        %v1124 = vmul.f32 %v1098, %v1122
        %v1125 = vadd.f32 %v1121, %v1124
        %vm1126 = vcmp.eq.s32.totalorder %v475, 4
        %v1127 = vlaneseq
        %v1128 = vshrl.u32 %v1127, 7
        %v1129 = vsub.s32 4, %v1128
        %v1130 = vrot.slane %v1125, %v1129
        %v1131 = vsel %vm1126, %v1130, %v999
        %v1133 = vrot.slane %v1125, 4
        %1134 = vrot.lane.b32.xlu0 %v1133, 96
        %v1135 = vpop.permute.xlu0 %1134
        %v1136 = vsel %vm476, %v1135, 0
        %1138 = vmatprep.subr.mxu0 0.0
        %1139 = vmatpush1.msra.mxu0 %v386
        %1140 = vmatprep.subr.mxu0 0.0
        %1141 = vmatpush1.msra.mxu0 %v387
        %1142 = vmatprep.subr.mxu0 0.0
        %1143 = vmatpush1.msra.mxu0 %v388
        %1144 = vmatprep.subr.mxu0 0.0
        %1145 = vmatpush1.msra.mxu0 %v389
        %1146 = vmatprep.subr.mxu0 0.0
        %1147 = vmatpush1.msra.mxu0 0.0
        %1148 = vmatprep.subr.mxu0 0.0
        %1149 = vmatpush1.msra.mxu0 0.0
        %1150 = vmatprep.subr.mxu0 0.0
        %1151 = vmatpush1.msra.mxu0 0.0
        %1152 = vmatprep.subr.mxu0 0.0
        %1153 = vmatpush1.msra.mxu0 0.0
        %1154 = vmatprep.subr.mxu0 0.0
        %1155 = vmatpush1.msra.mxu0 0.0
        %1156 = vmatprep.subr.mxu0 0.0
        %1157 = vmatpush1.msra.mxu0 0.0
        %1158 = vmatprep.subr.mxu0 0.0
        %1159 = vmatpush1.msra.mxu0 0.0
        %1160 = vmatprep.subr.mxu0 0.0
        %1161 = vmatpush1.msra.mxu0 0.0
        %1162 = vmatprep.subr.mxu0 0.0
        %1163 = vmatpush1.msra.mxu0 0.0
        %1164 = vmatprep.subr.mxu0 0.0
        %1165 = vmatpush1.msra.mxu0 0.0
        %1166 = vmatprep.subr.mxu0 0.0
        %1167 = vmatpush1.msra.mxu0 0.0
        %1168 = vmatprep.subr.mxu0 0.0
        %1169 = vmatpush1.msra.mxu0 0.0
        %1170 = vmatprep.subr.mxu0 0.0
        %1171 = vmatpush1.msra.mxu0 0.0
        %1172 = vmatprep.subr.mxu0 0.0
        %1173 = vmatpush1.msra.mxu0 0.0
        %1174 = vmatprep.subr.mxu0 0.0
        %1175 = vmatpush1.msra.mxu0 0.0
        %1176 = vmatprep.subr.mxu0 0.0
        %1177 = vmatpush1.msra.mxu0 0.0
        %1178 = vmatprep.subr.mxu0 0.0
        %1179 = vmatpush1.msra.mxu0 0.0
        %1180 = vmatprep.subr.mxu0 0.0
        %1181 = vmatpush1.msra.mxu0 0.0
        %1182 = vmatprep.subr.mxu0 0.0
        %1183 = vmatpush1.msra.mxu0 0.0
        %1184 = vmatprep.subr.mxu0 0.0
        %1185 = vmatpush1.msra.mxu0 0.0
        %1186 = vmatprep.subr.mxu0 0.0
        %1187 = vmatpush1.msra.mxu0 0.0
        %1188 = vmatprep.subr.mxu0 0.0
        %1189 = vmatpush1.msra.mxu0 0.0
        %1190 = vmatprep.subr.mxu0 0.0
        %1191 = vmatpush1.msra.mxu0 0.0
        %1192 = vmatprep.subr.mxu0 0.0
        %1193 = vmatpush1.msra.mxu0 0.0
        %1194 = vmatprep.subr.mxu0 0.0
        %1195 = vmatpush1.msra.mxu0 0.0
        %1196 = vmatprep.subr.mxu0 0.0
        %1197 = vmatpush1.msra.mxu0 0.0
        %1198 = vmatprep.subr.mxu0 0.0
        %1199 = vmatpush1.msra.mxu0 0.0
        %1200 = vmatprep.subr.mxu0 0.0
        %1201 = vmatpush1.msra.mxu0 0.0
        %1202 = vmatprep.mubr.f32.mxu0 0.0
        %1203 = vmatmul.mubr.f32.gmra.mrb[0].mxu0 %v1136
        %v1204 = vpop.f32.mrb[0].mxu0
        %v1205 = vadd.f32 0.0, %v1204
        %v1206 = vpop.f32.mrb[0].mxu0
        %1207 = vdwg.mxu0
        %v1209 = vrot.slane %v1205, 3
        %v1211 = vadd.f32 %v471, %v1209
        %v1213 = vadd.f32 %v1211, %v575
        %v1214 = vxor.u32 %v1213, 2147483648
        %v1215 = vmul.f32 %v1214, 1.442695
        %v1216 = vpow.pop %v1215
        %v1217 = vadd.f32 %v1216, 1.0
        %v1218 = vrcp.pop %v1217
        %v1219 = vmul.f32 1.0, %v1218
        %1220 = vrot.lane.b32.xlu0 %v1080, 32
        %v1221 = vpop.permute.xlu0 %1220
        %v1223 = vadd.f32 %v1211, %v1221
        %v1224 = vxor.u32 %v1223, 2147483648
        %v1225 = vmul.f32 %v1224, 1.442695
        %v1226 = vpow.pop %v1225
        %v1227 = vadd.f32 %v1226, 1.0
        %v1228 = vrcp.pop %v1227
        %v1229 = vmul.f32 1.0, %v1228
        %1230 = vrot.lane.b32.xlu0 %v948, 64
        %v1231 = vpop.permute.xlu0 %1230
        %v1233 = vadd.f32 %v471, %v1231
        %v1234 = vadd.f32 %v1205, %v577
        %v1236 = vrot.slane %v1234, 3
        %1237 = vrot.lane.b32.xlu0 %v1236, 64
        %v1238 = vpop.permute.xlu0 %1237
        %v1240 = vmul.f32 %v1219, %v1238
        %1242 = vrot.lane.b32.xlu0 %v1240, 64
        %v1243 = vpop.permute.xlu0 %1242
        %v1245 = vadd.f32 %v1233, %v1243
        %v1246 = vtanh.pop %v1245
        %v1247 = vsub.f32 1.0, %v1229
        %1249 = vrot.lane.b32.xlu0 %v1246, 96
        %v1250 = vpop.permute.xlu0 %1249
        %v1252 = vmul.f32 %v1247, %v1250
        %v1253 = vrot.slane %v1125, 7
        %v1255 = vmul.f32 %v1229, %v1253
        %v1256 = vadd.f32 %v1252, %v1255
        %vm1257 = vcmp.eq.s32.totalorder %v475, 5
        %v1258 = vlaneseq
        %v1259 = vshrl.u32 %v1258, 7
        %v1260 = vsub.s32 5, %v1259
        %v1261 = vrot.slane %v1256, %v1260
        %v1262 = vsel %vm1257, %v1261, %v1131
        %v1264 = vrot.slane %v1256, 5
        %1265 = vrot.lane.b32.xlu0 %v1264, 96
        %v1266 = vpop.permute.xlu0 %1265
        %v1267 = vsel %vm476, %v1266, 0
        %1269 = vmatprep.subr.mxu0 0.0
        %1270 = vmatpush1.msra.mxu0 %v386
        %1271 = vmatprep.subr.mxu0 0.0
        %1272 = vmatpush1.msra.mxu0 %v387
        %1273 = vmatprep.subr.mxu0 0.0
        %1274 = vmatpush1.msra.mxu0 %v388
        %1275 = vmatprep.subr.mxu0 0.0
        %1276 = vmatpush1.msra.mxu0 %v389
        %1277 = vmatprep.subr.mxu0 0.0
        %1278 = vmatpush1.msra.mxu0 0.0
        %1279 = vmatprep.subr.mxu0 0.0
        %1280 = vmatpush1.msra.mxu0 0.0
        %1281 = vmatprep.subr.mxu0 0.0
        %1282 = vmatpush1.msra.mxu0 0.0
        %1283 = vmatprep.subr.mxu0 0.0
        %1284 = vmatpush1.msra.mxu0 0.0
        %1285 = vmatprep.subr.mxu0 0.0
        %1286 = vmatpush1.msra.mxu0 0.0
        %1287 = vmatprep.subr.mxu0 0.0
        %1288 = vmatpush1.msra.mxu0 0.0
        %1289 = vmatprep.subr.mxu0 0.0
        %1290 = vmatpush1.msra.mxu0 0.0
        %1291 = vmatprep.subr.mxu0 0.0
        %1292 = vmatpush1.msra.mxu0 0.0
        %1293 = vmatprep.subr.mxu0 0.0
        %1294 = vmatpush1.msra.mxu0 0.0
        %1295 = vmatprep.subr.mxu0 0.0
        %1296 = vmatpush1.msra.mxu0 0.0
        %1297 = vmatprep.subr.mxu0 0.0
        %1298 = vmatpush1.msra.mxu0 0.0
        %1299 = vmatprep.subr.mxu0 0.0
        %1300 = vmatpush1.msra.mxu0 0.0
        %1301 = vmatprep.subr.mxu0 0.0
        %1302 = vmatpush1.msra.mxu0 0.0
        %1303 = vmatprep.subr.mxu0 0.0
        %1304 = vmatpush1.msra.mxu0 0.0
        %1305 = vmatprep.subr.mxu0 0.0
        %1306 = vmatpush1.msra.mxu0 0.0
        %1307 = vmatprep.subr.mxu0 0.0
        %1308 = vmatpush1.msra.mxu0 0.0
        %1309 = vmatprep.subr.mxu0 0.0
        %1310 = vmatpush1.msra.mxu0 0.0
        %1311 = vmatprep.subr.mxu0 0.0
        %1312 = vmatpush1.msra.mxu0 0.0
        %1313 = vmatprep.subr.mxu0 0.0
        %1314 = vmatpush1.msra.mxu0 0.0
        %1315 = vmatprep.subr.mxu0 0.0
        %1316 = vmatpush1.msra.mxu0 0.0
        %1317 = vmatprep.subr.mxu0 0.0
        %1318 = vmatpush1.msra.mxu0 0.0
        %1319 = vmatprep.subr.mxu0 0.0
        %1320 = vmatpush1.msra.mxu0 0.0
        %1321 = vmatprep.subr.mxu0 0.0
        %1322 = vmatpush1.msra.mxu0 0.0
        %1323 = vmatprep.subr.mxu0 0.0
        %1324 = vmatpush1.msra.mxu0 0.0
        %1325 = vmatprep.subr.mxu0 0.0
        %1326 = vmatpush1.msra.mxu0 0.0
        %1327 = vmatprep.subr.mxu0 0.0
        %1328 = vmatpush1.msra.mxu0 0.0
        %1329 = vmatprep.subr.mxu0 0.0
        %1330 = vmatpush1.msra.mxu0 0.0
        %1331 = vmatprep.subr.mxu0 0.0
        %1332 = vmatpush1.msra.mxu0 0.0
        %1333 = vmatprep.mubr.f32.mxu0 0.0
        %1334 = vmatmul.mubr.f32.gmra.mrb[0].mxu0 %v1267
        %v1335 = vpop.f32.mrb[0].mxu0
        %v1336 = vadd.f32 0.0, %v1335
        %v1337 = vpop.f32.mrb[0].mxu0
        %1338 = vdwg.mxu0
        %v1340 = vrot.slane %v1336, 2
        %v1342 = vadd.f32 %v471, %v1340
        %v1344 = vadd.f32 %v1342, %v570
        %v1345 = vxor.u32 %v1344, 2147483648
        %v1346 = vmul.f32 %v1345, 1.442695
        %v1347 = vpow.pop %v1346
        %v1348 = vadd.f32 %v1347, 1.0
        %v1349 = vrcp.pop %v1348
        %v1350 = vmul.f32 1.0, %v1349
        %1351 = vrot.lane.b32.xlu0 %v575, 32
        %v1352 = vpop.permute.xlu0 %1351
        %v1354 = vadd.f32 %v1342, %v1352
        %v1355 = vxor.u32 %v1354, 2147483648
        %v1356 = vmul.f32 %v1355, 1.442695
        %v1357 = vpow.pop %v1356
        %v1358 = vadd.f32 %v1357, 1.0
        %v1359 = vrcp.pop %v1358
        %v1360 = vmul.f32 1.0, %v1359
        %1361 = vrot.lane.b32.xlu0 %v1080, 64
        %v1362 = vpop.permute.xlu0 %1361
        %v1364 = vadd.f32 %v471, %v1362
        %v1365 = vadd.f32 %v1336, %v577
        %v1367 = vrot.slane %v1365, 2
        %1368 = vrot.lane.b32.xlu0 %v1367, 64
        %v1369 = vpop.permute.xlu0 %1368
        %v1371 = vmul.f32 %v1350, %v1369
        %1373 = vrot.lane.b32.xlu0 %v1371, 64
        %v1374 = vpop.permute.xlu0 %1373
        %v1376 = vadd.f32 %v1364, %v1374
        %v1377 = vtanh.pop %v1376
        %v1378 = vsub.f32 1.0, %v1360
        %1380 = vrot.lane.b32.xlu0 %v1377, 96
        %v1381 = vpop.permute.xlu0 %1380
        %v1383 = vmul.f32 %v1378, %v1381
        %v1384 = vrot.slane %v1256, 7
        %v1386 = vmul.f32 %v1360, %v1384
        %v1387 = vadd.f32 %v1383, %v1386
        %vm1388 = vcmp.eq.s32.totalorder %v475, 6
        %v1389 = vlaneseq
        %v1390 = vshrl.u32 %v1389, 7
        %v1391 = vsub.s32 6, %v1390
        %v1392 = vrot.slane %v1387, %v1391
        %v1393 = vsel %vm1388, %v1392, %v1262
        %v1395 = vrot.slane %v1387, 6
        %1396 = vrot.lane.b32.xlu0 %v1395, 96
        %v1397 = vpop.permute.xlu0 %1396
        %v1398 = vsel %vm476, %v1397, 0
        %1400 = vmatprep.subr.mxu0 0.0
        %1401 = vmatpush1.msra.mxu0 %v386
        %1402 = vmatprep.subr.mxu0 0.0
        %1403 = vmatpush1.msra.mxu0 %v387
        %1404 = vmatprep.subr.mxu0 0.0
        %1405 = vmatpush1.msra.mxu0 %v388
        %1406 = vmatprep.subr.mxu0 0.0
        %1407 = vmatpush1.msra.mxu0 %v389
        %1408 = vmatprep.subr.mxu0 0.0
        %1409 = vmatpush1.msra.mxu0 0.0
        %1410 = vmatprep.subr.mxu0 0.0
        %1411 = vmatpush1.msra.mxu0 0.0
        %1412 = vmatprep.subr.mxu0 0.0
        %1413 = vmatpush1.msra.mxu0 0.0
        %1414 = vmatprep.subr.mxu0 0.0
        %1415 = vmatpush1.msra.mxu0 0.0
        %1416 = vmatprep.subr.mxu0 0.0
        %1417 = vmatpush1.msra.mxu0 0.0
        %1418 = vmatprep.subr.mxu0 0.0
        %1419 = vmatpush1.msra.mxu0 0.0
        %1420 = vmatprep.subr.mxu0 0.0
        %1421 = vmatpush1.msra.mxu0 0.0
        %1422 = vmatprep.subr.mxu0 0.0
        %1423 = vmatpush1.msra.mxu0 0.0
        %1424 = vmatprep.subr.mxu0 0.0
        %1425 = vmatpush1.msra.mxu0 0.0
        %1426 = vmatprep.subr.mxu0 0.0
        %1427 = vmatpush1.msra.mxu0 0.0
        %1428 = vmatprep.subr.mxu0 0.0
        %1429 = vmatpush1.msra.mxu0 0.0
        %1430 = vmatprep.subr.mxu0 0.0
        %1431 = vmatpush1.msra.mxu0 0.0
        %1432 = vmatprep.subr.mxu0 0.0
        %1433 = vmatpush1.msra.mxu0 0.0
        %1434 = vmatprep.subr.mxu0 0.0
        %1435 = vmatpush1.msra.mxu0 0.0
        %1436 = vmatprep.subr.mxu0 0.0
        %1437 = vmatpush1.msra.mxu0 0.0
        %1438 = vmatprep.subr.mxu0 0.0
        %1439 = vmatpush1.msra.mxu0 0.0
        %1440 = vmatprep.subr.mxu0 0.0
        %1441 = vmatpush1.msra.mxu0 0.0
        %1442 = vmatprep.subr.mxu0 0.0
        %1443 = vmatpush1.msra.mxu0 0.0
        %1444 = vmatprep.subr.mxu0 0.0
        %1445 = vmatpush1.msra.mxu0 0.0
        %1446 = vmatprep.subr.mxu0 0.0
        %1447 = vmatpush1.msra.mxu0 0.0
        %1448 = vmatprep.subr.mxu0 0.0
        %1449 = vmatpush1.msra.mxu0 0.0
        %1450 = vmatprep.subr.mxu0 0.0
        %1451 = vmatpush1.msra.mxu0 0.0
        %1452 = vmatprep.subr.mxu0 0.0
        %1453 = vmatpush1.msra.mxu0 0.0
        %1454 = vmatprep.subr.mxu0 0.0
        %1455 = vmatpush1.msra.mxu0 0.0
        %1456 = vmatprep.subr.mxu0 0.0
        %1457 = vmatpush1.msra.mxu0 0.0
        %1458 = vmatprep.subr.mxu0 0.0
        %1459 = vmatpush1.msra.mxu0 0.0
        %1460 = vmatprep.subr.mxu0 0.0
        %1461 = vmatpush1.msra.mxu0 0.0
        %1462 = vmatprep.subr.mxu0 0.0
        %1463 = vmatpush1.msra.mxu0 0.0
        %1464 = vmatprep.mubr.f32.mxu0 0.0
        %1465 = vmatmul.mubr.f32.gmra.mrb[0].mxu0 %v1398
        %v1466 = vpop.f32.mrb[0].mxu0
        %v1467 = vadd.f32 0.0, %v1466
        %v1468 = vpop.f32.mrb[0].mxu0
        %1469 = vdwg.mxu0
        %v1471 = vrot.slane %v1467, 1
        %v1473 = vadd.f32 %v471, %v1471
        %v1475 = vadd.f32 %v1473, %v559
        %v1476 = vxor.u32 %v1475, 2147483648
        %v1477 = vmul.f32 %v1476, 1.442695
        %v1478 = vpow.pop %v1477
        %v1479 = vadd.f32 %v1478, 1.0
        %v1480 = vrcp.pop %v1479
        %v1481 = vmul.f32 1.0, %v1480
        %1482 = vrot.lane.b32.xlu0 %v570, 32
        %v1483 = vpop.permute.xlu0 %1482
        %v1485 = vadd.f32 %v1473, %v1483
        %v1486 = vxor.u32 %v1485, 2147483648
        %v1487 = vmul.f32 %v1486, 1.442695
        %v1488 = vpow.pop %v1487
        %v1489 = vadd.f32 %v1488, 1.0
        %v1490 = vrcp.pop %v1489
        %v1491 = vmul.f32 1.0, %v1490
        %v1492 = vadd.f32 %v471, %v577
        %v1493 = vadd.f32 %v1467, %v577
        %v1495 = vrot.slane %v1493, 1
        %1496 = vrot.lane.b32.xlu0 %v1495, 64
        %v1497 = vpop.permute.xlu0 %1496
        %v1499 = vmul.f32 %v1481, %v1497
        %1501 = vrot.lane.b32.xlu0 %v1499, 64
        %v1502 = vpop.permute.xlu0 %1501
        %v1504 = vadd.f32 %v1492, %v1502
        %v1505 = vtanh.pop %v1504
        %v1506 = vsub.f32 1.0, %v1491
        %1508 = vrot.lane.b32.xlu0 %v1505, 96
        %v1509 = vpop.permute.xlu0 %1508
        %v1511 = vmul.f32 %v1506, %v1509
        %v1512 = vrot.slane %v1387, 7
        %v1514 = vmul.f32 %v1491, %v1512
        %v1515 = vadd.f32 %v1511, %v1514
        %vm1516 = vcmp.eq.s32.totalorder %v475, 7
        %v1517 = vlaneseq
        %v1518 = vshrl.u32 %v1517, 7
        %v1519 = vsub.s32 7, %v1518
        %v1520 = vrot.slane %v1515, %v1519
        %v1521 = vsel %vm1516, %v1520, %v1393
        %1523 = vrot.lane.b32.xlu0 %v1521, 96
        %v1524 = vpop.permute.xlu0 %1523
        %1526 = vst.msk [vmem:[#allocation2] sm:$0xff] %vm476, %v1524
        %1528 = vrot.lane.b32.xlu0 %v1520, 96
        %v1529 = vpop.permute.xlu0 %1528
        %1531 = vst.msk [vmem:[#allocation3] sm:$0xff] %vm476, %v1529
        %1532 = vst.msk [vmem:[#allocation3 + $0x8] sm:$0xff] %vm476, %v1529
        %vm1533 = vcmask 7168
        %1534 = vst.msk [vmem:[#allocation4] sm:$0xff] %vm1533, 0
        %1535 = vst.msk [vmem:[#allocation4 + $0x8] sm:$0xff] %vm1533, 0
        %v1536 = vadd.s32 %v475, 8
        %1537 = vst.msk [vmem:[#allocation5] sm:$0xff] %vm1533, %v475
        %1538 = vst.msk [vmem:[#allocation5 + $0x8] sm:$0xff] %vm1533, %v1536
      $region64: #{beam_search_decode.1} parent=59 // pred_fallthru
        _
      %v1539 = vld [vmem:[%s6] sm:$0x1f]
      %v1540 = vld [vmem:[#allocation4] sm:$0xff]
      %v1541 = vld [vmem:[#allocation4 + $0x8] sm:$0xff]
      %v1542 = vlaneseq
      %v1543 = vand.u32 %v1542, 127
      %1544 = vset.pattern.permute.xlu0 0
      %1545 = vperm.xlu0 %1544, %v1540
      %v1546 = vpop.permute.xlu0 %1545
      %1547 = vset.pattern.permute.xlu0 0
      %1548 = vperm.xlu0 %1547, %v1541
      %v1549 = vpop.permute.xlu0 %1548
      %vm1550 = vcmp.eq.s32.totalorder %v1546, %v1543
      %vm1551 = vcmp.eq.s32.totalorder %v1549, %v1543
      %v1552 = vsel %vm1550, 1, 0
      %v1553 = vsel %vm1551, 1, 0
      %v1554 = vcvt.s32.f32 %v1552
      %v1555 = vcvt.s32.f32 %v1553
      %v1556 = vld [vmem:[%s4] sm:$0xff]
      %v1557 = vld [vmem:[%s4 + $0x8] sm:$0xff]
      %vm1558 = vcmask 130048
      %v1560 = vsel %vm1558, %v1554, 0
      %v1563 = vsel %vm1558, %v1555, 0
      %1565 = vmatprep.subr.mxu0 0.0
      %1566 = vmatpush1.msra.mxu0 %v1556
      %1567 = vmatprep.subr.mxu0 0.0
      %1568 = vmatpush1.msra.mxu0 %v1557
      %1569 = vmatprep.subr.mxu0 0.0
      %1570 = vmatpush1.msra.mxu0 0.0
      %1571 = vmatprep.subr.mxu0 0.0
      %1572 = vmatpush1.msra.mxu0 0.0
      %1573 = vmatprep.subr.mxu0 0.0
      %1574 = vmatpush1.msra.mxu0 0.0
      %1575 = vmatprep.subr.mxu0 0.0
      %1576 = vmatpush1.msra.mxu0 0.0
      %1577 = vmatprep.subr.mxu0 0.0
      %1578 = vmatpush1.msra.mxu0 0.0
      %1579 = vmatprep.subr.mxu0 0.0
      %1580 = vmatpush1.msra.mxu0 0.0
      %1581 = vmatprep.subr.mxu0 0.0
      %1582 = vmatpush1.msra.mxu0 0.0
      %1583 = vmatprep.subr.mxu0 0.0
      %1584 = vmatpush1.msra.mxu0 0.0
      %1585 = vmatprep.subr.mxu0 0.0
      %1586 = vmatpush1.msra.mxu0 0.0
      %1587 = vmatprep.subr.mxu0 0.0
      %1588 = vmatpush1.msra.mxu0 0.0
      %1589 = vmatprep.subr.mxu0 0.0
      %1590 = vmatpush1.msra.mxu0 0.0
      %1591 = vmatprep.subr.mxu0 0.0
      %1592 = vmatpush1.msra.mxu0 0.0
      %1593 = vmatprep.subr.mxu0 0.0
      %1594 = vmatpush1.msra.mxu0 0.0
      %1595 = vmatprep.subr.mxu0 0.0
      %1596 = vmatpush1.msra.mxu0 0.0
      %1597 = vmatprep.subr.mxu0 0.0
      %1598 = vmatpush1.msra.mxu0 0.0
      %1599 = vmatprep.subr.mxu0 0.0
      %1600 = vmatpush1.msra.mxu0 0.0
      %1601 = vmatprep.subr.mxu0 0.0
      %1602 = vmatpush1.msra.mxu0 0.0
      %1603 = vmatprep.subr.mxu0 0.0
      %1604 = vmatpush1.msra.mxu0 0.0
      %1605 = vmatprep.subr.mxu0 0.0
      %1606 = vmatpush1.msra.mxu0 0.0
      %1607 = vmatprep.subr.mxu0 0.0
      %1608 = vmatpush1.msra.mxu0 0.0
      %1609 = vmatprep.subr.mxu0 0.0
      %1610 = vmatpush1.msra.mxu0 0.0
      %1611 = vmatprep.subr.mxu0 0.0
      %1612 = vmatpush1.msra.mxu0 0.0
      %1613 = vmatprep.subr.mxu0 0.0
      %1614 = vmatpush1.msra.mxu0 0.0
      %1615 = vmatprep.subr.mxu0 0.0
      %1616 = vmatpush1.msra.mxu0 0.0
      %1617 = vmatprep.subr.mxu0 0.0
      %1618 = vmatpush1.msra.mxu0 0.0
      %1619 = vmatprep.subr.mxu0 0.0
      %1620 = vmatpush1.msra.mxu0 0.0
      %1621 = vmatprep.subr.mxu0 0.0
      %1622 = vmatpush1.msra.mxu0 0.0
      %1623 = vmatprep.subr.mxu0 0.0
      %1624 = vmatpush1.msra.mxu0 0.0
      %1625 = vmatprep.subr.mxu0 0.0
      %1626 = vmatpush1.msra.mxu0 0.0
      %1627 = vmatprep.subr.mxu0 0.0
      %1628 = vmatpush1.msra.mxu0 0.0
      %1629 = vmatprep.mubr.f32.mxu0 0.0
      %1630 = vmatmul.mubr.f32.gmra.mrb[0].mxu0 %v1560
      %v1631 = vpop.f32.mrb[0].mxu0
      %v1632 = vadd.f32 0.0, %v1631
      %v1633 = vpop.f32.mrb[0].mxu0
      %1634 = vmatprep.mubr.f32.mxu0 0.0
      %1635 = vmatmul.mubr.f32.gmra.mrb[0].mxu0 %v1563
      %v1636 = vpop.f32.mrb[0].mxu0
      %v1637 = vadd.f32 0.0, %v1636
      %v1638 = vpop.f32.mrb[0].mxu0
      %1639 = vdwg.mxu0
      %v1640 = vld [vmem:[#allocation3] sm:$0xff]
      %v1641 = vld [vmem:[#allocation3 + $0x8] sm:$0xff]
      %v1642 = vld [vmem:[%s5] sm:$0xff]
      %v1643 = vld [vmem:[%s5 + $0x8] sm:$0xff]
      %v1644 = vld [vmem:[%s5 + $0x10] sm:$0xff]
      %v1645 = vld [vmem:[%s5 + $0x18] sm:$0xff]
      %vm1646 = vcmask 261120
      %v1648 = vsel %vm1646, %v1640, 0
      %v1651 = vsel %vm1646, %v1641, 0
      %1653 = vmatprep.subr.mxu0 0.0
      %1654 = vmatpush1.msra.mxu0 %v1642
      %1655 = vmatprep.subr.mxu0 0.0
      %1656 = vmatpush1.msra.mxu0 %v1643
      %1657 = vmatprep.subr.mxu0 0.0
      %1658 = vmatpush1.msra.mxu0 %v1644
      %1659 = vmatprep.subr.mxu0 0.0
      %1660 = vmatpush1.msra.mxu0 %v1645
      %1661 = vmatprep.subr.mxu0 0.0
      %1662 = vmatpush1.msra.mxu0 0.0
      %1663 = vmatprep.subr.mxu0 0.0
      %1664 = vmatpush1.msra.mxu0 0.0
      %1665 = vmatprep.subr.mxu0 0.0
      %1666 = vmatpush1.msra.mxu0 0.0
      %1667 = vmatprep.subr.mxu0 0.0
      %1668 = vmatpush1.msra.mxu0 0.0
      %1669 = vmatprep.subr.mxu0 0.0
      %1670 = vmatpush1.msra.mxu0 0.0
      %1671 = vmatprep.subr.mxu0 0.0
      %1672 = vmatpush1.msra.mxu0 0.0
      %1673 = vmatprep.subr.mxu0 0.0
      %1674 = vmatpush1.msra.mxu0 0.0
      %1675 = vmatprep.subr.mxu0 0.0
      %1676 = vmatpush1.msra.mxu0 0.0
      %1677 = vmatprep.subr.mxu0 0.0
      %1678 = vmatpush1.msra.mxu0 0.0
      %1679 = vmatprep.subr.mxu0 0.0
      %1680 = vmatpush1.msra.mxu0 0.0
      %1681 = vmatprep.subr.mxu0 0.0
      %1682 = vmatpush1.msra.mxu0 0.0
      %1683 = vmatprep.subr.mxu0 0.0
      %1684 = vmatpush1.msra.mxu0 0.0
      %1685 = vmatprep.subr.mxu0 0.0
      %1686 = vmatpush1.msra.mxu0 0.0
      %1687 = vmatprep.subr.mxu0 0.0
      %1688 = vmatpush1.msra.mxu0 0.0
      %1689 = vmatprep.subr.mxu0 0.0
      %1690 = vmatpush1.msra.mxu0 0.0
      %1691 = vmatprep.subr.mxu0 0.0
      %1692 = vmatpush1.msra.mxu0 0.0
      %1693 = vmatprep.subr.mxu0 0.0
      %1694 = vmatpush1.msra.mxu0 0.0
      %1695 = vmatprep.subr.mxu0 0.0
      %1696 = vmatpush1.msra.mxu0 0.0
      %1697 = vmatprep.subr.mxu0 0.0
      %1698 = vmatpush1.msra.mxu0 0.0
      %1699 = vmatprep.subr.mxu0 0.0
      %1700 = vmatpush1.msra.mxu0 0.0
      %1701 = vmatprep.subr.mxu0 0.0
      %1702 = vmatpush1.msra.mxu0 0.0
      %1703 = vmatprep.subr.mxu0 0.0
      %1704 = vmatpush1.msra.mxu0 0.0
      %1705 = vmatprep.subr.mxu0 0.0
      %1706 = vmatpush1.msra.mxu0 0.0
      %1707 = vmatprep.subr.mxu0 0.0
      %1708 = vmatpush1.msra.mxu0 0.0
      %1709 = vmatprep.subr.mxu0 0.0
      %1710 = vmatpush1.msra.mxu0 0.0
      %1711 = vmatprep.subr.mxu0 0.0
      %1712 = vmatpush1.msra.mxu0 0.0
      %1713 = vmatprep.subr.mxu0 0.0
      %1714 = vmatpush1.msra.mxu0 0.0
      %1715 = vmatprep.subr.mxu0 0.0
      %1716 = vmatpush1.msra.mxu0 0.0
      %1717 = vmatprep.mubr.f32.mxu0 0.0
      %1718 = vmatmul.mubr.f32.gmra.mrb[0].mxu0 %v1648
      %v1719 = vpop.f32.mrb[0].mxu0
      %v1720 = vadd.f32 0.0, %v1719
      %v1721 = vpop.f32.mrb[0].mxu0
      %1722 = vmatprep.mubr.f32.mxu0 0.0
      %1723 = vmatmul.mubr.f32.gmra.mrb[0].mxu0 %v1651
      %v1724 = vpop.f32.mrb[0].mxu0
      %v1725 = vadd.f32 0.0, %v1724
      %v1726 = vpop.f32.mrb[0].mxu0
      %1727 = vdwg.mxu0
      %v1728 = vadd.f32 %v1632, %v1720
      %v1729 = vadd.f32 %v1637, %v1725
      %v1730 = vlaneseq
      %v1731 = vshrl.u32 %v1730, 7
      %v1732 = vsub.s32 0, %v1731
      %v1733 = vrot.slane %v1539, %v1732
      %v1734 = vadd.f32 %v1728, %v1733
      %v1735 = vadd.f32 %v1729, %v1733
      %v1736 = vxor.u32 %v1734, 2147483648
      %v1737 = vxor.u32 %v1735, 2147483648
      %v1738 = vmul.f32 %v1736, 1.442695
      %v1739 = vpow.pop %v1738
      %v1740 = vmul.f32 %v1737, 1.442695
      %v1741 = vpow.pop %v1740
      %v1742 = vadd.f32 %v1739, 1.0
      %v1743 = vadd.f32 %v1741, 1.0
      %v1744 = vrcp.pop %v1742
      %v1745 = vmul.f32 1.0, %v1744
      %v1746 = vrcp.pop %v1743
      %v1747 = vmul.f32 1.0, %v1746
      %v1748 = vlaneseq
      %v1749 = vshrl.u32 %v1748, 7
      %v1750 = vsub.s32 1, %v1749
      %v1751 = vrot.slane %v1539, %v1750
      %1753 = vrot.lane.b32.xlu0 %v1751, 32
      %v1754 = vpop.permute.xlu0 %1753
      %v1756 = vadd.f32 %v1728, %v1754
      %v1757 = vadd.f32 %v1729, %v1754
      %v1758 = vxor.u32 %v1756, 2147483648
      %v1759 = vxor.u32 %v1757, 2147483648
      %v1760 = vmul.f32 %v1758, 1.442695
      %v1761 = vpow.pop %v1760
      %v1762 = vmul.f32 %v1759, 1.442695
      %v1763 = vpow.pop %v1762
      %v1764 = vadd.f32 %v1761, 1.0
      %v1765 = vadd.f32 %v1763, 1.0
      %v1766 = vrcp.pop %v1764
      %v1767 = vmul.f32 1.0, %v1766
      %v1768 = vrcp.pop %v1765
      %v1769 = vmul.f32 1.0, %v1768
      %v1770 = vlaneseq
      %v1771 = vshrl.u32 %v1770, 7
      %v1772 = vsub.s32 2, %v1771
      %v1773 = vrot.slane %v1539, %v1772
      %1775 = vrot.lane.b32.xlu0 %v1773, 64
      %v1776 = vpop.permute.xlu0 %1775
      %v1778 = vadd.f32 %v1632, %v1776
      %v1779 = vadd.f32 %v1637, %v1776
      %v1780 = vlaneseq
      %v1781 = vshrl.u32 %v1780, 7
      %v1782 = vsub.s32 3, %v1781
      %v1783 = vrot.slane %v1539, %v1782
      %1785 = vrot.lane.b32.xlu0 %v1783, 64
      %v1786 = vpop.permute.xlu0 %1785
      %v1788 = vadd.f32 %v1720, %v1786
      %v1789 = vadd.f32 %v1725, %v1786
      %1792 = vrot.lane.b32.xlu0 %v1788, 64
      %v1793 = vpop.permute.xlu0 %1792
      %1794 = vrot.lane.b32.xlu0 %v1789, 64
      %v1795 = vpop.permute.xlu0 %1794
      %v1798 = vmul.f32 %v1745, %v1793
      %v1799 = vmul.f32 %v1747, %v1795
      %1802 = vrot.lane.b32.xlu0 %v1798, 64
      %v1803 = vpop.permute.xlu0 %1802
      %1804 = vrot.lane.b32.xlu0 %v1799, 64
      %v1805 = vpop.permute.xlu0 %1804
      %v1808 = vadd.f32 %v1778, %v1803
      %v1809 = vadd.f32 %v1779, %v1805
      %v1810 = vtanh.pop %v1808
      %v1811 = vtanh.pop %v1809
      %v1812 = vsub.f32 1.0, %v1767
      %v1813 = vsub.f32 1.0, %v1769
      %1816 = vrot.lane.b32.xlu0 %v1810, 96
      %v1817 = vpop.permute.xlu0 %1816
      %1818 = vrot.lane.b32.xlu0 %v1811, 96
      %v1819 = vpop.permute.xlu0 %1818
      %v1822 = vmul.f32 %v1812, %v1817
      %v1823 = vmul.f32 %v1813, %v1819
      %1824 = vrot.lane.b32.xlu0 %v1640, 32
      %v1825 = vpop.permute.xlu0 %1824
      %1826 = vrot.lane.b32.xlu0 %v1641, 32
      %v1827 = vpop.permute.xlu0 %1826
      %v1830 = vmul.f32 %v1767, %v1825
      %v1831 = vmul.f32 %v1769, %v1827
      %v1832 = vadd.f32 %v1822, %v1830
      %v1833 = vadd.f32 %v1823, %v1831
      %v1834 = vld [vmem:[#allocation2] sm:$0xff]
      %1837 = vrot.lane.b32.xlu0 %v1832, 96
      %v1838 = vpop.permute.xlu0 %1837
      %1839 = vrot.lane.b32.xlu0 %v1833, 96
      %v1840 = vpop.permute.xlu0 %1839
      %v1841 = vsel %vm1646, %v1838, 0
      %v1843 = vsel %vm1646, %v1840, 0
      %v1846 = vsel %vm1646, %v1834, 0
      %1848 = vmatprep.subr.mxu0 0.0
      %1849 = vmatpush1.xpose.msra.mxu0 %v1846
      %1850 = vmatprep.subr.mxu0 0.0
      %1851 = vmatpush1.xpose.msra.mxu0 0.0
      %1852 = vmatprep.subr.mxu0 0.0
      %1853 = vmatpush1.xpose.msra.mxu0 0.0
      %1854 = vmatprep.subr.mxu0 0.0
      %1855 = vmatpush1.xpose.msra.mxu0 0.0
      %1856 = vmatprep.subr.mxu0 0.0
      %1857 = vmatpush1.xpose.msra.mxu0 0.0
      %1858 = vmatprep.subr.mxu0 0.0
      %1859 = vmatpush1.xpose.msra.mxu0 0.0
      %1860 = vmatprep.subr.mxu0 0.0
      %1861 = vmatpush1.xpose.msra.mxu0 0.0
      %1862 = vmatprep.subr.mxu0 0.0
      %1863 = vmatpush1.xpose.msra.mxu0 0.0
      %1864 = vmatprep.subr.mxu0 0.0
      %1865 = vmatpush1.xpose.msra.mxu0 0.0
      %1866 = vmatprep.subr.mxu0 0.0
      %1867 = vmatpush1.xpose.msra.mxu0 0.0
      %1868 = vmatprep.subr.mxu0 0.0
      %1869 = vmatpush1.xpose.msra.mxu0 0.0
      %1870 = vmatprep.subr.mxu0 0.0
      %1871 = vmatpush1.xpose.msra.mxu0 0.0
      %1872 = vmatprep.subr.mxu0 0.0
      %1873 = vmatpush1.xpose.msra.mxu0 0.0
      %1874 = vmatprep.subr.mxu0 0.0
      %1875 = vmatpush1.xpose.msra.mxu0 0.0
      %1876 = vmatprep.subr.mxu0 0.0
      %1877 = vmatpush1.xpose.msra.mxu0 0.0
      %1878 = vmatprep.subr.mxu0 0.0
      %1879 = vmatpush1.xpose.msra.mxu0 0.0
      %1880 = vmatprep.subr.mxu0 0.0
      %1881 = vmatpush1.xpose.msra.mxu0 0.0
      %1882 = vmatprep.subr.mxu0 0.0
      %1883 = vmatpush1.xpose.msra.mxu0 0.0
      %1884 = vmatprep.subr.mxu0 0.0
      %1885 = vmatpush1.xpose.msra.mxu0 0.0
      %1886 = vmatprep.subr.mxu0 0.0
      %1887 = vmatpush1.xpose.msra.mxu0 0.0
      %1888 = vmatprep.subr.mxu0 0.0
      %1889 = vmatpush1.xpose.msra.mxu0 0.0
      %1890 = vmatprep.subr.mxu0 0.0
      %1891 = vmatpush1.xpose.msra.mxu0 0.0
      %1892 = vmatprep.subr.mxu0 0.0
      %1893 = vmatpush1.xpose.msra.mxu0 0.0
      %1894 = vmatprep.subr.mxu0 0.0
      %1895 = vmatpush1.xpose.msra.mxu0 0.0
      %1896 = vmatprep.subr.mxu0 0.0
      %1897 = vmatpush1.xpose.msra.mxu0 0.0
      %1898 = vmatprep.subr.mxu0 0.0
      %1899 = vmatpush1.xpose.msra.mxu0 0.0
      %1900 = vmatprep.subr.mxu0 0.0
      %1901 = vmatpush1.xpose.msra.mxu0 0.0
      %1902 = vmatprep.subr.mxu0 0.0
      %1903 = vmatpush1.xpose.msra.mxu0 0.0
      %1904 = vmatprep.subr.mxu0 0.0
      %1905 = vmatpush1.xpose.msra.mxu0 0.0
      %1906 = vmatprep.subr.mxu0 0.0
      %1907 = vmatpush1.xpose.msra.mxu0 0.0
      %1908 = vmatprep.subr.mxu0 0.0
      %1909 = vmatpush1.xpose.msra.mxu0 0.0
      %1910 = vmatprep.subr.mxu0 0.0
      %1911 = vmatpush1.xpose.msra.mxu0 0.0
      %1912 = vmatprep.mubr.f32.mxu0 0.0
      %1913 = vmatmul.mubr.f32.gmra.mrb[0].mxu0 %v1841
      %v1914 = vpop.f32.mrb[0].mxu0
      %v1915 = vadd.f32 0.0, %v1914
      %v1916 = vpop.f32.mrb[0].mxu0
      %1917 = vmatprep.mubr.f32.mxu0 0.0
      %1918 = vmatmul.mubr.f32.gmra.mrb[0].mxu0 %v1843
      %v1919 = vpop.f32.mrb[0].mxu0
      %v1920 = vadd.f32 0.0, %v1919
      %v1921 = vpop.f32.mrb[0].mxu0
      %1922 = vdwg.mxu0
      %vm1923 = vcmask 64512
      %v1924 = vsel %vm1923, %v1915, -inf
      %1925 = vmax.xlane.f32.xlu0 %v1924
      %v1926 = vpop.xlane.xlu0 %1925
      %v1927 = vsel %vm1923, %v1920, -inf
      %1928 = vmax.xlane.f32.xlu0 %v1927
      %v1929 = vpop.xlane.xlu0 %1928
      %v1930 = vsub.f32 %v1915, %v1926
      %v1931 = vsub.f32 %v1920, %v1929
      %v1932 = vmul.f32 %v1930, 1.442695
      %v1933 = vpow.pop %v1932
      %v1934 = vmul.f32 %v1931, 1.442695
      %v1935 = vpow.pop %v1934
      %v1936 = vsel %vm1923, %v1933, 0.0
      %1937 = vadd.xlane.f32.xlu0 %v1936
      %v1938 = vpop.xlane.xlu0 %1937
      %v1939 = vsel %vm1923, %v1935, 0.0
      %1940 = vadd.xlane.f32.xlu0 %v1939
      %v1941 = vpop.xlane.xlu0 %1940
      %v1942 = vrcp.pop %v1938
      %v1943 = vrcp.pop %v1941
      %v1944 = vmul.f32 %v1933, %v1942
      %v1945 = vmul.f32 %v1935, %v1943
      %v1947 = vsel %vm1923, %v1944, 0
      %v1950 = vsel %vm1923, %v1945, 0
      %1952 = vmatprep.subr.mxu0 0.0
      %1953 = vmatpush1.msra.mxu0 %v1834
      %1954 = vmatprep.subr.mxu0 0.0
      %1955 = vmatpush1.msra.mxu0 0.0
      %1956 = vmatprep.subr.mxu0 0.0
      %1957 = vmatpush1.msra.mxu0 0.0
      %1958 = vmatprep.subr.mxu0 0.0
      %1959 = vmatpush1.msra.mxu0 0.0
      %1960 = vmatprep.subr.mxu0 0.0
      %1961 = vmatpush1.msra.mxu0 0.0
      %1962 = vmatprep.subr.mxu0 0.0
      %1963 = vmatpush1.msra.mxu0 0.0
      %1964 = vmatprep.subr.mxu0 0.0
      %1965 = vmatpush1.msra.mxu0 0.0
      %1966 = vmatprep.subr.mxu0 0.0
      %1967 = vmatpush1.msra.mxu0 0.0
      %1968 = vmatprep.subr.mxu0 0.0
      %1969 = vmatpush1.msra.mxu0 0.0
      %1970 = vmatprep.subr.mxu0 0.0
      %1971 = vmatpush1.msra.mxu0 0.0
      %1972 = vmatprep.subr.mxu0 0.0
      %1973 = vmatpush1.msra.mxu0 0.0
      %1974 = vmatprep.subr.mxu0 0.0
      %1975 = vmatpush1.msra.mxu0 0.0
      %1976 = vmatprep.subr.mxu0 0.0
      %1977 = vmatpush1.msra.mxu0 0.0
      %1978 = vmatprep.subr.mxu0 0.0
      %1979 = vmatpush1.msra.mxu0 0.0
      %1980 = vmatprep.subr.mxu0 0.0
      %1981 = vmatpush1.msra.mxu0 0.0
      %1982 = vmatprep.subr.mxu0 0.0
      %1983 = vmatpush1.msra.mxu0 0.0
      %1984 = vmatprep.subr.mxu0 0.0
      %1985 = vmatpush1.msra.mxu0 0.0
      %1986 = vmatprep.subr.mxu0 0.0
      %1987 = vmatpush1.msra.mxu0 0.0
      %1988 = vmatprep.subr.mxu0 0.0
      %1989 = vmatpush1.msra.mxu0 0.0
      %1990 = vmatprep.subr.mxu0 0.0
      %1991 = vmatpush1.msra.mxu0 0.0
      %1992 = vmatprep.subr.mxu0 0.0
      %1993 = vmatpush1.msra.mxu0 0.0
      %1994 = vmatprep.subr.mxu0 0.0
      %1995 = vmatpush1.msra.mxu0 0.0
      %1996 = vmatprep.subr.mxu0 0.0
      %1997 = vmatpush1.msra.mxu0 0.0
      %1998 = vmatprep.subr.mxu0 0.0
      %1999 = vmatpush1.msra.mxu0 0.0
      %2000 = vmatprep.subr.mxu0 0.0
      %2001 = vmatpush1.msra.mxu0 0.0
      %2002 = vmatprep.subr.mxu0 0.0
      %2003 = vmatpush1.msra.mxu0 0.0
      %2004 = vmatprep.subr.mxu0 0.0
      %2005 = vmatpush1.msra.mxu0 0.0
      %2006 = vmatprep.subr.mxu0 0.0
      %2007 = vmatpush1.msra.mxu0 0.0
      %2008 = vmatprep.subr.mxu0 0.0
      %2009 = vmatpush1.msra.mxu0 0.0
      %2010 = vmatprep.subr.mxu0 0.0
      %2011 = vmatpush1.msra.mxu0 0.0
      %2012 = vmatprep.subr.mxu0 0.0
      %2013 = vmatpush1.msra.mxu0 0.0
      %2014 = vmatprep.subr.mxu0 0.0
      %2015 = vmatpush1.msra.mxu0 0.0
      %2016 = vmatprep.mubr.f32.mxu0 0.0
      %2017 = vmatmul.mubr.f32.gmra.mrb[0].mxu0 %v1947
      %v2018 = vpop.f32.mrb[0].mxu0
      %v2019 = vadd.f32 0.0, %v2018
      %v2020 = vpop.f32.mrb[0].mxu0
      %2021 = vmatprep.mubr.f32.mxu0 0.0
      %2022 = vmatmul.mubr.f32.gmra.mrb[0].mxu0 %v1950
      %v2023 = vpop.f32.mrb[0].mxu0
      %v2024 = vadd.f32 0.0, %v2023
      %v2025 = vpop.f32.mrb[0].mxu0
      %2026 = vdwg.mxu0
      %v2027 = vld [vmem:[%s7] sm:$0xff]
      %v2028 = vld [vmem:[%s7 + $0x8] sm:$0xff]
      %v2029 = vld [vmem:[%s7 + $0x10] sm:$0xff]
      %v2030 = vld [vmem:[%s7 + $0x18] sm:$0xff]
      %v2031 = vld [vmem:[%s7 + $0x20] sm:$0xff]
      %v2032 = vld [vmem:[%s7 + $0x28] sm:$0xff]
      %v2033 = vld [vmem:[%s7 + $0x30] sm:$0xff]
      %v2034 = vld [vmem:[%s7 + $0x38] sm:$0xff]
      %v2036 = vsel %vm1646, %v2019, 0
      %v2039 = vsel %vm1646, %v2024, 0
      %2041 = vmatprep.subr.mxu0 0.0
      %2042 = vmatpush1.msra.mxu0 %v2031
      %2043 = vmatprep.subr.mxu0 0.0
      %2044 = vmatpush1.msra.mxu0 %v2032
      %2045 = vmatprep.subr.mxu0 0.0
      %2046 = vmatpush1.msra.mxu0 %v2033
      %2047 = vmatprep.subr.mxu0 0.0
      %2048 = vmatpush1.msra.mxu0 %v2034
      %2049 = vmatprep.subr.mxu0 0.0
      %2050 = vmatpush1.msra.mxu0 0.0
      %2051 = vmatprep.subr.mxu0 0.0
      %2052 = vmatpush1.msra.mxu0 0.0
      %2053 = vmatprep.subr.mxu0 0.0
      %2054 = vmatpush1.msra.mxu0 0.0
      %2055 = vmatprep.subr.mxu0 0.0
      %2056 = vmatpush1.msra.mxu0 0.0
      %2057 = vmatprep.subr.mxu0 0.0
      %2058 = vmatpush1.msra.mxu0 0.0
      %2059 = vmatprep.subr.mxu0 0.0
      %2060 = vmatpush1.msra.mxu0 0.0
      %2061 = vmatprep.subr.mxu0 0.0
      %2062 = vmatpush1.msra.mxu0 0.0
      %2063 = vmatprep.subr.mxu0 0.0
      %2064 = vmatpush1.msra.mxu0 0.0
      %2065 = vmatprep.subr.mxu0 0.0
      %2066 = vmatpush1.msra.mxu0 0.0
      %2067 = vmatprep.subr.mxu0 0.0
      %2068 = vmatpush1.msra.mxu0 0.0
      %2069 = vmatprep.subr.mxu0 0.0
      %2070 = vmatpush1.msra.mxu0 0.0
      %2071 = vmatprep.subr.mxu0 0.0
      %2072 = vmatpush1.msra.mxu0 0.0
      %2073 = vmatprep.subr.mxu0 0.0
      %2074 = vmatpush1.msra.mxu0 0.0
      %2075 = vmatprep.subr.mxu0 0.0
      %2076 = vmatpush1.msra.mxu0 0.0
      %2077 = vmatprep.subr.mxu0 0.0
      %2078 = vmatpush1.msra.mxu0 0.0
      %2079 = vmatprep.subr.mxu0 0.0
      %2080 = vmatpush1.msra.mxu0 0.0
      %2081 = vmatprep.subr.mxu0 0.0
      %2082 = vmatpush1.msra.mxu0 0.0
      %2083 = vmatprep.subr.mxu0 0.0
      %2084 = vmatpush1.msra.mxu0 0.0
      %2085 = vmatprep.subr.mxu0 0.0
      %2086 = vmatpush1.msra.mxu0 0.0
      %2087 = vmatprep.subr.mxu0 0.0
      %2088 = vmatpush1.msra.mxu0 0.0
      %2089 = vmatprep.subr.mxu0 0.0
      %2090 = vmatpush1.msra.mxu0 0.0
      %2091 = vmatprep.subr.mxu0 0.0
      %2092 = vmatpush1.msra.mxu0 0.0
      %2093 = vmatprep.subr.mxu0 0.0
      %2094 = vmatpush1.msra.mxu0 0.0
      %2095 = vmatprep.subr.mxu0 0.0
      %2096 = vmatpush1.msra.mxu0 0.0
      %2097 = vmatprep.subr.mxu0 0.0
      %2098 = vmatpush1.msra.mxu0 0.0
      %2099 = vmatprep.subr.mxu0 0.0
      %2100 = vmatpush1.msra.mxu0 0.0
      %2101 = vmatprep.subr.mxu0 0.0
      %2102 = vmatpush1.msra.mxu0 0.0
      %2103 = vmatprep.subr.mxu0 0.0
      %2104 = vmatpush1.msra.mxu0 0.0
      %2105 = vmatprep.mubr.f32.mxu0 0.0
      %2106 = vmatmul.mubr.f32.gmra.mrb[0].mxu0 %v2036
      %v2107 = vpop.f32.mrb[0].mxu0
      %v2108 = vadd.f32 0.0, %v2107
      %v2109 = vpop.f32.mrb[0].mxu0
      %2110 = vmatprep.mubr.f32.mxu0 0.0
      %2111 = vmatmul.mubr.f32.gmra.mrb[0].mxu0 %v2039
      %v2112 = vpop.f32.mrb[0].mxu0
      %v2113 = vadd.f32 0.0, %v2112
      %v2114 = vpop.f32.mrb[0].mxu0
      %2115 = vdwg.mxu0
      %2116 = vmatprep.subr.mxu0 0.0
      %2117 = vmatpush1.msra.mxu0 %v2027
      %2118 = vmatprep.subr.mxu0 0.0
      %2119 = vmatpush1.msra.mxu0 %v2028
      %2120 = vmatprep.subr.mxu0 0.0
      %2121 = vmatpush1.msra.mxu0 %v2029
      %2122 = vmatprep.subr.mxu0 0.0
      %2123 = vmatpush1.msra.mxu0 %v2030
      %2124 = vmatprep.subr.mxu0 0.0
      %2125 = vmatpush1.msra.mxu0 0.0
      %2126 = vmatprep.subr.mxu0 0.0
      %2127 = vmatpush1.msra.mxu0 0.0
      %2128 = vmatprep.subr.mxu0 0.0
      %2129 = vmatpush1.msra.mxu0 0.0
      %2130 = vmatprep.subr.mxu0 0.0
      %2131 = vmatpush1.msra.mxu0 0.0
      %2132 = vmatprep.subr.mxu0 0.0
      %2133 = vmatpush1.msra.mxu0 0.0
      %2134 = vmatprep.subr.mxu0 0.0
      %2135 = vmatpush1.msra.mxu0 0.0
      %2136 = vmatprep.subr.mxu0 0.0
      %2137 = vmatpush1.msra.mxu0 0.0
      %2138 = vmatprep.subr.mxu0 0.0
      %2139 = vmatpush1.msra.mxu0 0.0
      %2140 = vmatprep.subr.mxu0 0.0
      %2141 = vmatpush1.msra.mxu0 0.0
      %2142 = vmatprep.subr.mxu0 0.0
      %2143 = vmatpush1.msra.mxu0 0.0
      %2144 = vmatprep.subr.mxu0 0.0
      %2145 = vmatpush1.msra.mxu0 0.0
      %2146 = vmatprep.subr.mxu0 0.0
      %2147 = vmatpush1.msra.mxu0 0.0
      %2148 = vmatprep.subr.mxu0 0.0
      %2149 = vmatpush1.msra.mxu0 0.0
      %2150 = vmatprep.subr.mxu0 0.0
      %2151 = vmatpush1.msra.mxu0 0.0
      %2152 = vmatprep.subr.mxu0 0.0
      %2153 = vmatpush1.msra.mxu0 0.0
      %2154 = vmatprep.subr.mxu0 0.0
      %2155 = vmatpush1.msra.mxu0 0.0
      %2156 = vmatprep.subr.mxu0 0.0
      %2157 = vmatpush1.msra.mxu0 0.0
      %2158 = vmatprep.subr.mxu0 0.0
      %2159 = vmatpush1.msra.mxu0 0.0
      %2160 = vmatprep.subr.mxu0 0.0
      %2161 = vmatpush1.msra.mxu0 0.0
      %2162 = vmatprep.subr.mxu0 0.0
      %2163 = vmatpush1.msra.mxu0 0.0
      %2164 = vmatprep.subr.mxu0 0.0
      %2165 = vmatpush1.msra.mxu0 0.0
      %2166 = vmatprep.subr.mxu0 0.0
      %2167 = vmatpush1.msra.mxu0 0.0
      %2168 = vmatprep.subr.mxu0 0.0
      %2169 = vmatpush1.msra.mxu0 0.0
      %2170 = vmatprep.subr.mxu0 0.0
      %2171 = vmatpush1.msra.mxu0 0.0
      %2172 = vmatprep.subr.mxu0 0.0
      %2173 = vmatpush1.msra.mxu0 0.0
      %2174 = vmatprep.subr.mxu0 0.0
      %2175 = vmatpush1.msra.mxu0 0.0
      %2176 = vmatprep.subr.mxu0 0.0
      %2177 = vmatpush1.msra.mxu0 0.0
      %2178 = vmatprep.subr.mxu0 0.0
      %2179 = vmatpush1.msra.mxu0 0.0
      %2180 = vmatprep.mubr.f32.mxu0 0.0
      %2181 = vmatmul.mubr.f32.gmra.mrb[0].mxu0 %v1841
      %v2182 = vpop.f32.mrb[0].mxu0
      %v2183 = vadd.f32 %v2108, %v2182
      %v2184 = vpop.f32.mrb[0].mxu0
      %2185 = vmatprep.mubr.f32.mxu0 0.0
      %2186 = vmatmul.mubr.f32.gmra.mrb[0].mxu0 %v1843
      %v2187 = vpop.f32.mrb[0].mxu0
      %v2188 = vadd.f32 %v2113, %v2187
      %v2189 = vpop.f32.mrb[0].mxu0
      %2190 = vdwg.mxu0
      %v2191 = vlaneseq
      %v2192 = vshrl.u32 %v2191, 7
      %v2193 = vsub.s32 4, %v2192
      %v2194 = vrot.slane %v1539, %v2193
      %v2195 = vadd.f32 %v2183, %v2194
      %v2196 = vadd.f32 %v2188, %v2194
      %v2197 = vtanh.pop %v2195
      %v2198 = vtanh.pop %v2196
      %v2199 = vld [vmem:[%s8] sm:$0xff]
      %v2200 = vld [vmem:[%s8 + $0x8] sm:$0xff]
      %v2201 = vld [vmem:[%s8 + $0x10] sm:$0xff]
      %v2202 = vld [vmem:[%s8 + $0x18] sm:$0xff]
      %v2203 = vld [vmem:[%s9] sm:$0x1]
      %v2205 = vlaneseq
      %v2206 = vshrl.u32 %v2205, 7
      %v2207 = vsub.s32 0, %v2206
      %v2208 = vrot.slane %v2203, %v2207
      %v2211 = vsel %vm1646, %v2197, 0
      %v2214 = vsel %vm1646, %v2198, 0
      %2216 = vmatprep.subr.mxu0 0.0
      %2217 = vmatpush1.msra.mxu0 %v2199
      %2218 = vmatprep.subr.mxu0 0.0
      %2219 = vmatpush1.msra.mxu0 %v2200
      %2220 = vmatprep.subr.mxu0 0.0
      %2221 = vmatpush1.msra.mxu0 %v2201
      %2222 = vmatprep.subr.mxu0 0.0
      %2223 = vmatpush1.msra.mxu0 %v2202
      %2224 = vmatprep.subr.mxu0 0.0
      %2225 = vmatpush1.msra.mxu0 0.0
      %2226 = vmatprep.subr.mxu0 0.0
      %2227 = vmatpush1.msra.mxu0 0.0
      %2228 = vmatprep.subr.mxu0 0.0
      %2229 = vmatpush1.msra.mxu0 0.0
      %2230 = vmatprep.subr.mxu0 0.0
      %2231 = vmatpush1.msra.mxu0 0.0
      %2232 = vmatprep.subr.mxu0 0.0
      %2233 = vmatpush1.msra.mxu0 0.0
      %2234 = vmatprep.subr.mxu0 0.0
      %2235 = vmatpush1.msra.mxu0 0.0
      %2236 = vmatprep.subr.mxu0 0.0
      %2237 = vmatpush1.msra.mxu0 0.0
      %2238 = vmatprep.subr.mxu0 0.0
      %2239 = vmatpush1.msra.mxu0 0.0
      %2240 = vmatprep.subr.mxu0 0.0
      %2241 = vmatpush1.msra.mxu0 0.0
      %2242 = vmatprep.subr.mxu0 0.0
      %2243 = vmatpush1.msra.mxu0 0.0
      %2244 = vmatprep.subr.mxu0 0.0
      %2245 = vmatpush1.msra.mxu0 0.0
      %2246 = vmatprep.subr.mxu0 0.0
      %2247 = vmatpush1.msra.mxu0 0.0
      %2248 = vmatprep.subr.mxu0 0.0
      %2249 = vmatpush1.msra.mxu0 0.0
      %2250 = vmatprep.subr.mxu0 0.0
      %2251 = vmatpush1.msra.mxu0 0.0
      %2252 = vmatprep.subr.mxu0 0.0
      %2253 = vmatpush1.msra.mxu0 0.0
      %2254 = vmatprep.subr.mxu0 0.0
      %2255 = vmatpush1.msra.mxu0 0.0
      %2256 = vmatprep.subr.mxu0 0.0
      %2257 = vmatpush1.msra.mxu0 0.0
      %2258 = vmatprep.subr.mxu0 0.0
      %2259 = vmatpush1.msra.mxu0 0.0
      %2260 = vmatprep.subr.mxu0 0.0
      %2261 = vmatpush1.msra.mxu0 0.0
      %2262 = vmatprep.subr.mxu0 0.0
      %2263 = vmatpush1.msra.mxu0 0.0
      %2264 = vmatprep.subr.mxu0 0.0
      %2265 = vmatpush1.msra.mxu0 0.0
      %2266 = vmatprep.subr.mxu0 0.0
      %2267 = vmatpush1.msra.mxu0 0.0
      %2268 = vmatprep.subr.mxu0 0.0
      %2269 = vmatpush1.msra.mxu0 0.0
      %2270 = vmatprep.subr.mxu0 0.0
      %2271 = vmatpush1.msra.mxu0 0.0
      %2272 = vmatprep.subr.mxu0 0.0
      %2273 = vmatpush1.msra.mxu0 0.0
      %2274 = vmatprep.subr.mxu0 0.0
      %2275 = vmatpush1.msra.mxu0 0.0
      %2276 = vmatprep.subr.mxu0 0.0
      %2277 = vmatpush1.msra.mxu0 0.0
      %2278 = vmatprep.subr.mxu0 0.0
      %2279 = vmatpush1.msra.mxu0 0.0
      %2280 = vmatprep.mubr.f32.mxu0 0.0
      %2281 = vmatmul.mubr.f32.gmra.mrb[0].mxu0 %v2211
      %v2282 = vpop.f32.mrb[0].mxu0
      %v2283 = vadd.f32 %v2208, %v2282
      %v2284 = vpop.f32.mrb[0].mxu0
      %2285 = vmatprep.mubr.f32.mxu0 0.0
      %2286 = vmatmul.mubr.f32.gmra.mrb[0].mxu0 %v2214
      %v2287 = vpop.f32.mrb[0].mxu0
      %v2288 = vadd.f32 %v2208, %v2287
      %v2289 = vpop.f32.mrb[0].mxu0
      %2290 = vdwg.mxu0
      %v2291 = vsel %vm1558, %v2283, -inf
      %2292 = vmax.xlane.f32.xlu0 %v2291
      %v2293 = vpop.xlane.xlu0 %2292
      %v2294 = vsel %vm1558, %v2288, -inf
      %2295 = vmax.xlane.f32.xlu0 %v2294
      %v2296 = vpop.xlane.xlu0 %2295
      %v2297 = vsub.f32 %v2283, %v2293
      %v2298 = vsub.f32 %v2288, %v2296
      %v2299 = vmul.f32 %v2297, 1.442695
      %v2300 = vpow.pop %v2299
      %v2301 = vmul.f32 %v2298, 1.442695
      %v2302 = vpow.pop %v2301
      %v2303 = vsel %vm1558, %v2300, 0.0
      %2304 = vadd.xlane.f32.xlu0 %v2303
      %v2305 = vpop.xlane.xlu0 %2304
      %v2306 = vsel %vm1558, %v2302, 0.0
      %2307 = vadd.xlane.f32.xlu0 %v2306
      %v2308 = vpop.xlane.xlu0 %2307
      %v2309 = vrcp.pop %v2305
      %v2310 = vmul.f32 %v2300, %v2309
      %v2311 = vrcp.pop %v2308
      %v2312 = vmul.f32 %v2302, %v2311
      %v2313 = vcvt.s32.f32 %v1543
      %v2314 = vsel %vm1558, %v2310, -inf
      %2315 = vmax.xlane.f32.xlu0 %v2314
      %v2316 = vpop.xlane.xlu0 %2315
      %v2317 = vsel %vm1558, %v2312, -inf
      %2318 = vmax.xlane.f32.xlu0 %v2317
      %v2319 = vpop.xlane.xlu0 %2318
      %vm2320 = vcmp.eq.f32.partialorder %v2310, %v2316
      %vm2321 = vcmp.eq.f32.partialorder %v2312, %v2319
      %v2322 = vsel %vm2320, %v2313, 16.0
      %v2323 = vsel %vm2321, %v2313, 16.0
      %v2324 = vsel %vm1558, %v2322, inf
      %2325 = vmin.xlane.f32.xlu0 %v2324
      %v2326 = vpop.xlane.xlu0 %2325
      %v2327 = vsel %vm1558, %v2323, inf
      %2328 = vmin.xlane.f32.xlu0 %v2327
      %v2329 = vpop.xlane.xlu0 %2328
      %vm2330 = vcmp.eq.f32.partialorder %v2313, %v2326
      %vm2331 = vcmp.eq.f32.partialorder %v2313, %v2329
      %v2332 = vsel %vm2330, -1.0, %v2310
      %v2333 = vsel %vm2331, -1.0, %v2312
      %v2334 = vsel %vm1558, %v2332, -inf
      %2335 = vmax.xlane.f32.xlu0 %v2334
      %v2336 = vpop.xlane.xlu0 %2335
      %v2337 = vsel %vm1558, %v2333, -inf
      %2338 = vmax.xlane.f32.xlu0 %v2337
      %v2339 = vpop.xlane.xlu0 %2338
      %vm2340 = vcmp.eq.f32.partialorder %v2332, %v2336
      %vm2341 = vcmp.eq.f32.partialorder %v2333, %v2339
      %v2342 = vsel %vm2340, %v2313, 16.0
      %v2343 = vsel %vm2341, %v2313, 16.0
      %v2344 = vsel %vm1558, %v2342, inf
      %2345 = vmin.xlane.f32.xlu0 %v2344
      %v2346 = vpop.xlane.xlu0 %2345
      %v2347 = vsel %vm1558, %v2343, inf
      %2348 = vmin.xlane.f32.xlu0 %v2347
      %v2349 = vpop.xlane.xlu0 %2348
      %v2350 = vcvt.f32.s32.to.zero.pseudo %v2326
      %v2351 = vcvt.f32.s32.to.zero.pseudo %v2329
      %v2352 = vcvt.f32.s32.to.zero.pseudo %v2346
      %v2353 = vcvt.f32.s32.to.zero.pseudo %v2349
      %vm2354 = vcmask 7168
      %2355 = vst.msk [vmem:[%s374] sm:$0xff] %vm2354, %v2350
      %2356 = vst.msk [vmem:[%s374 + $0x8] sm:$0xff] %vm2354, %v2351
      %vm2357 = vcmask 15368
      %2358 = vst.msk [vmem:[%s374] sm:$0xff] %vm2357, %v2352
      %2359 = vst.msk [vmem:[%s374 + $0x8] sm:$0xff] %vm2357, %v2353
      %2360 = vst.msk [vmem:[%s379] sm:$0xff] %vm2354, %v2316
      %2361 = vst.msk [vmem:[%s379 + $0x8] sm:$0xff] %vm2354, %v2319
      %2362 = vst.msk [vmem:[%s379] sm:$0xff] %vm2357, %v2336
      %2363 = vst.msk [vmem:[%s379 + $0x8] sm:$0xff] %vm2357, %v2339
      %2366 = vst.msk [vmem:[#allocation3] sm:$0xff] %vm1646, %v1838
      %2367 = vst.msk [vmem:[#allocation3 + $0x8] sm:$0xff] %vm1646, %v1840
      %p2368 = scmp.lt.s32.totalorder %s23, 4
      // Predicated region
      $region65: #{beam_search_decode.1} parent=59 // pred_check
        %p2369 = pneg %p2368
      $region66: #{beam_search_decode.1} parent=59 // pred_check_branch
        %2371 = sbr.rel (%p2369) target = $region68
      $region67: #{beam_search_decode.1} parent=59 // pred_region
        %v2372 = vld [vmem:[#allocation5] sm:$0xff]
        %v2373 = vld [vmem:[#allocation5 + $0x8] sm:$0xff]
        %v2374 = vshra.s32 %v2372, 3
        %v2375 = vshra.s32 %v2373, 3
        %v2376 = vand.u32 %v2374, 1
        %v2377 = vand.u32 %v2375, 1
        %vm2378 = vcmp.eq.s32.totalorder %v2376, 0
        %vm2379 = vcmp.eq.s32.totalorder %v2377, 0
        %v2380 = vsel %vm2378, %v2350, %v2352
        %v2381 = vsel %vm2379, %v2351, %v2353
        %2382 = vst.msk [vmem:[#allocation4] sm:$0xff] %vm2354, %v2380
        %2383 = vst.msk [vmem:[#allocation4 + $0x8] sm:$0xff] %vm2354, %v2381
        %v2384 = vld [vmem:[#allocation5] sm:$0xff]
        %v2385 = vld [vmem:[#allocation5 + $0x8] sm:$0xff]
        %v2386 = vshll.u32 %v2384, 1
        %v2387 = vshll.u32 %v2385, 1
        %v2388 = vand.u32 %v2386, 15
        %v2389 = vand.u32 %v2387, 15
        %2390 = vst.msk [vmem:[#allocation5] sm:$0xff] %vm2354, %v2388
        %2391 = vst.msk [vmem:[#allocation5 + $0x8] sm:$0xff] %vm2354, %v2389
      $region68: #{beam_search_decode.1} parent=59 // pred_fallthru
        _
      %p2392 = scmp.lt.s32.totalorder %s23, 4
      %s2393 = scalar_select %p2392, %s23, 4
      %s2394 = smul.addr %s2393, 2
      %s2395 = smul.addr %s2394, 8
      %s2396 = scalar_lea.vmem %s10, %s2395
      %p2397 = scmp.lt.s32.totalorder %s23, 4
      %s2398 = scalar_select %p2397, %s23, 4
      %s2399 = smul.addr %s2398, 2
      %s2400 = smul.addr %s2399, 8
      %s2401 = scalar_lea.vmem %s11, %s2400
      // Predicated region
      $region69: #{beam_search_decode.1} parent=59 // pred_check
        %p2402 = pneg %p251
      $region70: #{beam_search_decode.1} parent=59 // pred_check_branch
        %2404 = sbr.rel (%p2402) target = $region72
      $region71: #{beam_search_decode.1} parent=59 // pred_region
        _
      $region72: #{beam_search_decode.1} parent=59 // pred_fallthru
        _
      // Predicated region
      $region73: #{beam_search_decode.1} parent=59 // pred_check
        %p2405 = pneg %p277
      $region74: #{beam_search_decode.1} parent=59 // pred_check_branch
        %2407 = sbr.rel (%p2405) target = $region76
      $region75: #{beam_search_decode.1} parent=59 // pred_region
        _
      $region76: #{beam_search_decode.1} parent=59 // pred_fallthru
        _
    $region60: #{beam_search_decode.1} parent=5 // pred_fallthru
      _
    %p2408 = scmp.le.s32.totalorder 2, %s18
    // Predicated region
    $region77: #{beam_search_decode.1} parent=5 // pred_check
      %p2409 = pneg %p2408
    $region78: #{beam_search_decode.1} parent=5 // pred_check_branch
      %2411 = sbr.rel (%p2409) target = $region80
    $region79: #{beam_search_decode.1} parent=5 // pred_region
      %s2412 = ssub.s32 %s18, 2
      // Predicated region
      $region81: #{beam_search_decode.1} parent=79 // pred_check
        %p2413 = pneg %p257
      $region82: #{beam_search_decode.1} parent=79 // pred_check_branch
        %2415 = sbr.rel (%p2413) target = $region84
      $region83: #{beam_search_decode.1} parent=79 // pred_region
        %p2416 = scmp.lt.s32.totalorder %s24, 4
        %s2417 = scalar_select %p2416, %s24, 4
        %s2418 = smul.addr %s2417, 2
        %s2419 = smul.addr %s2418, 8
        %s2420 = scalar_lea.vmem %s10, %s2419
      $region84: #{beam_search_decode.1} parent=79 // pred_fallthru
        _
      // Predicated region
      $region85: #{beam_search_decode.1} parent=79 // pred_check
        %p2421 = pneg %p283
      $region86: #{beam_search_decode.1} parent=79 // pred_check_branch
        %2423 = sbr.rel (%p2421) target = $region88
      $region87: #{beam_search_decode.1} parent=79 // pred_region
        %p2424 = scmp.lt.s32.totalorder %s24, 4
        %s2425 = scalar_select %p2424, %s24, 4
        %s2426 = smul.addr %s2425, 2
        %s2427 = smul.addr %s2426, 8
        %s2428 = scalar_lea.vmem %s11, %s2427
      $region88: #{beam_search_decode.1} parent=79 // pred_fallthru
        _
    $region80: #{beam_search_decode.1} parent=5 // pred_fallthru
      _
  $region6: #{beam_search_decode.1} parent=0 // loop_footer
    %s22 = sadd.s32 1, %s18
  $region7: #{beam_search_decode.1} parent=0 // loop_footer_branch
    %17 = sbr.rel target = $region3
  $region8: #{beam_search_decode.1} parent=0 // loop_exit
    _

</llo_original>
